<compile_context>
chip_gen: v7x
topology: tpu7x:2x2x1
jax: 0.10.0
libtpu: 0.0.40
codegen_flags: <defaults>
</compile_context>

<pallas_src>
import jax
import jax.numpy as jnp
from jax.experimental import pallas as pl
from jax.experimental.pallas import tpu as pltpu

_SQRT_2_OVER_PI = 0.7978845608028654
_INV_1414 = 1.0 / 1.414


def _gelu(x):
    # TODO(synk): nn.GELU defaults to the exact erf form; tanh approximation is
    # used because erf lowering inside Mosaic kernels is not guaranteed.
    return 0.5 * x * (1.0 + jnp.tanh(_SQRT_2_OVER_PI * (x + 0.044715 * x * x * x)))


def _make_conv_kernel(H, W, Cin, Cout, residual, pool):
    """Fused 3x3 conv (stride 1, pad 1) + folded-BN bias + GELU
    [+ residual/1.414] [+ fused 2x2 maxpool], one batch element per grid step."""
    HW = H * W

    def kernel(*refs):
        if residual:
            x_ref, w_ref, b_ref, skip_ref, o_ref = refs
        else:
            x_ref, w_ref, b_ref, o_ref = refs

        x = x_ref[...][0]          # (H+2, W+2, Cin)  bf16, spatially padded
        w = w_ref[...]             # (9, Cin, Cout)   bf16, BN scale folded in
        bias = b_ref[...]          # (1, Cout)        f32

        acc = jnp.zeros((HW, Cout), jnp.float32)
        t = 0
        for dy in range(3):
            for dx in range(3):
                patch = x[dy:dy + H, dx:dx + W, :].reshape(HW, Cin)
                acc = acc + jnp.dot(patch, w[t],
                                    preferred_element_type=jnp.float32)
                t += 1

        h = _gelu(acc + bias)                                  # f32 epilogue
        if residual:
            skip = skip_ref[...].reshape(HW, Cout).astype(jnp.float32)
            h = (skip + h) * _INV_1414

        if pool:
            # 2x2/stride-2 max pool fused into the epilogue (value ops only;
            # no strided ref reads).
            y = h.reshape(H // 2, 2, W // 2, 2, Cout)
            p = jnp.max(jnp.max(y, axis=3), axis=1)            # (H/2, W/2, Cout)
            o_ref[...] = p.reshape(1, H // 2, W // 2, Cout).astype(o_ref.dtype)
        else:
            o_ref[...] = h.reshape(1, H, W, Cout).astype(o_ref.dtype)

    return kernel


def _conv_bn_gelu(xpad, w, bias, skip=None, pool=False):
    """xpad: (B, H+2, W+2, Cin) bf16.  Returns (B, H, W, Cout) bf16,
    or (B, H/2, W/2, Cout) f32 when pool=True."""
    B, Hp, Wp, Cin = xpad.shape
    H, W = Hp - 2, Wp - 2
    Cout = w.shape[-1]
    residual = skip is not None

    kernel = _make_conv_kernel(H, W, Cin, Cout, residual, pool)

    in_specs = [
        pl.BlockSpec((1, Hp, Wp, Cin), lambda b: (b, 0, 0, 0)),
        pl.BlockSpec((9, Cin, Cout), lambda b: (0, 0, 0)),
        pl.BlockSpec((1, Cout), lambda b: (0, 0)),
    ]
    args = [xpad, w, bias]
    if residual:
        in_specs.append(pl.BlockSpec((1, H, W, Cout), lambda b: (b, 0, 0, 0)))
        args.append(skip)

    if pool:
        out_shape = jax.ShapeDtypeStruct((B, H // 2, W // 2, Cout), jnp.float32)
        out_spec = pl.BlockSpec((1, H // 2, W // 2, Cout), lambda b: (b, 0, 0, 0))
        out_bytes = B * (H // 2) * (W // 2) * Cout * 4
    else:
        out_shape = jax.ShapeDtypeStruct((B, H, W, Cout), jnp.bfloat16)
        out_spec = pl.BlockSpec((1, H, W, Cout), lambda b: (b, 0, 0, 0))
        out_bytes = B * H * W * Cout * 2

    flops = 2 * B * H * W * 9 * Cin * Cout
    bytes_accessed = (xpad.size * 2 + w.size * 2 + bias.size * 4
                      + (skip.size * 2 if residual else 0) + out_bytes)

    return pl.pallas_call(
        kernel,
        out_shape=out_shape,
        grid_spec=pltpu.PrefetchScalarGridSpec(
            num_scalar_prefetch=0,
            grid=(B,),
            in_specs=in_specs,
            out_specs=out_spec,
        ),
        compiler_params=pltpu.CompilerParams(dimension_semantics=("parallel",)),
        cost_estimate=pl.CostEstimate(
            flops=int(flops),
            transcendentals=int(B * H * W * Cout),
            bytes_accessed=int(bytes_accessed),
        ),
    )(*args)


def _residual_conv_block(x, p, pool_last=False):
    """x: (B, H, W, Cin) bf16 NHWC -> (B, H, W, Cout) bf16 (or pooled f32)."""
    B, H, W, Cin = x.shape
    Cout = p["w1"].shape[-1]
    same_channels = (Cin == Cout)

    xpad = jnp.pad(x, ((0, 0), (1, 1), (1, 1), (0, 0)))
    x1 = _conv_bn_gelu(xpad, p["w1"], p["b1"])                 # (B,H,W,Cout) bf16

    x1pad = jnp.pad(x1, ((0, 0), (1, 1), (1, 1), (0, 0)))
    skip = x if same_channels else x1
    return _conv_bn_gelu(x1pad, p["w2"], p["b2"], skip=skip, pool=pool_last)


def residual_down_block(x_nchw, params):
    """PyTorch-facing entry point: NCHW in, NCHW out (H/2, W/2)."""
    B, C, H, W = x_nchw.shape
    assert H % 2 == 0 and W % 2 == 0, "MaxPool2d(2) fusion assumes even H, W"
    x = jnp.transpose(x_nchw, (0, 2, 3, 1)).astype(jnp.bfloat16)   # NHWC bf16
    h = _residual_conv_block(x, params["block1"], pool_last=False)
    h = _residual_conv_block(h, params["block2"], pool_last=True)  # f32, pooled
    return jnp.transpose(h, (0, 3, 1, 2))                          # back to NCHW


# ------------------------- deterministic params -------------------------------


def _init_conv_bn(key, cin, cout):
    k1, k2, k3, k4, k5 = jax.random.split(key, 5)
    w = jax.random.normal(k1, (cout, cin, 3, 3), jnp.float32) / jnp.sqrt(9.0 * cin)
    gamma = 1.0 + 0.1 * jax.random.normal(k2, (cout,), jnp.float32)
    beta = 0.1 * jax.random.normal(k3, (cout,), jnp.float32)
    rmean = 0.05 * jax.random.normal(k4, (cout,), jnp.float32)
    rvar = 1.0 + 0.1 * jnp.abs(jax.random.normal(k5, (cout,), jnp.float32))
    scale = gamma / jnp.sqrt(rvar + 1e-5)
    bias = (beta - rmean * scale).reshape(1, cout).astype(jnp.float32)
    # (Cout, Cin, 3, 3) -> (3, 3, Cin, Cout) -> (9, Cin, Cout); fold BN scale
    # into the weights (one-time constant fold) and cast to bf16 for the MXU.
    w_taps = jnp.transpose(w, (2, 3, 1, 0)).reshape(9, cin, cout)
    w_folded = (w_taps * scale[None, None, :]).astype(jnp.bfloat16)
    return w_folded, bias


def _init_res_block(key, cin, cout):
    ka, kb = jax.random.split(key)
    w1, b1 = _init_conv_bn(ka, cin, cout)
    w2, b2 = _init_conv_bn(kb, cout, cout)
    return dict(w1=w1, b1=b1, w2=w2, b2=b2)


if __name__ == "__main__":
    key = jax.random.PRNGKey(0)
    kx, kb1, kb2 = jax.random.split(key, 3)

    B, Cin, H, W = 2, 4, 16, 16
    Cout = 8
    x = jax.random.normal(kx, (B, Cin, H, W), jnp.float32)

    params = {
        "block1": _init_res_block(kb1, Cin, Cout),
        "block2": _init_res_block(kb2, Cout, Cout),
    }

    y = residual_down_block(x, params)
    y = jax.block_until_ready(y)
    assert y.shape == (B, Cout, H // 2, W // 2), y.shape
    assert bool(jnp.all(jnp.isfinite(y)))
    print("KERNEL_OK")
</pallas_src>

<mosaic_0001>
module attributes {stable_mosaic.version = 11 : i64} {
  func.func @kernel(%arg0: i32, %arg1: memref<1x18x18x4xbf16, #tpu.memory_space<vmem>>, %arg2: memref<9x4x8xbf16, #tpu.memory_space<vmem>>, %arg3: memref<1x8xf32, #tpu.memory_space<vmem>>, %arg4: memref<1x16x16x8xbf16, #tpu.memory_space<vmem>>) attributes {dimension_semantics = [#tpu.dimension_semantics<parallel>], iteration_bounds = array<i64: 2>, scalar_prefetch = 0 : i64, scratch_operands = 0 : i64, tpu.core_type = #tpu.core_type<tc>, window_params = [{transform_indices = @transform_0, window_bounds = array<i64: 1, 18, 18, 4>}, {pipeline_mode = #tpu.pipeline_mode<synchronous>, transform_indices = @transform_1, window_bounds = array<i64: 9, 4, 8>}, {pipeline_mode = #tpu.pipeline_mode<synchronous>, transform_indices = @transform_2, window_bounds = array<i64: 1, 8>}, {transform_indices = @transform_3, window_bounds = array<i64: 1, 16, 16, 8>}]} {
    %c0 = arith.constant 0 : index
    %c0_0 = arith.constant 0 : index
    %c0_1 = arith.constant 0 : index
    %c0_2 = arith.constant 0 : index
    %0 = vector.load %arg1[%c0, %c0_0, %c0_1, %c0_2] : memref<1x18x18x4xbf16, #tpu.memory_space<vmem>>, vector<1x18x18x4xbf16>
    %1 = vector.shape_cast %0 : vector<1x18x18x4xbf16> to vector<18x18x4xbf16>
    %c0_3 = arith.constant 0 : index
    %c0_4 = arith.constant 0 : index
    %c0_5 = arith.constant 0 : index
    %2 = vector.load %arg2[%c0_3, %c0_4, %c0_5] : memref<9x4x8xbf16, #tpu.memory_space<vmem>>, vector<9x4x8xbf16>
    %c0_6 = arith.constant 0 : index
    %c0_7 = arith.constant 0 : index
    %3 = vector.load %arg3[%c0_6, %c0_7] : memref<1x8xf32, #tpu.memory_space<vmem>>, vector<1x8xf32>
    %cst = arith.constant 0.000000e+00 : f32
    %4 = vector.broadcast %cst : f32 to vector<256x8xf32>
    %5 = vector.extract_strided_slice %1 {offsets = [0, 0, 0], sizes = [16, 16, 4], strides = [1, 1, 1]} : vector<18x18x4xbf16> to vector<16x16x4xbf16>
    %6 = vector.shape_cast %5 : vector<16x16x4xbf16> to vector<256x4xbf16>
    %7 = vector.extract_strided_slice %2 {offsets = [0, 0, 0], sizes = [1, 4, 8], strides = [1, 1, 1]} : vector<9x4x8xbf16> to vector<1x4x8xbf16>
    %8 = vector.shape_cast %7 : vector<1x4x8xbf16> to vector<4x8xbf16>
    %cst_8 = arith.constant dense<0.000000e+00> : vector<256x8xf32>
    %9 = tpu.matmul %6, %8, %cst_8 {dimension_numbers = #tpu.dot_dimension_numbers<[1], [0], [0], [1], [0, 0, 1, 1], [], []>} : vector<256x4xbf16>, vector<4x8xbf16>, vector<256x8xf32> -> vector<256x8xf32>
    %10 = arith.addf %4, %9 : vector<256x8xf32>
    %11 = vector.extract_strided_slice %1 {offsets = [0, 1, 0], sizes = [16, 16, 4], strides = [1, 1, 1]} : vector<18x18x4xbf16> to vector<16x16x4xbf16>
    %12 = vector.shape_cast %11 : vector<16x16x4xbf16> to vector<256x4xbf16>
    %13 = vector.extract_strided_slice %2 {offsets = [1, 0, 0], sizes = [1, 4, 8], strides = [1, 1, 1]} : vector<9x4x8xbf16> to vector<1x4x8xbf16>
    %14 = vector.shape_cast %13 : vector<1x4x8xbf16> to vector<4x8xbf16>
    %cst_9 = arith.constant dense<0.000000e+00> : vector<256x8xf32>
    %15 = tpu.matmul %12, %14, %cst_9 {dimension_numbers = #tpu.dot_dimension_numbers<[1], [0], [0], [1], [0, 0, 1, 1], [], []>} : vector<256x4xbf16>, vector<4x8xbf16>, vector<256x8xf32> -> vector<256x8xf32>
    %16 = arith.addf %10, %15 : vector<256x8xf32>
    %17 = vector.extract_strided_slice %1 {offsets = [0, 2, 0], sizes = [16, 16, 4], strides = [1, 1, 1]} : vector<18x18x4xbf16> to vector<16x16x4xbf16>
    %18 = vector.shape_cast %17 : vector<16x16x4xbf16> to vector<256x4xbf16>
    %19 = vector.extract_strided_slice %2 {offsets = [2, 0, 0], sizes = [1, 4, 8], strides = [1, 1, 1]} : vector<9x4x8xbf16> to vector<1x4x8xbf16>
    %20 = vector.shape_cast %19 : vector<1x4x8xbf16> to vector<4x8xbf16>
    %cst_10 = arith.constant dense<0.000000e+00> : vector<256x8xf32>
    %21 = tpu.matmul %18, %20, %cst_10 {dimension_numbers = #tpu.dot_dimension_numbers<[1], [0], [0], [1], [0, 0, 1, 1], [], []>} : vector<256x4xbf16>, vector<4x8xbf16>, vector<256x8xf32> -> vector<256x8xf32>
    %22 = arith.addf %16, %21 : vector<256x8xf32>
    %23 = vector.extract_strided_slice %1 {offsets = [1, 0, 0], sizes = [16, 16, 4], strides = [1, 1, 1]} : vector<18x18x4xbf16> to vector<16x16x4xbf16>
    %24 = vector.shape_cast %23 : vector<16x16x4xbf16> to vector<256x4xbf16>
    %25 = vector.extract_strided_slice %2 {offsets = [3, 0, 0], sizes = [1, 4, 8], strides = [1, 1, 1]} : vector<9x4x8xbf16> to vector<1x4x8xbf16>
    %26 = vector.shape_cast %25 : vector<1x4x8xbf16> to vector<4x8xbf16>
    %cst_11 = arith.constant dense<0.000000e+00> : vector<256x8xf32>
    %27 = tpu.matmul %24, %26, %cst_11 {dimension_numbers = #tpu.dot_dimension_numbers<[1], [0], [0], [1], [0, 0, 1, 1], [], []>} : vector<256x4xbf16>, vector<4x8xbf16>, vector<256x8xf32> -> vector<256x8xf32>
    %28 = arith.addf %22, %27 : vector<256x8xf32>
    %29 = vector.extract_strided_slice %1 {offsets = [1, 1, 0], sizes = [16, 16, 4], strides = [1, 1, 1]} : vector<18x18x4xbf16> to vector<16x16x4xbf16>
    %30 = vector.shape_cast %29 : vector<16x16x4xbf16> to vector<256x4xbf16>
    %31 = vector.extract_strided_slice %2 {offsets = [4, 0, 0], sizes = [1, 4, 8], strides = [1, 1, 1]} : vector<9x4x8xbf16> to vector<1x4x8xbf16>
    %32 = vector.shape_cast %31 : vector<1x4x8xbf16> to vector<4x8xbf16>
    %cst_12 = arith.constant dense<0.000000e+00> : vector<256x8xf32>
    %33 = tpu.matmul %30, %32, %cst_12 {dimension_numbers = #tpu.dot_dimension_numbers<[1], [0], [0], [1], [0, 0, 1, 1], [], []>} : vector<256x4xbf16>, vector<4x8xbf16>, vector<256x8xf32> -> vector<256x8xf32>
    %34 = arith.addf %28, %33 : vector<256x8xf32>
    %35 = vector.extract_strided_slice %1 {offsets = [1, 2, 0], sizes = [16, 16, 4], strides = [1, 1, 1]} : vector<18x18x4xbf16> to vector<16x16x4xbf16>
    %36 = vector.shape_cast %35 : vector<16x16x4xbf16> to vector<256x4xbf16>
    %37 = vector.extract_strided_slice %2 {offsets = [5, 0, 0], sizes = [1, 4, 8], strides = [1, 1, 1]} : vector<9x4x8xbf16> to vector<1x4x8xbf16>
    %38 = vector.shape_cast %37 : vector<1x4x8xbf16> to vector<4x8xbf16>
    %cst_13 = arith.constant dense<0.000000e+00> : vector<256x8xf32>
    %39 = tpu.matmul %36, %38, %cst_13 {dimension_numbers = #tpu.dot_dimension_numbers<[1], [0], [0], [1], [0, 0, 1, 1], [], []>} : vector<256x4xbf16>, vector<4x8xbf16>, vector<256x8xf32> -> vector<256x8xf32>
    %40 = arith.addf %34, %39 : vector<256x8xf32>
    %41 = vector.extract_strided_slice %1 {offsets = [2, 0, 0], sizes = [16, 16, 4], strides = [1, 1, 1]} : vector<18x18x4xbf16> to vector<16x16x4xbf16>
    %42 = vector.shape_cast %41 : vector<16x16x4xbf16> to vector<256x4xbf16>
    %43 = vector.extract_strided_slice %2 {offsets = [6, 0, 0], sizes = [1, 4, 8], strides = [1, 1, 1]} : vector<9x4x8xbf16> to vector<1x4x8xbf16>
    %44 = vector.shape_cast %43 : vector<1x4x8xbf16> to vector<4x8xbf16>
    %cst_14 = arith.constant dense<0.000000e+00> : vector<256x8xf32>
    %45 = tpu.matmul %42, %44, %cst_14 {dimension_numbers = #tpu.dot_dimension_numbers<[1], [0], [0], [1], [0, 0, 1, 1], [], []>} : vector<256x4xbf16>, vector<4x8xbf16>, vector<256x8xf32> -> vector<256x8xf32>
    %46 = arith.addf %40, %45 : vector<256x8xf32>
    %47 = vector.extract_strided_slice %1 {offsets = [2, 1, 0], sizes = [16, 16, 4], strides = [1, 1, 1]} : vector<18x18x4xbf16> to vector<16x16x4xbf16>
    %48 = vector.shape_cast %47 : vector<16x16x4xbf16> to vector<256x4xbf16>
    %49 = vector.extract_strided_slice %2 {offsets = [7, 0, 0], sizes = [1, 4, 8], strides = [1, 1, 1]} : vector<9x4x8xbf16> to vector<1x4x8xbf16>
    %50 = vector.shape_cast %49 : vector<1x4x8xbf16> to vector<4x8xbf16>
    %cst_15 = arith.constant dense<0.000000e+00> : vector<256x8xf32>
    %51 = tpu.matmul %48, %50, %cst_15 {dimension_numbers = #tpu.dot_dimension_numbers<[1], [0], [0], [1], [0, 0, 1, 1], [], []>} : vector<256x4xbf16>, vector<4x8xbf16>, vector<256x8xf32> -> vector<256x8xf32>
    %52 = arith.addf %46, %51 : vector<256x8xf32>
    %53 = vector.extract_strided_slice %1 {offsets = [2, 2, 0], sizes = [16, 16, 4], strides = [1, 1, 1]} : vector<18x18x4xbf16> to vector<16x16x4xbf16>
    %54 = vector.shape_cast %53 : vector<16x16x4xbf16> to vector<256x4xbf16>
    %55 = vector.extract_strided_slice %2 {offsets = [8, 0, 0], sizes = [1, 4, 8], strides = [1, 1, 1]} : vector<9x4x8xbf16> to vector<1x4x8xbf16>
    %56 = vector.shape_cast %55 : vector<1x4x8xbf16> to vector<4x8xbf16>
    %cst_16 = arith.constant dense<0.000000e+00> : vector<256x8xf32>
    %57 = tpu.matmul %54, %56, %cst_16 {dimension_numbers = #tpu.dot_dimension_numbers<[1], [0], [0], [1], [0, 0, 1, 1], [], []>} : vector<256x4xbf16>, vector<4x8xbf16>, vector<256x8xf32> -> vector<256x8xf32>
    %58 = arith.addf %52, %57 : vector<256x8xf32>
    %59 = vector.broadcast %3 : vector<1x8xf32> to vector<256x8xf32>
    %60 = arith.addf %58, %59 : vector<256x8xf32>
    %cst_17 = arith.constant 5.000000e-01 : f32
    %61 = vector.broadcast %cst_17 : f32 to vector<256x8xf32>
    %62 = arith.mulf %61, %60 : vector<256x8xf32>
    %cst_18 = arith.constant 4.471500e-02 : f32
    %63 = vector.broadcast %cst_18 : f32 to vector<256x8xf32>
    %64 = arith.mulf %63, %60 : vector<256x8xf32>
    %65 = arith.mulf %64, %60 : vector<256x8xf32>
    %66 = arith.mulf %65, %60 : vector<256x8xf32>
    %67 = arith.addf %60, %66 : vector<256x8xf32>
    %cst_19 = arith.constant 0.797884583 : f32
    %68 = vector.broadcast %cst_19 : f32 to vector<256x8xf32>
    %69 = arith.mulf %68, %67 : vector<256x8xf32>
    %70 = math.tanh %69 : vector<256x8xf32>
    %cst_20 = arith.constant 1.000000e+00 : f32
    %71 = vector.broadcast %cst_20 : f32 to vector<256x8xf32>
    %72 = arith.addf %71, %70 : vector<256x8xf32>
    %73 = arith.mulf %62, %72 : vector<256x8xf32>
    %74 = vector.shape_cast %73 : vector<256x8xf32> to vector<1x16x16x8xf32>
    %75 = arith.truncf %74 : vector<1x16x16x8xf32> to vector<1x16x16x8xbf16>
    %c0_21 = arith.constant 0 : index
    %c0_22 = arith.constant 0 : index
    %c0_23 = arith.constant 0 : index
    %c0_24 = arith.constant 0 : index
    %76 = vector.load %arg4[%c0_21, %c0_22, %c0_23, %c0_24] : memref<1x16x16x8xbf16, #tpu.memory_space<vmem>>, vector<1x16x16x8xbf16>
    tpu.vector_store %arg4[%c0_21, %c0_22, %c0_23, %c0_24], %75 {strides = array<i32>} : memref<1x16x16x8xbf16, #tpu.memory_space<vmem>>, vector<1x16x16x8xbf16>,
    return
  }
  func.func @transform_0(%arg0: i32) -> (i32, i32, i32, i32) {
    %c0_i32 = arith.constant 0 : i32
    %c0_i32_0 = arith.constant 0 : i32
    %c0_i32_1 = arith.constant 0 : i32
    %c0_i32_2 = arith.constant 0 : i32
    return %arg0, %c0_i32, %c0_i32_0, %c0_i32_1 : i32, i32, i32, i32
  }
  func.func @transform_1(%arg0: i32) -> (i32, i32, i32) {
    %c0_i32 = arith.constant 0 : i32
    %c0_i32_0 = arith.constant 0 : i32
    %c0_i32_1 = arith.constant 0 : i32
    %c0_i32_2 = arith.constant 0 : i32
    return %c0_i32, %c0_i32_0, %c0_i32_1 : i32, i32, i32
  }
  func.func @transform_2(%arg0: i32) -> (i32, i32) {
    %c0_i32 = arith.constant 0 : i32
    %c0_i32_0 = arith.constant 0 : i32
    %c0_i32_1 = arith.constant 0 : i32
    return %c0_i32, %c0_i32_0 : i32, i32
  }
  func.func @transform_3(%arg0: i32) -> (i32, i32, i32, i32) {
    %c0_i32 = arith.constant 0 : i32
    %c0_i32_0 = arith.constant 0 : i32
    %c0_i32_1 = arith.constant 0 : i32
    %c0_i32_2 = arith.constant 0 : i32
    return %arg0, %c0_i32, %c0_i32_0, %c0_i32_1 : i32, i32, i32, i32
  }
}

</mosaic_0001>

<llo_original>
// kernel: tpu_custom_call.1
$region0: #{tpu_custom_call.1}
  #allocation0 [shape = 'u32[]', space=smem, size = 0x4, offset = 0x4, fixed_abs, tag = 'smem constant byte address 0x4 - core index']
  #allocation1 [shape = 'u32[144,128]{1,0:T(1,128)}', space=vmem, size = 0x12000, scoped, tag = 'internal scratch']
  %s0 = inlined_call_operand.vmem [shape: bf16[2,18,18,4], index: 0, kind: input, shape index: {}]
  %s1 = inlined_call_operand.vmem [shape: bf16[9,4,8], index: 1, kind: input, shape index: {}]
  %s2 = inlined_call_operand.vmem [shape: f32[1,8], index: 2, kind: input, shape index: {}]
  %s3 = inlined_call_operand.vmem [shape: bf16[2,16,16,8], index: 3, kind: output, shape index: {}]
  %s4 = sld [smem:[#allocation0]]
  $region45: #{tpu_custom_call.1} parent=0
    _
  %s6 = ssub.s32 1, %s4
  %s7 = scalar_select 0, %s6, %s4
  loop: start=0, step=1, limit=4
  $region2: #{tpu_custom_call.1} parent=0 // loop_pre_header
    _
  $region3: #{tpu_custom_call.1} parent=0 // loop_header
    %s9 = sphi 0, %s13
    %p10 = scmp.ge.s32.totalorder %s9, 4
    %s19 = sphi 0, %s21
    %s22 = sphi 0, %s19
    %s23 = sphi 0, %s22
    %s39 = sphi 0, %s23
    %s43 = sphi 0, %s43
    %s45 = sphi 0, %s43
    %s46 = sphi 0, %s45
    %s60 = sphi 0, %s46
    %s64 = sphi 0, %s64
    %s66 = sphi 0, %s64
    %s67 = sphi 0, %s66
    %s81 = sphi 0, %s67
    %s87 = sphi 0, %s89
    %s90 = sphi 0, %s87
    %s91 = sphi 0, %s90
    %s107 = sphi 0, %s91
  $region4: #{tpu_custom_call.1} parent=0 // loop_header_branch
    %12 = sbr.rel (%p10) target = $region8
  $region5: #{tpu_custom_call.1} parent=0 // loop_body
    %s14 = ssub.s32 %s9, 1
    %s15 = ssub.s32 %s9, 2
    %s16 = sadd.s32 %s9, 1
    %s17 = ssub.s32 %s9, %s16
    %p18 = scmp.eq.s32.totalorder %s17, 0
    %s20 = sadd.s32 %s19, 1
    %s21 = scalar_select %p18, %s19, %s20
    %p24 = pneg %p18
    %p25 = scmp.eq.s32.totalorder %s9, 1
    %p26 = por %p24, %p25
    %p27 = scmp.ne.s32.totalorder %s19, %s22
    %p28 = scmp.eq.s32.totalorder %s9, 0
    %p29 = por %p27, %p28
    %p30 = scmp.ne.s32.totalorder %s19, %s22
    %p31 = scmp.eq.s32.totalorder %s14, 1
    %p32 = por %p30, %p31
    %p33 = scmp.ne.s32.totalorder %s22, %s23
    %p34 = scmp.eq.s32.totalorder %s14, 0
    %p35 = por %p33, %p34
    %p36 = scmp.ne.s32.totalorder %s22, %s23
    %p37 = scmp.eq.s32.totalorder %s15, 1
    %p38 = por %p36, %p37
    %p40 = scmp.ne.s32.totalorder %s23, %s39
    %p41 = scmp.eq.s32.totalorder %s15, 0
    %p42 = por %p40, %p41
    %s44 = sadd.s32 %s43, 1
    %p47 = scmp.eq.s32.totalorder %s9, 1
    %p48 = scmp.ne.s32.totalorder %s43, %s45
    %p49 = scmp.eq.s32.totalorder %s9, 0
    %p50 = por %p48, %p49
    %p51 = scmp.ne.s32.totalorder %s43, %s45
    %p52 = scmp.eq.s32.totalorder %s14, 1
    %p53 = por %p51, %p52
    %p54 = scmp.ne.s32.totalorder %s45, %s46
    %p55 = scmp.eq.s32.totalorder %s14, 0
    %p56 = por %p54, %p55
    %p57 = scmp.ne.s32.totalorder %s45, %s46
    %p58 = scmp.eq.s32.totalorder %s15, 1
    %p59 = por %p57, %p58
    %p61 = scmp.ne.s32.totalorder %s46, %s60
    %p62 = scmp.eq.s32.totalorder %s15, 0
    %p63 = por %p61, %p62
    %s65 = sadd.s32 %s64, 1
    %p68 = scmp.eq.s32.totalorder %s9, 1
    %p69 = scmp.ne.s32.totalorder %s64, %s66
    %p70 = scmp.eq.s32.totalorder %s9, 0
    %p71 = por %p69, %p70
    %p72 = scmp.ne.s32.totalorder %s64, %s66
    %p73 = scmp.eq.s32.totalorder %s14, 1
    %p74 = por %p72, %p73
    %p75 = scmp.ne.s32.totalorder %s66, %s67
    %p76 = scmp.eq.s32.totalorder %s14, 0
    %p77 = por %p75, %p76
    %p78 = scmp.ne.s32.totalorder %s66, %s67
    %p79 = scmp.eq.s32.totalorder %s15, 1
    %p80 = por %p78, %p79
    %p82 = scmp.ne.s32.totalorder %s67, %s81
    %p83 = scmp.eq.s32.totalorder %s15, 0
    %p84 = por %p82, %p83
    %s85 = ssub.s32 %s9, %s16
    %p86 = scmp.eq.s32.totalorder %s85, 0
    %s88 = sadd.s32 %s87, 1
    %s89 = scalar_select %p86, %s87, %s88
    %p92 = pneg %p86
    %p93 = scmp.eq.s32.totalorder %s9, 1
    %p94 = por %p92, %p93
    %p95 = scmp.ne.s32.totalorder %s87, %s90
    %p96 = scmp.eq.s32.totalorder %s9, 0
    %p97 = por %p95, %p96
    %p98 = scmp.ne.s32.totalorder %s87, %s90
    %p99 = scmp.eq.s32.totalorder %s14, 1
    %p100 = por %p98, %p99
    %p101 = scmp.ne.s32.totalorder %s90, %s91
    %p102 = scmp.eq.s32.totalorder %s14, 0
    %p103 = por %p101, %p102
    %p104 = scmp.ne.s32.totalorder %s90, %s91
    %p105 = scmp.eq.s32.totalorder %s15, 1
    %p106 = por %p104, %p105
    %p108 = scmp.ne.s32.totalorder %s91, %s107
    %p109 = scmp.eq.s32.totalorder %s15, 0
    %p110 = por %p108, %p109
    %p111 = scmp.le.s32.totalorder 1, %s9
    %p112 = scmp.lt.s32.totalorder %s9, 3
    %p113 = pnand %p111, %p112
    %p114 = pneg %p113
    // Predicated region
    $region9: #{tpu_custom_call.1} parent=5 // pred_check
      _
    $region10: #{tpu_custom_call.1} parent=5 // pred_check_branch
      %116 = sbr.rel (%p113) target = $region12
    $region11: #{tpu_custom_call.1} parent=5 // pred_region
      %s117 = ssub.s32 %s9, 1
      // Predicated region
      $region13: #{tpu_custom_call.1} parent=11 // pred_check
        %p118 = pneg %p56
      $region14: #{tpu_custom_call.1} parent=11 // pred_check_branch
        %120 = sbr.rel (%p118) target = $region16
      $region15: #{tpu_custom_call.1} parent=11 // pred_region
        _
      $region16: #{tpu_custom_call.1} parent=11 // pred_fallthru
        _
      // Predicated region
      $region17: #{tpu_custom_call.1} parent=11 // pred_check
        %p121 = pneg %p77
      $region18: #{tpu_custom_call.1} parent=11 // pred_check_branch
        %123 = sbr.rel (%p121) target = $region20
      $region19: #{tpu_custom_call.1} parent=11 // pred_region
        _
      $region20: #{tpu_custom_call.1} parent=11 // pred_fallthru
        _
    $region12: #{tpu_custom_call.1} parent=5 // pred_fallthru
      _
    %p124 = scmp.lt.s32.totalorder %s9, 2
    // Predicated region
    $region21: #{tpu_custom_call.1} parent=5 // pred_check
      %p125 = pneg %p124
    $region22: #{tpu_custom_call.1} parent=5 // pred_check_branch
      %127 = sbr.rel (%p125) target = $region24
    $region23: #{tpu_custom_call.1} parent=5 // pred_region
      // Predicated region
      $region25: #{tpu_custom_call.1} parent=23 // pred_check
        %p128 = pneg %p29
      $region26: #{tpu_custom_call.1} parent=23 // pred_check_branch
        %130 = sbr.rel (%p128) target = $region28
      $region27: #{tpu_custom_call.1} parent=23 // pred_region
        %p131 = scmp.lt.s32.totalorder %s9, 1
        %s132 = scalar_select %p131, %s9, 1
        %s133 = smul.addr %s132, 54
        %s134 = smul.addr %s133, 4
        %s135 = scalar_lea.vmem %s0, %s134
      $region28: #{tpu_custom_call.1} parent=23 // pred_fallthru
        _
    $region24: #{tpu_custom_call.1} parent=5 // pred_fallthru
      _
    %p136 = scmp.le.s32.totalorder 1, %s9
    %p137 = scmp.lt.s32.totalorder %s9, 3
    %p138 = pnand %p136, %p137
    %p139 = pneg %p138
    // Predicated region
    $region29: #{tpu_custom_call.1} parent=5 // pred_check
      _
    $region30: #{tpu_custom_call.1} parent=5 // pred_check_branch
      %141 = sbr.rel (%p138) target = $region32
    $region31: #{tpu_custom_call.1} parent=5 // pred_region
      %s142 = ssub.s32 %s9, 1
      %p143 = scmp.lt.s32.totalorder %s14, 1
      %s144 = scalar_select %p143, %s14, 1
      %s145 = smul.addr %s144, 54
      %s146 = smul.addr %s145, 4
      %s147 = scalar_lea.vmem %s0, %s146
      %p148 = pneg %p35
      %p149 = pneg %p32
      %p150 = pneg %p56
      %p151 = pneg %p53
      %p152 = pneg %p77
      %p153 = pneg %p74
      %p154 = pneg %p103
      %p155 = pneg %p100
      %p156 = scmp.lt.s32.totalorder %s14, 1
      %s157 = scalar_select %p156, %s14, 1
      %s158 = smul.addr %s157, 32
      %s159 = smul.addr %s158, 4
      %s160 = scalar_lea.vmem %s3, %s159
      %p161 = scmp.lt.s32.totalorder %s14, 1
      %s162 = scalar_select %p161, %s14, 1
      %s163 = smul.addr %s162, 54
      %s164 = smul.addr %s163, 4
      %s165 = scalar_lea.vmem %s0, %s164
      %p166 = scmp.lt.s32.totalorder %s14, 1
      %s167 = scalar_select %p166, %s14, 1
      %s168 = smul.addr %s167, 32
      %s169 = smul.addr %s168, 4
      %s170 = scalar_lea.vmem %s3, %s169
      %v172 = vld [vmem:[%s165] sm:$0xf]
      %v173 = vld [vmem:[%s165 + $0x4] sm:$0xf]
      %v174 = vld [vmem:[%s165 + $0x8] sm:$0x1]
      %v175 = vld [vmem:[%s165 + $0xc] sm:$0xf]
      %v176 = vld [vmem:[%s165 + $0x10] sm:$0xf]
      %v177 = vld [vmem:[%s165 + $0x14] sm:$0x1]
      %v178 = vld [vmem:[%s165 + $0x18] sm:$0xf]
      %v179 = vld [vmem:[%s165 + $0x1c] sm:$0xf]
      %v180 = vld [vmem:[%s165 + $0x20] sm:$0x1]
      %v181 = vld [vmem:[%s165 + $0x24] sm:$0xf]
      %v182 = vld [vmem:[%s165 + $0x28] sm:$0xf]
      %v183 = vld [vmem:[%s165 + $0x2c] sm:$0x1]
      %v184 = vld [vmem:[%s165 + $0x30] sm:$0xf]
      %v185 = vld [vmem:[%s165 + $0x34] sm:$0xf]
      %v186 = vld [vmem:[%s165 + $0x38] sm:$0x1]
      %v187 = vld [vmem:[%s165 + $0x3c] sm:$0xf]
      %v188 = vld [vmem:[%s165 + $0x40] sm:$0xf]
      %v189 = vld [vmem:[%s165 + $0x44] sm:$0x1]
      %v190 = vld [vmem:[%s165 + $0x48] sm:$0xf]
      %v191 = vld [vmem:[%s165 + $0x4c] sm:$0xf]
      %v192 = vld [vmem:[%s165 + $0x50] sm:$0x1]
      %v193 = vld [vmem:[%s165 + $0x54] sm:$0xf]
      %v194 = vld [vmem:[%s165 + $0x58] sm:$0xf]
      %v195 = vld [vmem:[%s165 + $0x5c] sm:$0x1]
      %v196 = vld [vmem:[%s165 + $0x60] sm:$0xf]
      %v197 = vld [vmem:[%s165 + $0x64] sm:$0xf]
      %v198 = vld [vmem:[%s165 + $0x68] sm:$0x1]
      %v199 = vld [vmem:[%s165 + $0x6c] sm:$0xf]
      %v200 = vld [vmem:[%s165 + $0x70] sm:$0xf]
      %v201 = vld [vmem:[%s165 + $0x74] sm:$0x1]
      %v202 = vld [vmem:[%s165 + $0x78] sm:$0xf]
      %v203 = vld [vmem:[%s165 + $0x7c] sm:$0xf]
      %v204 = vld [vmem:[%s165 + $0x80] sm:$0x1]
      %v205 = vld [vmem:[%s165 + $0x84] sm:$0xf]
      %v206 = vld [vmem:[%s165 + $0x88] sm:$0xf]
      %v207 = vld [vmem:[%s165 + $0x8c] sm:$0x1]
      %v208 = vld [vmem:[%s165 + $0x90] sm:$0xf]
      %v209 = vld [vmem:[%s165 + $0x94] sm:$0xf]
      %v210 = vld [vmem:[%s165 + $0x98] sm:$0x1]
      %v211 = vld [vmem:[%s165 + $0x9c] sm:$0xf]
      %v212 = vld [vmem:[%s165 + $0xa0] sm:$0xf]
      %v213 = vld [vmem:[%s165 + $0xa4] sm:$0x1]
      %v214 = vld [vmem:[%s165 + $0xa8] sm:$0xf]
      %v215 = vld [vmem:[%s165 + $0xac] sm:$0xf]
      %v216 = vld [vmem:[%s165 + $0xb0] sm:$0x1]
      %v217 = vld [vmem:[%s165 + $0xb4] sm:$0xf]
      %v218 = vld [vmem:[%s165 + $0xb8] sm:$0xf]
      %v219 = vld [vmem:[%s165 + $0xbc] sm:$0x1]
      %v220 = vld [vmem:[%s165 + $0xc0] sm:$0xf]
      %v221 = vld [vmem:[%s165 + $0xc4] sm:$0xf]
      %v222 = vld [vmem:[%s165 + $0xc8] sm:$0x1]
      %v223 = vld [vmem:[%s165 + $0xcc] sm:$0xf]
      %v224 = vld [vmem:[%s165 + $0xd0] sm:$0xf]
      %v225 = vld [vmem:[%s165 + $0xd4] sm:$0x1]
      %v226 = vld [vmem:[%s1] sm:$0x3]
      %v227 = vld [vmem:[%s1 + $0x2] sm:$0x3]
      %v228 = vld [vmem:[%s1 + $0x4] sm:$0x3]
      %v229 = vld [vmem:[%s1 + $0x6] sm:$0x3]
      %v230 = vld [vmem:[%s1 + $0x8] sm:$0x3]
      %v231 = vld [vmem:[%s1 + $0xa] sm:$0x3]
      %v232 = vld [vmem:[%s1 + $0xc] sm:$0x3]
      %v233 = vld [vmem:[%s1 + $0xe] sm:$0x3]
      %v234 = vld [vmem:[%s1 + $0x10] sm:$0x3]
      %v235 = vld [vmem:[%s2] sm:$0x1]
      %vm236 = vsmask.f32 3328
      %vm237 = vsmask.f32 7440
      %vm238 = vmor %vm236, %vm237
      %v240 = vshrl.u32 %v172, 16
      %v242 = vrot.slane %v240, 4
      %v243 = vshll.u32 %v172, 16
      %v245 = vrot.slane %v243, 5
      %v246 = vor.u32 %v242, %v245
      %v247 = vrot.slane %v246, 4
      %v249 = vshll.u32 %v173, 16
      %v251 = vrot.slane %v249, 5
      %v252 = vsel %vm238, %v247, %v251
      %v253 = vshrl.u32 %v173, 16
      %v255 = vrot.slane %v253, 4
      %v256 = vor.u32 %v255, %v251
      %v257 = vrot.slane %v256, 4
      %v259 = vshll.u32 %v174, 16
      %v261 = vrot.slane %v259, 5
      %v262 = vsel %vm238, %v257, %v261
      %v264 = vshrl.u32 %v175, 16
      %v266 = vrot.slane %v264, 4
      %v267 = vshll.u32 %v175, 16
      %v269 = vrot.slane %v267, 5
      %v270 = vor.u32 %v266, %v269
      %v271 = vrot.slane %v270, 4
      %v273 = vshll.u32 %v176, 16
      %v275 = vrot.slane %v273, 5
      %v276 = vsel %vm238, %v271, %v275
      %v277 = vshrl.u32 %v176, 16
      %v279 = vrot.slane %v277, 4
      %v280 = vor.u32 %v279, %v275
      %v281 = vrot.slane %v280, 4
      %v283 = vshll.u32 %v177, 16
      %v285 = vrot.slane %v283, 5
      %v286 = vsel %vm238, %v281, %v285
      %v288 = vshrl.u32 %v178, 16
      %v290 = vrot.slane %v288, 4
      %v291 = vshll.u32 %v178, 16
      %v293 = vrot.slane %v291, 5
      %v294 = vor.u32 %v290, %v293
      %v295 = vrot.slane %v294, 4
      %v297 = vshll.u32 %v179, 16
      %v299 = vrot.slane %v297, 5
      %v300 = vsel %vm238, %v295, %v299
      %v301 = vshrl.u32 %v179, 16
      %v303 = vrot.slane %v301, 4
      %v304 = vor.u32 %v303, %v299
      %v305 = vrot.slane %v304, 4
      %v307 = vshll.u32 %v180, 16
      %v309 = vrot.slane %v307, 5
      %v310 = vsel %vm238, %v305, %v309
      %v312 = vshrl.u32 %v181, 16
      %v314 = vrot.slane %v312, 4
      %v315 = vshll.u32 %v181, 16
      %v317 = vrot.slane %v315, 5
      %v318 = vor.u32 %v314, %v317
      %v319 = vrot.slane %v318, 4
      %v321 = vshll.u32 %v182, 16
      %v323 = vrot.slane %v321, 5
      %v324 = vsel %vm238, %v319, %v323
      %v325 = vshrl.u32 %v182, 16
      %v327 = vrot.slane %v325, 4
      %v328 = vor.u32 %v327, %v323
      %v329 = vrot.slane %v328, 4
      %v331 = vshll.u32 %v183, 16
      %v333 = vrot.slane %v331, 5
      %v334 = vsel %vm238, %v329, %v333
      %v336 = vshrl.u32 %v184, 16
      %v338 = vrot.slane %v336, 4
      %v339 = vshll.u32 %v184, 16
      %v341 = vrot.slane %v339, 5
      %v342 = vor.u32 %v338, %v341
      %v343 = vrot.slane %v342, 4
      %v345 = vshll.u32 %v185, 16
      %v347 = vrot.slane %v345, 5
      %v348 = vsel %vm238, %v343, %v347
      %v349 = vshrl.u32 %v185, 16
      %v351 = vrot.slane %v349, 4
      %v352 = vor.u32 %v351, %v347
      %v353 = vrot.slane %v352, 4
      %v355 = vshll.u32 %v186, 16
      %v357 = vrot.slane %v355, 5
      %v358 = vsel %vm238, %v353, %v357
      %v360 = vshrl.u32 %v187, 16
      %v362 = vrot.slane %v360, 4
      %v363 = vshll.u32 %v187, 16
      %v365 = vrot.slane %v363, 5
      %v366 = vor.u32 %v362, %v365
      %v367 = vrot.slane %v366, 4
      %v369 = vshll.u32 %v188, 16
      %v371 = vrot.slane %v369, 5
      %v372 = vsel %vm238, %v367, %v371
      %v373 = vshrl.u32 %v188, 16
      %v375 = vrot.slane %v373, 4
      %v376 = vor.u32 %v375, %v371
      %v377 = vrot.slane %v376, 4
      %v379 = vshll.u32 %v189, 16
      %v381 = vrot.slane %v379, 5
      %v382 = vsel %vm238, %v377, %v381
      %v384 = vshrl.u32 %v190, 16
      %v386 = vrot.slane %v384, 4
      %v387 = vshll.u32 %v190, 16
      %v389 = vrot.slane %v387, 5
      %v390 = vor.u32 %v386, %v389
      %v391 = vrot.slane %v390, 4
      %v393 = vshll.u32 %v191, 16
      %v395 = vrot.slane %v393, 5
      %v396 = vsel %vm238, %v391, %v395
      %v397 = vshrl.u32 %v191, 16
      %v399 = vrot.slane %v397, 4
      %v400 = vor.u32 %v399, %v395
      %v401 = vrot.slane %v400, 4
      %v403 = vshll.u32 %v192, 16
      %v405 = vrot.slane %v403, 5
      %v406 = vsel %vm238, %v401, %v405
      %v408 = vshrl.u32 %v193, 16
      %v410 = vrot.slane %v408, 4
      %v411 = vshll.u32 %v193, 16
      %v413 = vrot.slane %v411, 5
      %v414 = vor.u32 %v410, %v413
      %v415 = vrot.slane %v414, 4
      %v417 = vshll.u32 %v194, 16
      %v419 = vrot.slane %v417, 5
      %v420 = vsel %vm238, %v415, %v419
      %v421 = vshrl.u32 %v194, 16
      %v423 = vrot.slane %v421, 4
      %v424 = vor.u32 %v423, %v419
      %v425 = vrot.slane %v424, 4
      %v427 = vshll.u32 %v195, 16
      %v429 = vrot.slane %v427, 5
      %v430 = vsel %vm238, %v425, %v429
      %v432 = vshrl.u32 %v196, 16
      %v434 = vrot.slane %v432, 4
      %v435 = vshll.u32 %v196, 16
      %v437 = vrot.slane %v435, 5
      %v438 = vor.u32 %v434, %v437
      %v439 = vrot.slane %v438, 4
      %v441 = vshll.u32 %v197, 16
      %v443 = vrot.slane %v441, 5
      %v444 = vsel %vm238, %v439, %v443
      %v445 = vshrl.u32 %v197, 16
      %v447 = vrot.slane %v445, 4
      %v448 = vor.u32 %v447, %v443
      %v449 = vrot.slane %v448, 4
      %v451 = vshll.u32 %v198, 16
      %v453 = vrot.slane %v451, 5
      %v454 = vsel %vm238, %v449, %v453
      %v456 = vshrl.u32 %v199, 16
      %v458 = vrot.slane %v456, 4
      %v459 = vshll.u32 %v199, 16
      %v461 = vrot.slane %v459, 5
      %v462 = vor.u32 %v458, %v461
      %v463 = vrot.slane %v462, 4
      %v465 = vshll.u32 %v200, 16
      %v467 = vrot.slane %v465, 5
      %v468 = vsel %vm238, %v463, %v467
      %v469 = vshrl.u32 %v200, 16
      %v471 = vrot.slane %v469, 4
      %v472 = vor.u32 %v471, %v467
      %v473 = vrot.slane %v472, 4
      %v475 = vshll.u32 %v201, 16
      %v477 = vrot.slane %v475, 5
      %v478 = vsel %vm238, %v473, %v477
      %v480 = vshrl.u32 %v202, 16
      %v482 = vrot.slane %v480, 4
      %v483 = vshll.u32 %v202, 16
      %v485 = vrot.slane %v483, 5
      %v486 = vor.u32 %v482, %v485
      %v487 = vrot.slane %v486, 4
      %v489 = vshll.u32 %v203, 16
      %v491 = vrot.slane %v489, 5
      %v492 = vsel %vm238, %v487, %v491
      %v493 = vshrl.u32 %v203, 16
      %v495 = vrot.slane %v493, 4
      %v496 = vor.u32 %v495, %v491
      %v497 = vrot.slane %v496, 4
      %v499 = vshll.u32 %v204, 16
      %v501 = vrot.slane %v499, 5
      %v502 = vsel %vm238, %v497, %v501
      %v504 = vshrl.u32 %v205, 16
      %v506 = vrot.slane %v504, 4
      %v507 = vshll.u32 %v205, 16
      %v509 = vrot.slane %v507, 5
      %v510 = vor.u32 %v506, %v509
      %v511 = vrot.slane %v510, 4
      %v513 = vshll.u32 %v206, 16
      %v515 = vrot.slane %v513, 5
      %v516 = vsel %vm238, %v511, %v515
      %v517 = vshrl.u32 %v206, 16
      %v519 = vrot.slane %v517, 4
      %v520 = vor.u32 %v519, %v515
      %v521 = vrot.slane %v520, 4
      %v523 = vshll.u32 %v207, 16
      %v525 = vrot.slane %v523, 5
      %v526 = vsel %vm238, %v521, %v525
      %v528 = vshrl.u32 %v208, 16
      %v530 = vrot.slane %v528, 4
      %v531 = vshll.u32 %v208, 16
      %v533 = vrot.slane %v531, 5
      %v534 = vor.u32 %v530, %v533
      %v535 = vrot.slane %v534, 4
      %v537 = vshll.u32 %v209, 16
      %v539 = vrot.slane %v537, 5
      %v540 = vsel %vm238, %v535, %v539
      %v541 = vshrl.u32 %v209, 16
      %v543 = vrot.slane %v541, 4
      %v544 = vor.u32 %v543, %v539
      %v545 = vrot.slane %v544, 4
      %v547 = vshll.u32 %v210, 16
      %v549 = vrot.slane %v547, 5
      %v550 = vsel %vm238, %v545, %v549
      %v552 = vshrl.u32 %v211, 16
      %v554 = vrot.slane %v552, 4
      %v555 = vshll.u32 %v211, 16
      %v557 = vrot.slane %v555, 5
      %v558 = vor.u32 %v554, %v557
      %v559 = vrot.slane %v558, 4
      %v561 = vshll.u32 %v212, 16
      %v563 = vrot.slane %v561, 5
      %v564 = vsel %vm238, %v559, %v563
      %v565 = vshrl.u32 %v212, 16
      %v567 = vrot.slane %v565, 4
      %v568 = vor.u32 %v567, %v563
      %v569 = vrot.slane %v568, 4
      %v571 = vshll.u32 %v213, 16
      %v573 = vrot.slane %v571, 5
      %v574 = vsel %vm238, %v569, %v573
      %v576 = vshrl.u32 %v214, 16
      %v578 = vrot.slane %v576, 4
      %v579 = vshll.u32 %v214, 16
      %v581 = vrot.slane %v579, 5
      %v582 = vor.u32 %v578, %v581
      %v583 = vrot.slane %v582, 4
      %v585 = vshll.u32 %v215, 16
      %v587 = vrot.slane %v585, 5
      %v588 = vsel %vm238, %v583, %v587
      %v589 = vshrl.u32 %v215, 16
      %v591 = vrot.slane %v589, 4
      %v592 = vor.u32 %v591, %v587
      %v593 = vrot.slane %v592, 4
      %v595 = vshll.u32 %v216, 16
      %v597 = vrot.slane %v595, 5
      %v598 = vsel %vm238, %v593, %v597
      %v600 = vshrl.u32 %v217, 16
      %v602 = vrot.slane %v600, 4
      %v603 = vshll.u32 %v217, 16
      %v605 = vrot.slane %v603, 5
      %v606 = vor.u32 %v602, %v605
      %v607 = vrot.slane %v606, 4
      %v609 = vshll.u32 %v218, 16
      %v611 = vrot.slane %v609, 5
      %v612 = vsel %vm238, %v607, %v611
      %v613 = vshrl.u32 %v218, 16
      %v615 = vrot.slane %v613, 4
      %v616 = vor.u32 %v615, %v611
      %v617 = vrot.slane %v616, 4
      %v619 = vshll.u32 %v219, 16
      %v621 = vrot.slane %v619, 5
      %v622 = vsel %vm238, %v617, %v621
      %v623 = vunpack.c.l.b16 %v252
      %v624 = vunpack.c.l.b16 %v262
      %v625 = vunpack.c.l.b16 %v276
      %v626 = vunpack.c.l.b16 %v286
      %v627 = vunpack.c.l.b16 %v300
      %v628 = vunpack.c.l.b16 %v310
      %v629 = vunpack.c.l.b16 %v324
      %v630 = vunpack.c.l.b16 %v334
      %v631 = vunpack.c.l.b16 %v348
      %v632 = vunpack.c.l.b16 %v358
      %v633 = vunpack.c.l.b16 %v372
      %v634 = vunpack.c.l.b16 %v382
      %v635 = vunpack.c.l.b16 %v396
      %v636 = vunpack.c.l.b16 %v406
      %v637 = vunpack.c.l.b16 %v420
      %v638 = vunpack.c.l.b16 %v430
      %v639 = vunpack.c.l.b16 %v444
      %v640 = vunpack.c.l.b16 %v454
      %v641 = vunpack.c.l.b16 %v468
      %v642 = vunpack.c.l.b16 %v478
      %v643 = vunpack.c.l.b16 %v492
      %v644 = vunpack.c.l.b16 %v502
      %v645 = vunpack.c.l.b16 %v516
      %v646 = vunpack.c.l.b16 %v526
      %v647 = vunpack.c.l.b16 %v540
      %v648 = vunpack.c.l.b16 %v550
      %v649 = vunpack.c.l.b16 %v564
      %v650 = vunpack.c.l.b16 %v574
      %v651 = vunpack.c.l.b16 %v588
      %v652 = vunpack.c.l.b16 %v598
      %v653 = vunpack.c.l.b16 %v612
      %v654 = vunpack.c.l.b16 %v622
      %v655 = vpack.c.b16 %v624, %v623
      %v656 = vpack.c.b16 %v626, %v625
      %v657 = vpack.c.b16 %v628, %v627
      %v658 = vpack.c.b16 %v630, %v629
      %v659 = vpack.c.b16 %v632, %v631
      %v660 = vpack.c.b16 %v634, %v633
      %v661 = vpack.c.b16 %v636, %v635
      %v662 = vpack.c.b16 %v638, %v637
      %v663 = vpack.c.b16 %v640, %v639
      %v664 = vpack.c.b16 %v642, %v641
      %v665 = vpack.c.b16 %v644, %v643
      %v666 = vpack.c.b16 %v646, %v645
      %v667 = vpack.c.b16 %v648, %v647
      %v668 = vpack.c.b16 %v650, %v649
      %v669 = vpack.c.b16 %v652, %v651
      %v670 = vpack.c.b16 %v654, %v653
      %vm671 = vcmask 31744
      %v673 = vsel %vm671, %v655, 0
      %v676 = vsel %vm671, %v656, 0
      %v679 = vsel %vm671, %v657, 0
      %v682 = vsel %vm671, %v658, 0
      %v685 = vsel %vm671, %v659, 0
      %v688 = vsel %vm671, %v660, 0
      %v691 = vsel %vm671, %v661, 0
      %v694 = vsel %vm671, %v662, 0
      %v697 = vsel %vm671, %v663, 0
      %v700 = vsel %vm671, %v664, 0
      %v703 = vsel %vm671, %v665, 0
      %v706 = vsel %vm671, %v666, 0
      %v709 = vsel %vm671, %v667, 0
      %v712 = vsel %vm671, %v668, 0
      %v715 = vsel %vm671, %v669, 0
      %v718 = vsel %vm671, %v670, 0
      %vm720 = vcmask 1041408
      %v722 = vsel %vm720, %v227, 0
      %724 = vmatprep.subr.bf16.mxu0 0
      %725 = vmatpush1.bf16.msra.mxu0 %v722
      %726 = vmatprep.subr.bf16.mxu0 0
      %727 = vmatpush1.bf16.msra.mxu0 0
      %728 = vmatprep.subr.bf16.mxu0 0
      %729 = vmatpush1.bf16.msra.mxu0 0
      %730 = vmatprep.subr.bf16.mxu0 0
      %731 = vmatpush1.bf16.msra.mxu0 0
      %732 = vmatprep.subr.bf16.mxu0 0
      %733 = vmatpush1.bf16.msra.mxu0 0
      %734 = vmatprep.subr.bf16.mxu0 0
      %735 = vmatpush1.bf16.msra.mxu0 0
      %736 = vmatprep.subr.bf16.mxu0 0
      %737 = vmatpush1.bf16.msra.mxu0 0
      %738 = vmatprep.subr.bf16.mxu0 0
      %739 = vmatpush1.bf16.msra.mxu0 0
      %740 = vmatprep.subr.bf16.mxu0 0
      %741 = vmatpush1.bf16.msra.mxu0 0
      %742 = vmatprep.subr.bf16.mxu0 0
      %743 = vmatpush1.bf16.msra.mxu0 0
      %744 = vmatprep.subr.bf16.mxu0 0
      %745 = vmatpush1.bf16.msra.mxu0 0
      %746 = vmatprep.subr.bf16.mxu0 0
      %747 = vmatpush1.bf16.msra.mxu0 0
      %748 = vmatprep.subr.bf16.mxu0 0
      %749 = vmatpush1.bf16.msra.mxu0 0
      %750 = vmatprep.subr.bf16.mxu0 0
      %751 = vmatpush1.bf16.msra.mxu0 0
      %752 = vmatprep.subr.bf16.mxu0 0
      %753 = vmatpush1.bf16.msra.mxu0 0
      %754 = vmatprep.subr.bf16.mxu0 0
      %755 = vmatpush1.bf16.msra.mxu0 0
      %756 = vmatprep.mubr.bf16.mxu0 0
      %757 = vmatmul.mubr.bf16.gmra.mrb[0].mxu0 %v673
      %v758 = vpop.f32.mrb[0].mxu0
      %v759 = vadd.f32 0.0, %v758
      %v760 = vpop.f32.mrb[0].mxu0
      %v761 = vpop.f32.mrb[0].mxu0
      %v762 = vadd.f32 0.0, %v761
      %v763 = vpop.f32.mrb[0].mxu0
      %764 = vmatprep.mubr.bf16.mxu0 0
      %765 = vmatmul.mubr.bf16.gmra.mrb[0].mxu0 %v676
      %v766 = vpop.f32.mrb[0].mxu0
      %v767 = vadd.f32 0.0, %v766
      %v768 = vpop.f32.mrb[0].mxu0
      %v769 = vpop.f32.mrb[0].mxu0
      %v770 = vadd.f32 0.0, %v769
      %v771 = vpop.f32.mrb[0].mxu0
      %772 = vmatprep.mubr.bf16.mxu0 0
      %773 = vmatmul.mubr.bf16.gmra.mrb[0].mxu0 %v679
      %v774 = vpop.f32.mrb[0].mxu0
      %v775 = vadd.f32 0.0, %v774
      %v776 = vpop.f32.mrb[0].mxu0
      %v777 = vpop.f32.mrb[0].mxu0
      %v778 = vadd.f32 0.0, %v777
      %v779 = vpop.f32.mrb[0].mxu0
      %780 = vmatprep.mubr.bf16.mxu0 0
      %781 = vmatmul.mubr.bf16.gmra.mrb[0].mxu0 %v682
      %v782 = vpop.f32.mrb[0].mxu0
      %v783 = vadd.f32 0.0, %v782
      %v784 = vpop.f32.mrb[0].mxu0
      %v785 = vpop.f32.mrb[0].mxu0
      %v786 = vadd.f32 0.0, %v785
      %v787 = vpop.f32.mrb[0].mxu0
      %788 = vmatprep.mubr.bf16.mxu0 0
      %789 = vmatmul.mubr.bf16.gmra.mrb[0].mxu0 %v685
      %v790 = vpop.f32.mrb[0].mxu0
      %v791 = vadd.f32 0.0, %v790
      %v792 = vpop.f32.mrb[0].mxu0
      %v793 = vpop.f32.mrb[0].mxu0
      %v794 = vadd.f32 0.0, %v793
      %v795 = vpop.f32.mrb[0].mxu0
      %796 = vmatprep.mubr.bf16.mxu0 0
      %797 = vmatmul.mubr.bf16.gmra.mrb[0].mxu0 %v688
      %v798 = vpop.f32.mrb[0].mxu0
      %v799 = vadd.f32 0.0, %v798
      %v800 = vpop.f32.mrb[0].mxu0
      %v801 = vpop.f32.mrb[0].mxu0
      %v802 = vadd.f32 0.0, %v801
      %v803 = vpop.f32.mrb[0].mxu0
      %804 = vmatprep.mubr.bf16.mxu0 0
      %805 = vmatmul.mubr.bf16.gmra.mrb[0].mxu0 %v691
      %v806 = vpop.f32.mrb[0].mxu0
      %v807 = vadd.f32 0.0, %v806
      %v808 = vpop.f32.mrb[0].mxu0
      %v809 = vpop.f32.mrb[0].mxu0
      %v810 = vadd.f32 0.0, %v809
      %v811 = vpop.f32.mrb[0].mxu0
      %812 = vmatprep.mubr.bf16.mxu0 0
      %813 = vmatmul.mubr.bf16.gmra.mrb[0].mxu0 %v694
      %v814 = vpop.f32.mrb[0].mxu0
      %v815 = vadd.f32 0.0, %v814
      %v816 = vpop.f32.mrb[0].mxu0
      %v817 = vpop.f32.mrb[0].mxu0
      %v818 = vadd.f32 0.0, %v817
      %v819 = vpop.f32.mrb[0].mxu0
      %820 = vmatprep.mubr.bf16.mxu0 0
      %821 = vmatmul.mubr.bf16.gmra.mrb[0].mxu0 %v697
      %v822 = vpop.f32.mrb[0].mxu0
      %v823 = vadd.f32 0.0, %v822
      %v824 = vpop.f32.mrb[0].mxu0
      %v825 = vpop.f32.mrb[0].mxu0
      %v826 = vadd.f32 0.0, %v825
      %v827 = vpop.f32.mrb[0].mxu0
      %828 = vmatprep.mubr.bf16.mxu0 0
      %829 = vmatmul.mubr.bf16.gmra.mrb[0].mxu0 %v700
      %v830 = vpop.f32.mrb[0].mxu0
      %v831 = vadd.f32 0.0, %v830
      %v832 = vpop.f32.mrb[0].mxu0
      %v833 = vpop.f32.mrb[0].mxu0
      %v834 = vadd.f32 0.0, %v833
      %v835 = vpop.f32.mrb[0].mxu0
      %836 = vmatprep.mubr.bf16.mxu0 0
      %837 = vmatmul.mubr.bf16.gmra.mrb[0].mxu0 %v703
      %v838 = vpop.f32.mrb[0].mxu0
      %v839 = vadd.f32 0.0, %v838
      %v840 = vpop.f32.mrb[0].mxu0
      %v841 = vpop.f32.mrb[0].mxu0
      %v842 = vadd.f32 0.0, %v841
      %v843 = vpop.f32.mrb[0].mxu0
      %844 = vmatprep.mubr.bf16.mxu0 0
      %845 = vmatmul.mubr.bf16.gmra.mrb[0].mxu0 %v706
      %v846 = vpop.f32.mrb[0].mxu0
      %v847 = vadd.f32 0.0, %v846
      %v848 = vpop.f32.mrb[0].mxu0
      %v849 = vpop.f32.mrb[0].mxu0
      %v850 = vadd.f32 0.0, %v849
      %v851 = vpop.f32.mrb[0].mxu0
      %852 = vmatprep.mubr.bf16.mxu0 0
      %853 = vmatmul.mubr.bf16.gmra.mrb[0].mxu0 %v709
      %v854 = vpop.f32.mrb[0].mxu0
      %v855 = vadd.f32 0.0, %v854
      %v856 = vpop.f32.mrb[0].mxu0
      %v857 = vpop.f32.mrb[0].mxu0
      %v858 = vadd.f32 0.0, %v857
      %v859 = vpop.f32.mrb[0].mxu0
      %860 = vmatprep.mubr.bf16.mxu0 0
      %861 = vmatmul.mubr.bf16.gmra.mrb[0].mxu0 %v712
      %v862 = vpop.f32.mrb[0].mxu0
      %v863 = vadd.f32 0.0, %v862
      %v864 = vpop.f32.mrb[0].mxu0
      %v865 = vpop.f32.mrb[0].mxu0
      %v866 = vadd.f32 0.0, %v865
      %v867 = vpop.f32.mrb[0].mxu0
      %868 = vmatprep.mubr.bf16.mxu0 0
      %869 = vmatmul.mubr.bf16.gmra.mrb[0].mxu0 %v715
      %v870 = vpop.f32.mrb[0].mxu0
      %v871 = vadd.f32 0.0, %v870
      %v872 = vpop.f32.mrb[0].mxu0
      %v873 = vpop.f32.mrb[0].mxu0
      %v874 = vadd.f32 0.0, %v873
      %v875 = vpop.f32.mrb[0].mxu0
      %876 = vmatprep.mubr.bf16.mxu0 0
      %877 = vmatmul.mubr.bf16.gmra.mrb[0].mxu0 %v718
      %v878 = vpop.f32.mrb[0].mxu0
      %v879 = vadd.f32 0.0, %v878
      %v880 = vpop.f32.mrb[0].mxu0
      %v881 = vpop.f32.mrb[0].mxu0
      %v882 = vadd.f32 0.0, %v881
      %v883 = vpop.f32.mrb[0].mxu0
      %884 = vdwg.mxu0
      %v917 = vunpack.c.l.b16 %v172
      %v918 = vunpack.c.l.b16 %v173
      %v919 = vunpack.c.l.b16 %v175
      %v920 = vunpack.c.l.b16 %v176
      %v921 = vunpack.c.l.b16 %v178
      %v922 = vunpack.c.l.b16 %v179
      %v923 = vunpack.c.l.b16 %v181
      %v924 = vunpack.c.l.b16 %v182
      %v925 = vunpack.c.l.b16 %v184
      %v926 = vunpack.c.l.b16 %v185
      %v927 = vunpack.c.l.b16 %v187
      %v928 = vunpack.c.l.b16 %v188
      %v929 = vunpack.c.l.b16 %v190
      %v930 = vunpack.c.l.b16 %v191
      %v931 = vunpack.c.l.b16 %v193
      %v932 = vunpack.c.l.b16 %v194
      %v933 = vunpack.c.l.b16 %v196
      %v934 = vunpack.c.l.b16 %v197
      %v935 = vunpack.c.l.b16 %v199
      %v936 = vunpack.c.l.b16 %v200
      %v937 = vunpack.c.l.b16 %v202
      %v938 = vunpack.c.l.b16 %v203
      %v939 = vunpack.c.l.b16 %v205
      %v940 = vunpack.c.l.b16 %v206
      %v941 = vunpack.c.l.b16 %v208
      %v942 = vunpack.c.l.b16 %v209
      %v943 = vunpack.c.l.b16 %v211
      %v944 = vunpack.c.l.b16 %v212
      %v945 = vunpack.c.l.b16 %v214
      %v946 = vunpack.c.l.b16 %v215
      %v947 = vunpack.c.l.b16 %v217
      %v948 = vunpack.c.l.b16 %v218
      %v949 = vpack.c.b16 %v918, %v917
      %v950 = vpack.c.b16 %v920, %v919
      %v951 = vpack.c.b16 %v922, %v921
      %v952 = vpack.c.b16 %v924, %v923
      %v953 = vpack.c.b16 %v926, %v925
      %v954 = vpack.c.b16 %v928, %v927
      %v955 = vpack.c.b16 %v930, %v929
      %v956 = vpack.c.b16 %v932, %v931
      %v957 = vpack.c.b16 %v934, %v933
      %v958 = vpack.c.b16 %v936, %v935
      %v959 = vpack.c.b16 %v938, %v937
      %v960 = vpack.c.b16 %v940, %v939
      %v961 = vpack.c.b16 %v942, %v941
      %v962 = vpack.c.b16 %v944, %v943
      %v963 = vpack.c.b16 %v946, %v945
      %v964 = vpack.c.b16 %v948, %v947
      %v966 = vsel %vm671, %v949, 0
      %v969 = vsel %vm671, %v950, 0
      %v972 = vsel %vm671, %v951, 0
      %v975 = vsel %vm671, %v952, 0
      %v978 = vsel %vm671, %v953, 0
      %v981 = vsel %vm671, %v954, 0
      %v984 = vsel %vm671, %v955, 0
      %v987 = vsel %vm671, %v956, 0
      %v990 = vsel %vm671, %v957, 0
      %v993 = vsel %vm671, %v958, 0
      %v996 = vsel %vm671, %v959, 0
      %v999 = vsel %vm671, %v960, 0
      %v1002 = vsel %vm671, %v961, 0
      %v1005 = vsel %vm671, %v962, 0
      %v1008 = vsel %vm671, %v963, 0
      %v1011 = vsel %vm671, %v964, 0
      %v1014 = vsel %vm720, %v226, 0
      %1016 = vmatprep.subr.bf16.mxu0 0
      %1017 = vmatpush1.bf16.msra.mxu0 %v1014
      %1018 = vmatprep.subr.bf16.mxu0 0
      %1019 = vmatpush1.bf16.msra.mxu0 0
      %1020 = vmatprep.subr.bf16.mxu0 0
      %1021 = vmatpush1.bf16.msra.mxu0 0
      %1022 = vmatprep.subr.bf16.mxu0 0
      %1023 = vmatpush1.bf16.msra.mxu0 0
      %1024 = vmatprep.subr.bf16.mxu0 0
      %1025 = vmatpush1.bf16.msra.mxu0 0
      %1026 = vmatprep.subr.bf16.mxu0 0
      %1027 = vmatpush1.bf16.msra.mxu0 0
      %1028 = vmatprep.subr.bf16.mxu0 0
      %1029 = vmatpush1.bf16.msra.mxu0 0
      %1030 = vmatprep.subr.bf16.mxu0 0
      %1031 = vmatpush1.bf16.msra.mxu0 0
      %1032 = vmatprep.subr.bf16.mxu0 0
      %1033 = vmatpush1.bf16.msra.mxu0 0
      %1034 = vmatprep.subr.bf16.mxu0 0
      %1035 = vmatpush1.bf16.msra.mxu0 0
      %1036 = vmatprep.subr.bf16.mxu0 0
      %1037 = vmatpush1.bf16.msra.mxu0 0
      %1038 = vmatprep.subr.bf16.mxu0 0
      %1039 = vmatpush1.bf16.msra.mxu0 0
      %1040 = vmatprep.subr.bf16.mxu0 0
      %1041 = vmatpush1.bf16.msra.mxu0 0
      %1042 = vmatprep.subr.bf16.mxu0 0
      %1043 = vmatpush1.bf16.msra.mxu0 0
      %1044 = vmatprep.subr.bf16.mxu0 0
      %1045 = vmatpush1.bf16.msra.mxu0 0
      %1046 = vmatprep.subr.bf16.mxu0 0
      %1047 = vmatpush1.bf16.msra.mxu0 0
      %1048 = vmatprep.mubr.bf16.mxu0 0
      %1049 = vmatmul.mubr.bf16.gmra.mrb[0].mxu0 %v966
      %v1050 = vpop.f32.mrb[0].mxu0
      %v1051 = vadd.f32 %v759, %v1050
      %v1052 = vpop.f32.mrb[0].mxu0
      %v1053 = vpop.f32.mrb[0].mxu0
      %v1054 = vadd.f32 %v762, %v1053
      %v1055 = vpop.f32.mrb[0].mxu0
      %1056 = vmatprep.mubr.bf16.mxu0 0
      %1057 = vmatmul.mubr.bf16.gmra.mrb[0].mxu0 %v969
      %v1058 = vpop.f32.mrb[0].mxu0
      %v1059 = vadd.f32 %v767, %v1058
      %v1060 = vpop.f32.mrb[0].mxu0
      %v1061 = vpop.f32.mrb[0].mxu0
      %v1062 = vadd.f32 %v770, %v1061
      %v1063 = vpop.f32.mrb[0].mxu0
      %1064 = vmatprep.mubr.bf16.mxu0 0
      %1065 = vmatmul.mubr.bf16.gmra.mrb[0].mxu0 %v972
      %v1066 = vpop.f32.mrb[0].mxu0
      %v1067 = vadd.f32 %v775, %v1066
      %v1068 = vpop.f32.mrb[0].mxu0
      %v1069 = vpop.f32.mrb[0].mxu0
      %v1070 = vadd.f32 %v778, %v1069
      %v1071 = vpop.f32.mrb[0].mxu0
      %1072 = vmatprep.mubr.bf16.mxu0 0
      %1073 = vmatmul.mubr.bf16.gmra.mrb[0].mxu0 %v975
      %v1074 = vpop.f32.mrb[0].mxu0
      %v1075 = vadd.f32 %v783, %v1074
      %v1076 = vpop.f32.mrb[0].mxu0
      %v1077 = vpop.f32.mrb[0].mxu0
      %v1078 = vadd.f32 %v786, %v1077
      %v1079 = vpop.f32.mrb[0].mxu0
      %1080 = vmatprep.mubr.bf16.mxu0 0
      %1081 = vmatmul.mubr.bf16.gmra.mrb[0].mxu0 %v978
      %v1082 = vpop.f32.mrb[0].mxu0
      %v1083 = vadd.f32 %v791, %v1082
      %v1084 = vpop.f32.mrb[0].mxu0
      %v1085 = vpop.f32.mrb[0].mxu0
      %v1086 = vadd.f32 %v794, %v1085
      %v1087 = vpop.f32.mrb[0].mxu0
      %1088 = vmatprep.mubr.bf16.mxu0 0
      %1089 = vmatmul.mubr.bf16.gmra.mrb[0].mxu0 %v981
      %v1090 = vpop.f32.mrb[0].mxu0
      %v1091 = vadd.f32 %v799, %v1090
      %v1092 = vpop.f32.mrb[0].mxu0
      %v1093 = vpop.f32.mrb[0].mxu0
      %v1094 = vadd.f32 %v802, %v1093
      %v1095 = vpop.f32.mrb[0].mxu0
      %1096 = vmatprep.mubr.bf16.mxu0 0
      %1097 = vmatmul.mubr.bf16.gmra.mrb[0].mxu0 %v984
      %v1098 = vpop.f32.mrb[0].mxu0
      %v1099 = vadd.f32 %v807, %v1098
      %v1100 = vpop.f32.mrb[0].mxu0
      %v1101 = vpop.f32.mrb[0].mxu0
      %v1102 = vadd.f32 %v810, %v1101
      %v1103 = vpop.f32.mrb[0].mxu0
      %1104 = vmatprep.mubr.bf16.mxu0 0
      %1105 = vmatmul.mubr.bf16.gmra.mrb[0].mxu0 %v987
      %v1106 = vpop.f32.mrb[0].mxu0
      %v1107 = vadd.f32 %v815, %v1106
      %v1108 = vpop.f32.mrb[0].mxu0
      %v1109 = vpop.f32.mrb[0].mxu0
      %v1110 = vadd.f32 %v818, %v1109
      %v1111 = vpop.f32.mrb[0].mxu0
      %1112 = vmatprep.mubr.bf16.mxu0 0
      %1113 = vmatmul.mubr.bf16.gmra.mrb[0].mxu0 %v990
      %v1114 = vpop.f32.mrb[0].mxu0
      %v1115 = vadd.f32 %v823, %v1114
      %v1116 = vpop.f32.mrb[0].mxu0
      %v1117 = vpop.f32.mrb[0].mxu0
      %v1118 = vadd.f32 %v826, %v1117
      %v1119 = vpop.f32.mrb[0].mxu0
      %1120 = vmatprep.mubr.bf16.mxu0 0
      %1121 = vmatmul.mubr.bf16.gmra.mrb[0].mxu0 %v993
      %v1122 = vpop.f32.mrb[0].mxu0
      %v1123 = vadd.f32 %v831, %v1122
      %v1124 = vpop.f32.mrb[0].mxu0
      %v1125 = vpop.f32.mrb[0].mxu0
      %v1126 = vadd.f32 %v834, %v1125
      %v1127 = vpop.f32.mrb[0].mxu0
      %1128 = vmatprep.mubr.bf16.mxu0 0
      %1129 = vmatmul.mubr.bf16.gmra.mrb[0].mxu0 %v996
      %v1130 = vpop.f32.mrb[0].mxu0
      %v1131 = vadd.f32 %v839, %v1130
      %v1132 = vpop.f32.mrb[0].mxu0
      %v1133 = vpop.f32.mrb[0].mxu0
      %v1134 = vadd.f32 %v842, %v1133
      %v1135 = vpop.f32.mrb[0].mxu0
      %1136 = vmatprep.mubr.bf16.mxu0 0
      %1137 = vmatmul.mubr.bf16.gmra.mrb[0].mxu0 %v999
      %v1138 = vpop.f32.mrb[0].mxu0
      %v1139 = vadd.f32 %v847, %v1138
      %v1140 = vpop.f32.mrb[0].mxu0
      %v1141 = vpop.f32.mrb[0].mxu0
      %v1142 = vadd.f32 %v850, %v1141
      %v1143 = vpop.f32.mrb[0].mxu0
      %1144 = vmatprep.mubr.bf16.mxu0 0
      %1145 = vmatmul.mubr.bf16.gmra.mrb[0].mxu0 %v1002
      %v1146 = vpop.f32.mrb[0].mxu0
      %v1147 = vadd.f32 %v855, %v1146
      %v1148 = vpop.f32.mrb[0].mxu0
      %v1149 = vpop.f32.mrb[0].mxu0
      %v1150 = vadd.f32 %v858, %v1149
      %v1151 = vpop.f32.mrb[0].mxu0
      %1152 = vmatprep.mubr.bf16.mxu0 0
      %1153 = vmatmul.mubr.bf16.gmra.mrb[0].mxu0 %v1005
      %v1154 = vpop.f32.mrb[0].mxu0
      %v1155 = vadd.f32 %v863, %v1154
      %v1156 = vpop.f32.mrb[0].mxu0
      %v1157 = vpop.f32.mrb[0].mxu0
      %v1158 = vadd.f32 %v866, %v1157
      %v1159 = vpop.f32.mrb[0].mxu0
      %1160 = vmatprep.mubr.bf16.mxu0 0
      %1161 = vmatmul.mubr.bf16.gmra.mrb[0].mxu0 %v1008
      %v1162 = vpop.f32.mrb[0].mxu0
      %v1163 = vadd.f32 %v871, %v1162
      %v1164 = vpop.f32.mrb[0].mxu0
      %v1165 = vpop.f32.mrb[0].mxu0
      %v1166 = vadd.f32 %v874, %v1165
      %v1167 = vpop.f32.mrb[0].mxu0
      %1168 = vmatprep.mubr.bf16.mxu0 0
      %1169 = vmatmul.mubr.bf16.gmra.mrb[0].mxu0 %v1011
      %v1170 = vpop.f32.mrb[0].mxu0
      %v1171 = vadd.f32 %v879, %v1170
      %v1172 = vpop.f32.mrb[0].mxu0
      %v1173 = vpop.f32.mrb[0].mxu0
      %v1174 = vadd.f32 %v882, %v1173
      %v1175 = vpop.f32.mrb[0].mxu0
      %1176 = vdwg.mxu0
      %vm1193 = vcmask 1042432
      %vm1194 = vcmask 1046532
      %vm1195 = vmor %vm1193, %vm1194
      %v1196 = vrot.slane %v172, 5
      %v1197 = vrot.slane %v1196, 4
      %v1198 = vrot.slane %v173, 5
      %v1199 = vsel %vm1195, %v1197, %v1198
      %v1200 = vrot.slane %v1198, 4
      %v1201 = vrot.slane %v174, 5
      %v1202 = vsel %vm1195, %v1200, %v1201
      %v1203 = vrot.slane %v175, 5
      %v1204 = vrot.slane %v1203, 4
      %v1205 = vrot.slane %v176, 5
      %v1206 = vsel %vm1195, %v1204, %v1205
      %v1207 = vrot.slane %v1205, 4
      %v1208 = vrot.slane %v177, 5
      %v1209 = vsel %vm1195, %v1207, %v1208
      %v1210 = vrot.slane %v178, 5
      %v1211 = vrot.slane %v1210, 4
      %v1212 = vrot.slane %v179, 5
      %v1213 = vsel %vm1195, %v1211, %v1212
      %v1214 = vrot.slane %v1212, 4
      %v1215 = vrot.slane %v180, 5
      %v1216 = vsel %vm1195, %v1214, %v1215
      %v1217 = vrot.slane %v181, 5
      %v1218 = vrot.slane %v1217, 4
      %v1219 = vrot.slane %v182, 5
      %v1220 = vsel %vm1195, %v1218, %v1219
      %v1221 = vrot.slane %v1219, 4
      %v1222 = vrot.slane %v183, 5
      %v1223 = vsel %vm1195, %v1221, %v1222
      %v1224 = vrot.slane %v184, 5
      %v1225 = vrot.slane %v1224, 4
      %v1226 = vrot.slane %v185, 5
      %v1227 = vsel %vm1195, %v1225, %v1226
      %v1228 = vrot.slane %v1226, 4
      %v1229 = vrot.slane %v186, 5
      %v1230 = vsel %vm1195, %v1228, %v1229
      %v1231 = vrot.slane %v187, 5
      %v1232 = vrot.slane %v1231, 4
      %v1233 = vrot.slane %v188, 5
      %v1234 = vsel %vm1195, %v1232, %v1233
      %v1235 = vrot.slane %v1233, 4
      %v1236 = vrot.slane %v189, 5
      %v1237 = vsel %vm1195, %v1235, %v1236
      %v1238 = vrot.slane %v190, 5
      %v1239 = vrot.slane %v1238, 4
      %v1240 = vrot.slane %v191, 5
      %v1241 = vsel %vm1195, %v1239, %v1240
      %v1242 = vrot.slane %v1240, 4
      %v1243 = vrot.slane %v192, 5
      %v1244 = vsel %vm1195, %v1242, %v1243
      %v1245 = vrot.slane %v193, 5
      %v1246 = vrot.slane %v1245, 4
      %v1247 = vrot.slane %v194, 5
      %v1248 = vsel %vm1195, %v1246, %v1247
      %v1249 = vrot.slane %v1247, 4
      %v1250 = vrot.slane %v195, 5
      %v1251 = vsel %vm1195, %v1249, %v1250
      %v1252 = vrot.slane %v196, 5
      %v1253 = vrot.slane %v1252, 4
      %v1254 = vrot.slane %v197, 5
      %v1255 = vsel %vm1195, %v1253, %v1254
      %v1256 = vrot.slane %v1254, 4
      %v1257 = vrot.slane %v198, 5
      %v1258 = vsel %vm1195, %v1256, %v1257
      %v1259 = vrot.slane %v199, 5
      %v1260 = vrot.slane %v1259, 4
      %v1261 = vrot.slane %v200, 5
      %v1262 = vsel %vm1195, %v1260, %v1261
      %v1263 = vrot.slane %v1261, 4
      %v1264 = vrot.slane %v201, 5
      %v1265 = vsel %vm1195, %v1263, %v1264
      %v1266 = vrot.slane %v202, 5
      %v1267 = vrot.slane %v1266, 4
      %v1268 = vrot.slane %v203, 5
      %v1269 = vsel %vm1195, %v1267, %v1268
      %v1270 = vrot.slane %v1268, 4
      %v1271 = vrot.slane %v204, 5
      %v1272 = vsel %vm1195, %v1270, %v1271
      %v1273 = vrot.slane %v205, 5
      %v1274 = vrot.slane %v1273, 4
      %v1275 = vrot.slane %v206, 5
      %v1276 = vsel %vm1195, %v1274, %v1275
      %v1277 = vrot.slane %v1275, 4
      %v1278 = vrot.slane %v207, 5
      %v1279 = vsel %vm1195, %v1277, %v1278
      %v1280 = vrot.slane %v208, 5
      %v1281 = vrot.slane %v1280, 4
      %v1282 = vrot.slane %v209, 5
      %v1283 = vsel %vm1195, %v1281, %v1282
      %v1284 = vrot.slane %v1282, 4
      %v1285 = vrot.slane %v210, 5
      %v1286 = vsel %vm1195, %v1284, %v1285
      %v1287 = vrot.slane %v211, 5
      %v1288 = vrot.slane %v1287, 4
      %v1289 = vrot.slane %v212, 5
      %v1290 = vsel %vm1195, %v1288, %v1289
      %v1291 = vrot.slane %v1289, 4
      %v1292 = vrot.slane %v213, 5
      %v1293 = vsel %vm1195, %v1291, %v1292
      %v1294 = vrot.slane %v214, 5
      %v1295 = vrot.slane %v1294, 4
      %v1296 = vrot.slane %v215, 5
      %v1297 = vsel %vm1195, %v1295, %v1296
      %v1298 = vrot.slane %v1296, 4
      %v1299 = vrot.slane %v216, 5
      %v1300 = vsel %vm1195, %v1298, %v1299
      %v1301 = vrot.slane %v217, 5
      %v1302 = vrot.slane %v1301, 4
      %v1303 = vrot.slane %v218, 5
      %v1304 = vsel %vm1195, %v1302, %v1303
      %v1305 = vrot.slane %v1303, 4
      %v1306 = vrot.slane %v219, 5
      %v1307 = vsel %vm1195, %v1305, %v1306
      %v1308 = vunpack.c.l.b16 %v1199
      %v1309 = vunpack.c.l.b16 %v1202
      %v1310 = vunpack.c.l.b16 %v1206
      %v1311 = vunpack.c.l.b16 %v1209
      %v1312 = vunpack.c.l.b16 %v1213
      %v1313 = vunpack.c.l.b16 %v1216
      %v1314 = vunpack.c.l.b16 %v1220
      %v1315 = vunpack.c.l.b16 %v1223
      %v1316 = vunpack.c.l.b16 %v1227
      %v1317 = vunpack.c.l.b16 %v1230
      %v1318 = vunpack.c.l.b16 %v1234
      %v1319 = vunpack.c.l.b16 %v1237
      %v1320 = vunpack.c.l.b16 %v1241
      %v1321 = vunpack.c.l.b16 %v1244
      %v1322 = vunpack.c.l.b16 %v1248
      %v1323 = vunpack.c.l.b16 %v1251
      %v1324 = vunpack.c.l.b16 %v1255
      %v1325 = vunpack.c.l.b16 %v1258
      %v1326 = vunpack.c.l.b16 %v1262
      %v1327 = vunpack.c.l.b16 %v1265
      %v1328 = vunpack.c.l.b16 %v1269
      %v1329 = vunpack.c.l.b16 %v1272
      %v1330 = vunpack.c.l.b16 %v1276
      %v1331 = vunpack.c.l.b16 %v1279
      %v1332 = vunpack.c.l.b16 %v1283
      %v1333 = vunpack.c.l.b16 %v1286
      %v1334 = vunpack.c.l.b16 %v1290
      %v1335 = vunpack.c.l.b16 %v1293
      %v1336 = vunpack.c.l.b16 %v1297
      %v1337 = vunpack.c.l.b16 %v1300
      %v1338 = vunpack.c.l.b16 %v1304
      %v1339 = vunpack.c.l.b16 %v1307
      %v1340 = vpack.c.b16 %v1309, %v1308
      %v1341 = vpack.c.b16 %v1311, %v1310
      %v1342 = vpack.c.b16 %v1313, %v1312
      %v1343 = vpack.c.b16 %v1315, %v1314
      %v1344 = vpack.c.b16 %v1317, %v1316
      %v1345 = vpack.c.b16 %v1319, %v1318
      %v1346 = vpack.c.b16 %v1321, %v1320
      %v1347 = vpack.c.b16 %v1323, %v1322
      %v1348 = vpack.c.b16 %v1325, %v1324
      %v1349 = vpack.c.b16 %v1327, %v1326
      %v1350 = vpack.c.b16 %v1329, %v1328
      %v1351 = vpack.c.b16 %v1331, %v1330
      %v1352 = vpack.c.b16 %v1333, %v1332
      %v1353 = vpack.c.b16 %v1335, %v1334
      %v1354 = vpack.c.b16 %v1337, %v1336
      %v1355 = vpack.c.b16 %v1339, %v1338
      %v1357 = vsel %vm671, %v1340, 0
      %v1360 = vsel %vm671, %v1341, 0
      %v1363 = vsel %vm671, %v1342, 0
      %v1366 = vsel %vm671, %v1343, 0
      %v1369 = vsel %vm671, %v1344, 0
      %v1372 = vsel %vm671, %v1345, 0
      %v1375 = vsel %vm671, %v1346, 0
      %v1378 = vsel %vm671, %v1347, 0
      %v1381 = vsel %vm671, %v1348, 0
      %v1384 = vsel %vm671, %v1349, 0
      %v1387 = vsel %vm671, %v1350, 0
      %v1390 = vsel %vm671, %v1351, 0
      %v1393 = vsel %vm671, %v1352, 0
      %v1396 = vsel %vm671, %v1353, 0
      %v1399 = vsel %vm671, %v1354, 0
      %v1402 = vsel %vm671, %v1355, 0
      %v1405 = vsel %vm720, %v228, 0
      %1407 = vmatprep.subr.bf16.mxu0 0
      %1408 = vmatpush1.bf16.msra.mxu0 %v1405
      %1409 = vmatprep.subr.bf16.mxu0 0
      %1410 = vmatpush1.bf16.msra.mxu0 0
      %1411 = vmatprep.subr.bf16.mxu0 0
      %1412 = vmatpush1.bf16.msra.mxu0 0
      %1413 = vmatprep.subr.bf16.mxu0 0
      %1414 = vmatpush1.bf16.msra.mxu0 0
      %1415 = vmatprep.subr.bf16.mxu0 0
      %1416 = vmatpush1.bf16.msra.mxu0 0
      %1417 = vmatprep.subr.bf16.mxu0 0
      %1418 = vmatpush1.bf16.msra.mxu0 0
      %1419 = vmatprep.subr.bf16.mxu0 0
      %1420 = vmatpush1.bf16.msra.mxu0 0
      %1421 = vmatprep.subr.bf16.mxu0 0
      %1422 = vmatpush1.bf16.msra.mxu0 0
      %1423 = vmatprep.subr.bf16.mxu0 0
      %1424 = vmatpush1.bf16.msra.mxu0 0
      %1425 = vmatprep.subr.bf16.mxu0 0
      %1426 = vmatpush1.bf16.msra.mxu0 0
      %1427 = vmatprep.subr.bf16.mxu0 0
      %1428 = vmatpush1.bf16.msra.mxu0 0
      %1429 = vmatprep.subr.bf16.mxu0 0
      %1430 = vmatpush1.bf16.msra.mxu0 0
      %1431 = vmatprep.subr.bf16.mxu0 0
      %1432 = vmatpush1.bf16.msra.mxu0 0
      %1433 = vmatprep.subr.bf16.mxu0 0
      %1434 = vmatpush1.bf16.msra.mxu0 0
      %1435 = vmatprep.subr.bf16.mxu0 0
      %1436 = vmatpush1.bf16.msra.mxu0 0
      %1437 = vmatprep.subr.bf16.mxu0 0
      %1438 = vmatpush1.bf16.msra.mxu0 0
      %1439 = vmatprep.mubr.bf16.mxu0 0
      %1440 = vmatmul.mubr.bf16.gmra.mrb[0].mxu0 %v1357
      %v1441 = vpop.f32.mrb[0].mxu0
      %v1442 = vadd.f32 0.0, %v1441
      %v1443 = vpop.f32.mrb[0].mxu0
      %v1444 = vpop.f32.mrb[0].mxu0
      %v1445 = vadd.f32 0.0, %v1444
      %v1446 = vpop.f32.mrb[0].mxu0
      %1447 = vmatprep.mubr.bf16.mxu0 0
      %1448 = vmatmul.mubr.bf16.gmra.mrb[0].mxu0 %v1360
      %v1449 = vpop.f32.mrb[0].mxu0
      %v1450 = vadd.f32 0.0, %v1449
      %v1451 = vpop.f32.mrb[0].mxu0
      %v1452 = vpop.f32.mrb[0].mxu0
      %v1453 = vadd.f32 0.0, %v1452
      %v1454 = vpop.f32.mrb[0].mxu0
      %1455 = vmatprep.mubr.bf16.mxu0 0
      %1456 = vmatmul.mubr.bf16.gmra.mrb[0].mxu0 %v1363
      %v1457 = vpop.f32.mrb[0].mxu0
      %v1458 = vadd.f32 0.0, %v1457
      %v1459 = vpop.f32.mrb[0].mxu0
      %v1460 = vpop.f32.mrb[0].mxu0
      %v1461 = vadd.f32 0.0, %v1460
      %v1462 = vpop.f32.mrb[0].mxu0
      %1463 = vmatprep.mubr.bf16.mxu0 0
      %1464 = vmatmul.mubr.bf16.gmra.mrb[0].mxu0 %v1366
      %v1465 = vpop.f32.mrb[0].mxu0
      %v1466 = vadd.f32 0.0, %v1465
      %v1467 = vpop.f32.mrb[0].mxu0
      %v1468 = vpop.f32.mrb[0].mxu0
      %v1469 = vadd.f32 0.0, %v1468
      %v1470 = vpop.f32.mrb[0].mxu0
      %1471 = vmatprep.mubr.bf16.mxu0 0
      %1472 = vmatmul.mubr.bf16.gmra.mrb[0].mxu0 %v1369
      %v1473 = vpop.f32.mrb[0].mxu0
      %v1474 = vadd.f32 0.0, %v1473
      %v1475 = vpop.f32.mrb[0].mxu0
      %v1476 = vpop.f32.mrb[0].mxu0
      %v1477 = vadd.f32 0.0, %v1476
      %v1478 = vpop.f32.mrb[0].mxu0
      %1479 = vmatprep.mubr.bf16.mxu0 0
      %1480 = vmatmul.mubr.bf16.gmra.mrb[0].mxu0 %v1372
      %v1481 = vpop.f32.mrb[0].mxu0
      %v1482 = vadd.f32 0.0, %v1481
      %v1483 = vpop.f32.mrb[0].mxu0
      %v1484 = vpop.f32.mrb[0].mxu0
      %v1485 = vadd.f32 0.0, %v1484
      %v1486 = vpop.f32.mrb[0].mxu0
      %1487 = vmatprep.mubr.bf16.mxu0 0
      %1488 = vmatmul.mubr.bf16.gmra.mrb[0].mxu0 %v1375
      %v1489 = vpop.f32.mrb[0].mxu0
      %v1490 = vadd.f32 0.0, %v1489
      %v1491 = vpop.f32.mrb[0].mxu0
      %v1492 = vpop.f32.mrb[0].mxu0
      %v1493 = vadd.f32 0.0, %v1492
      %v1494 = vpop.f32.mrb[0].mxu0
      %1495 = vmatprep.mubr.bf16.mxu0 0
      %1496 = vmatmul.mubr.bf16.gmra.mrb[0].mxu0 %v1378
      %v1497 = vpop.f32.mrb[0].mxu0
      %v1498 = vadd.f32 0.0, %v1497
      %v1499 = vpop.f32.mrb[0].mxu0
      %v1500 = vpop.f32.mrb[0].mxu0
      %v1501 = vadd.f32 0.0, %v1500
      %v1502 = vpop.f32.mrb[0].mxu0
      %1503 = vmatprep.mubr.bf16.mxu0 0
      %1504 = vmatmul.mubr.bf16.gmra.mrb[0].mxu0 %v1381
      %v1505 = vpop.f32.mrb[0].mxu0
      %v1506 = vadd.f32 0.0, %v1505
      %v1507 = vpop.f32.mrb[0].mxu0
      %v1508 = vpop.f32.mrb[0].mxu0
      %v1509 = vadd.f32 0.0, %v1508
      %v1510 = vpop.f32.mrb[0].mxu0
      %1511 = vmatprep.mubr.bf16.mxu0 0
      %1512 = vmatmul.mubr.bf16.gmra.mrb[0].mxu0 %v1384
      %v1513 = vpop.f32.mrb[0].mxu0
      %v1514 = vadd.f32 0.0, %v1513
      %v1515 = vpop.f32.mrb[0].mxu0
      %v1516 = vpop.f32.mrb[0].mxu0
      %v1517 = vadd.f32 0.0, %v1516
      %v1518 = vpop.f32.mrb[0].mxu0
      %1519 = vmatprep.mubr.bf16.mxu0 0
      %1520 = vmatmul.mubr.bf16.gmra.mrb[0].mxu0 %v1387
      %v1521 = vpop.f32.mrb[0].mxu0
      %v1522 = vadd.f32 0.0, %v1521
      %v1523 = vpop.f32.mrb[0].mxu0
      %v1524 = vpop.f32.mrb[0].mxu0
      %v1525 = vadd.f32 0.0, %v1524
      %v1526 = vpop.f32.mrb[0].mxu0
      %1527 = vmatprep.mubr.bf16.mxu0 0
      %1528 = vmatmul.mubr.bf16.gmra.mrb[0].mxu0 %v1390
      %v1529 = vpop.f32.mrb[0].mxu0
      %v1530 = vadd.f32 0.0, %v1529
      %v1531 = vpop.f32.mrb[0].mxu0
      %v1532 = vpop.f32.mrb[0].mxu0
      %v1533 = vadd.f32 0.0, %v1532
      %v1534 = vpop.f32.mrb[0].mxu0
      %1535 = vmatprep.mubr.bf16.mxu0 0
      %1536 = vmatmul.mubr.bf16.gmra.mrb[0].mxu0 %v1393
      %v1537 = vpop.f32.mrb[0].mxu0
      %v1538 = vadd.f32 0.0, %v1537
      %v1539 = vpop.f32.mrb[0].mxu0
      %v1540 = vpop.f32.mrb[0].mxu0
      %v1541 = vadd.f32 0.0, %v1540
      %v1542 = vpop.f32.mrb[0].mxu0
      %1543 = vmatprep.mubr.bf16.mxu0 0
      %1544 = vmatmul.mubr.bf16.gmra.mrb[0].mxu0 %v1396
      %v1545 = vpop.f32.mrb[0].mxu0
      %v1546 = vadd.f32 0.0, %v1545
      %v1547 = vpop.f32.mrb[0].mxu0
      %v1548 = vpop.f32.mrb[0].mxu0
      %v1549 = vadd.f32 0.0, %v1548
      %v1550 = vpop.f32.mrb[0].mxu0
      %1551 = vmatprep.mubr.bf16.mxu0 0
      %1552 = vmatmul.mubr.bf16.gmra.mrb[0].mxu0 %v1399
      %v1553 = vpop.f32.mrb[0].mxu0
      %v1554 = vadd.f32 0.0, %v1553
      %v1555 = vpop.f32.mrb[0].mxu0
      %v1556 = vpop.f32.mrb[0].mxu0
      %v1557 = vadd.f32 0.0, %v1556
      %v1558 = vpop.f32.mrb[0].mxu0
      %1559 = vmatprep.mubr.bf16.mxu0 0
      %1560 = vmatmul.mubr.bf16.gmra.mrb[0].mxu0 %v1402
      %v1561 = vpop.f32.mrb[0].mxu0
      %v1562 = vadd.f32 0.0, %v1561
      %v1563 = vpop.f32.mrb[0].mxu0
      %v1564 = vpop.f32.mrb[0].mxu0
      %v1565 = vadd.f32 0.0, %v1564
      %v1566 = vpop.f32.mrb[0].mxu0
      %1567 = vdwg.mxu0
      %v1568 = vadd.f32 %v1051, %v1442
      %v1569 = vadd.f32 %v1054, %v1445
      %v1570 = vadd.f32 %v1059, %v1450
      %v1571 = vadd.f32 %v1062, %v1453
      %v1572 = vadd.f32 %v1067, %v1458
      %v1573 = vadd.f32 %v1070, %v1461
      %v1574 = vadd.f32 %v1075, %v1466
      %v1575 = vadd.f32 %v1078, %v1469
      %v1576 = vadd.f32 %v1083, %v1474
      %v1577 = vadd.f32 %v1086, %v1477
      %v1578 = vadd.f32 %v1091, %v1482
      %v1579 = vadd.f32 %v1094, %v1485
      %v1580 = vadd.f32 %v1099, %v1490
      %v1581 = vadd.f32 %v1102, %v1493
      %v1582 = vadd.f32 %v1107, %v1498
      %v1583 = vadd.f32 %v1110, %v1501
      %v1584 = vadd.f32 %v1115, %v1506
      %v1585 = vadd.f32 %v1118, %v1509
      %v1586 = vadd.f32 %v1123, %v1514
      %v1587 = vadd.f32 %v1126, %v1517
      %v1588 = vadd.f32 %v1131, %v1522
      %v1589 = vadd.f32 %v1134, %v1525
      %v1590 = vadd.f32 %v1139, %v1530
      %v1591 = vadd.f32 %v1142, %v1533
      %v1592 = vadd.f32 %v1147, %v1538
      %v1593 = vadd.f32 %v1150, %v1541
      %v1594 = vadd.f32 %v1155, %v1546
      %v1595 = vadd.f32 %v1158, %v1549
      %v1596 = vadd.f32 %v1163, %v1554
      %v1597 = vadd.f32 %v1166, %v1557
      %v1598 = vadd.f32 %v1171, %v1562
      %v1599 = vadd.f32 %v1174, %v1565
      %v1602 = vunpack.c.l.b16 %v220
      %v1603 = vunpack.c.l.b16 %v221
      %v1604 = vpack.c.b16 %v1603, %v1602
      %v1606 = vsel %vm671, %v1604, 0
      %v1609 = vsel %vm720, %v229, 0
      %1611 = vmatprep.subr.bf16.mxu0 0
      %1612 = vmatpush1.bf16.msra.mxu0 %v1609
      %1613 = vmatprep.subr.bf16.mxu0 0
      %1614 = vmatpush1.bf16.msra.mxu0 0
      %1615 = vmatprep.subr.bf16.mxu0 0
      %1616 = vmatpush1.bf16.msra.mxu0 0
      %1617 = vmatprep.subr.bf16.mxu0 0
      %1618 = vmatpush1.bf16.msra.mxu0 0
      %1619 = vmatprep.subr.bf16.mxu0 0
      %1620 = vmatpush1.bf16.msra.mxu0 0
      %1621 = vmatprep.subr.bf16.mxu0 0
      %1622 = vmatpush1.bf16.msra.mxu0 0
      %1623 = vmatprep.subr.bf16.mxu0 0
      %1624 = vmatpush1.bf16.msra.mxu0 0
      %1625 = vmatprep.subr.bf16.mxu0 0
      %1626 = vmatpush1.bf16.msra.mxu0 0
      %1627 = vmatprep.subr.bf16.mxu0 0
      %1628 = vmatpush1.bf16.msra.mxu0 0
      %1629 = vmatprep.subr.bf16.mxu0 0
      %1630 = vmatpush1.bf16.msra.mxu0 0
      %1631 = vmatprep.subr.bf16.mxu0 0
      %1632 = vmatpush1.bf16.msra.mxu0 0
      %1633 = vmatprep.subr.bf16.mxu0 0
      %1634 = vmatpush1.bf16.msra.mxu0 0
      %1635 = vmatprep.subr.bf16.mxu0 0
      %1636 = vmatpush1.bf16.msra.mxu0 0
      %1637 = vmatprep.subr.bf16.mxu0 0
      %1638 = vmatpush1.bf16.msra.mxu0 0
      %1639 = vmatprep.subr.bf16.mxu0 0
      %1640 = vmatpush1.bf16.msra.mxu0 0
      %1641 = vmatprep.subr.bf16.mxu0 0
      %1642 = vmatpush1.bf16.msra.mxu0 0
      %1643 = vmatprep.mubr.bf16.mxu0 0
      %1644 = vmatmul.mubr.bf16.gmra.mrb[0].mxu0 %v969
      %v1645 = vpop.f32.mrb[0].mxu0
      %v1646 = vadd.f32 0.0, %v1645
      %v1647 = vpop.f32.mrb[0].mxu0
      %v1648 = vpop.f32.mrb[0].mxu0
      %v1649 = vadd.f32 0.0, %v1648
      %v1650 = vpop.f32.mrb[0].mxu0
      %1651 = vmatprep.mubr.bf16.mxu0 0
      %1652 = vmatmul.mubr.bf16.gmra.mrb[0].mxu0 %v972
      %v1653 = vpop.f32.mrb[0].mxu0
      %v1654 = vadd.f32 0.0, %v1653
      %v1655 = vpop.f32.mrb[0].mxu0
      %v1656 = vpop.f32.mrb[0].mxu0
      %v1657 = vadd.f32 0.0, %v1656
      %v1658 = vpop.f32.mrb[0].mxu0
      %1659 = vmatprep.mubr.bf16.mxu0 0
      %1660 = vmatmul.mubr.bf16.gmra.mrb[0].mxu0 %v975
      %v1661 = vpop.f32.mrb[0].mxu0
      %v1662 = vadd.f32 0.0, %v1661
      %v1663 = vpop.f32.mrb[0].mxu0
      %v1664 = vpop.f32.mrb[0].mxu0
      %v1665 = vadd.f32 0.0, %v1664
      %v1666 = vpop.f32.mrb[0].mxu0
      %1667 = vmatprep.mubr.bf16.mxu0 0
      %1668 = vmatmul.mubr.bf16.gmra.mrb[0].mxu0 %v978
      %v1669 = vpop.f32.mrb[0].mxu0
      %v1670 = vadd.f32 0.0, %v1669
      %v1671 = vpop.f32.mrb[0].mxu0
      %v1672 = vpop.f32.mrb[0].mxu0
      %v1673 = vadd.f32 0.0, %v1672
      %v1674 = vpop.f32.mrb[0].mxu0
      %1675 = vmatprep.mubr.bf16.mxu0 0
      %1676 = vmatmul.mubr.bf16.gmra.mrb[0].mxu0 %v981
      %v1677 = vpop.f32.mrb[0].mxu0
      %v1678 = vadd.f32 0.0, %v1677
      %v1679 = vpop.f32.mrb[0].mxu0
      %v1680 = vpop.f32.mrb[0].mxu0
      %v1681 = vadd.f32 0.0, %v1680
      %v1682 = vpop.f32.mrb[0].mxu0
      %1683 = vmatprep.mubr.bf16.mxu0 0
      %1684 = vmatmul.mubr.bf16.gmra.mrb[0].mxu0 %v984
      %v1685 = vpop.f32.mrb[0].mxu0
      %v1686 = vadd.f32 0.0, %v1685
      %v1687 = vpop.f32.mrb[0].mxu0
      %v1688 = vpop.f32.mrb[0].mxu0
      %v1689 = vadd.f32 0.0, %v1688
      %v1690 = vpop.f32.mrb[0].mxu0
      %1691 = vmatprep.mubr.bf16.mxu0 0
      %1692 = vmatmul.mubr.bf16.gmra.mrb[0].mxu0 %v987
      %v1693 = vpop.f32.mrb[0].mxu0
      %v1694 = vadd.f32 0.0, %v1693
      %v1695 = vpop.f32.mrb[0].mxu0
      %v1696 = vpop.f32.mrb[0].mxu0
      %v1697 = vadd.f32 0.0, %v1696
      %v1698 = vpop.f32.mrb[0].mxu0
      %1699 = vmatprep.mubr.bf16.mxu0 0
      %1700 = vmatmul.mubr.bf16.gmra.mrb[0].mxu0 %v990
      %v1701 = vpop.f32.mrb[0].mxu0
      %v1702 = vadd.f32 0.0, %v1701
      %v1703 = vpop.f32.mrb[0].mxu0
      %v1704 = vpop.f32.mrb[0].mxu0
      %v1705 = vadd.f32 0.0, %v1704
      %v1706 = vpop.f32.mrb[0].mxu0
      %1707 = vmatprep.mubr.bf16.mxu0 0
      %1708 = vmatmul.mubr.bf16.gmra.mrb[0].mxu0 %v993
      %v1709 = vpop.f32.mrb[0].mxu0
      %v1710 = vadd.f32 0.0, %v1709
      %v1711 = vpop.f32.mrb[0].mxu0
      %v1712 = vpop.f32.mrb[0].mxu0
      %v1713 = vadd.f32 0.0, %v1712
      %v1714 = vpop.f32.mrb[0].mxu0
      %1715 = vmatprep.mubr.bf16.mxu0 0
      %1716 = vmatmul.mubr.bf16.gmra.mrb[0].mxu0 %v996
      %v1717 = vpop.f32.mrb[0].mxu0
      %v1718 = vadd.f32 0.0, %v1717
      %v1719 = vpop.f32.mrb[0].mxu0
      %v1720 = vpop.f32.mrb[0].mxu0
      %v1721 = vadd.f32 0.0, %v1720
      %v1722 = vpop.f32.mrb[0].mxu0
      %1723 = vmatprep.mubr.bf16.mxu0 0
      %1724 = vmatmul.mubr.bf16.gmra.mrb[0].mxu0 %v999
      %v1725 = vpop.f32.mrb[0].mxu0
      %v1726 = vadd.f32 0.0, %v1725
      %v1727 = vpop.f32.mrb[0].mxu0
      %v1728 = vpop.f32.mrb[0].mxu0
      %v1729 = vadd.f32 0.0, %v1728
      %v1730 = vpop.f32.mrb[0].mxu0
      %1731 = vmatprep.mubr.bf16.mxu0 0
      %1732 = vmatmul.mubr.bf16.gmra.mrb[0].mxu0 %v1002
      %v1733 = vpop.f32.mrb[0].mxu0
      %v1734 = vadd.f32 0.0, %v1733
      %v1735 = vpop.f32.mrb[0].mxu0
      %v1736 = vpop.f32.mrb[0].mxu0
      %v1737 = vadd.f32 0.0, %v1736
      %v1738 = vpop.f32.mrb[0].mxu0
      %1739 = vmatprep.mubr.bf16.mxu0 0
      %1740 = vmatmul.mubr.bf16.gmra.mrb[0].mxu0 %v1005
      %v1741 = vpop.f32.mrb[0].mxu0
      %v1742 = vadd.f32 0.0, %v1741
      %v1743 = vpop.f32.mrb[0].mxu0
      %v1744 = vpop.f32.mrb[0].mxu0
      %v1745 = vadd.f32 0.0, %v1744
      %v1746 = vpop.f32.mrb[0].mxu0
      %1747 = vmatprep.mubr.bf16.mxu0 0
      %1748 = vmatmul.mubr.bf16.gmra.mrb[0].mxu0 %v1008
      %v1749 = vpop.f32.mrb[0].mxu0
      %v1750 = vadd.f32 0.0, %v1749
      %v1751 = vpop.f32.mrb[0].mxu0
      %v1752 = vpop.f32.mrb[0].mxu0
      %v1753 = vadd.f32 0.0, %v1752
      %v1754 = vpop.f32.mrb[0].mxu0
      %1755 = vmatprep.mubr.bf16.mxu0 0
      %1756 = vmatmul.mubr.bf16.gmra.mrb[0].mxu0 %v1011
      %v1757 = vpop.f32.mrb[0].mxu0
      %v1758 = vadd.f32 0.0, %v1757
      %v1759 = vpop.f32.mrb[0].mxu0
      %v1760 = vpop.f32.mrb[0].mxu0
      %v1761 = vadd.f32 0.0, %v1760
      %v1762 = vpop.f32.mrb[0].mxu0
      %1763 = vmatprep.mubr.bf16.mxu0 0
      %1764 = vmatmul.mubr.bf16.gmra.mrb[0].mxu0 %v1606
      %v1765 = vpop.f32.mrb[0].mxu0
      %v1766 = vadd.f32 0.0, %v1765
      %v1767 = vpop.f32.mrb[0].mxu0
      %v1768 = vpop.f32.mrb[0].mxu0
      %v1769 = vadd.f32 0.0, %v1768
      %v1770 = vpop.f32.mrb[0].mxu0
      %1771 = vdwg.mxu0
      %v1772 = vadd.f32 %v1568, %v1646
      %v1773 = vadd.f32 %v1569, %v1649
      %v1774 = vadd.f32 %v1570, %v1654
      %v1775 = vadd.f32 %v1571, %v1657
      %v1776 = vadd.f32 %v1572, %v1662
      %v1777 = vadd.f32 %v1573, %v1665
      %v1778 = vadd.f32 %v1574, %v1670
      %v1779 = vadd.f32 %v1575, %v1673
      %v1780 = vadd.f32 %v1576, %v1678
      %v1781 = vadd.f32 %v1577, %v1681
      %v1782 = vadd.f32 %v1578, %v1686
      %v1783 = vadd.f32 %v1579, %v1689
      %v1784 = vadd.f32 %v1580, %v1694
      %v1785 = vadd.f32 %v1581, %v1697
      %v1786 = vadd.f32 %v1582, %v1702
      %v1787 = vadd.f32 %v1583, %v1705
      %v1788 = vadd.f32 %v1584, %v1710
      %v1789 = vadd.f32 %v1585, %v1713
      %v1790 = vadd.f32 %v1586, %v1718
      %v1791 = vadd.f32 %v1587, %v1721
      %v1792 = vadd.f32 %v1588, %v1726
      %v1793 = vadd.f32 %v1589, %v1729
      %v1794 = vadd.f32 %v1590, %v1734
      %v1795 = vadd.f32 %v1591, %v1737
      %v1796 = vadd.f32 %v1592, %v1742
      %v1797 = vadd.f32 %v1593, %v1745
      %v1798 = vadd.f32 %v1594, %v1750
      %v1799 = vadd.f32 %v1595, %v1753
      %v1800 = vadd.f32 %v1596, %v1758
      %v1801 = vadd.f32 %v1597, %v1761
      %v1802 = vadd.f32 %v1598, %v1766
      %v1803 = vadd.f32 %v1599, %v1769
      %v1805 = vshrl.u32 %v220, 16
      %v1807 = vrot.slane %v1805, 4
      %v1808 = vshll.u32 %v220, 16
      %v1810 = vrot.slane %v1808, 5
      %v1811 = vor.u32 %v1807, %v1810
      %v1812 = vrot.slane %v1811, 4
      %v1814 = vshll.u32 %v221, 16
      %v1816 = vrot.slane %v1814, 5
      %v1817 = vsel %vm238, %v1812, %v1816
      %v1818 = vshrl.u32 %v221, 16
      %v1820 = vrot.slane %v1818, 4
      %v1821 = vor.u32 %v1820, %v1816
      %v1822 = vrot.slane %v1821, 4
      %v1824 = vshll.u32 %v222, 16
      %v1826 = vrot.slane %v1824, 5
      %v1827 = vsel %vm238, %v1822, %v1826
      %v1828 = vunpack.c.l.b16 %v1817
      %v1829 = vunpack.c.l.b16 %v1827
      %v1830 = vpack.c.b16 %v1829, %v1828
      %v1832 = vsel %vm671, %v1830, 0
      %v1835 = vsel %vm720, %v230, 0
      %1837 = vmatprep.subr.bf16.mxu0 0
      %1838 = vmatpush1.bf16.msra.mxu0 %v1835
      %1839 = vmatprep.subr.bf16.mxu0 0
      %1840 = vmatpush1.bf16.msra.mxu0 0
      %1841 = vmatprep.subr.bf16.mxu0 0
      %1842 = vmatpush1.bf16.msra.mxu0 0
      %1843 = vmatprep.subr.bf16.mxu0 0
      %1844 = vmatpush1.bf16.msra.mxu0 0
      %1845 = vmatprep.subr.bf16.mxu0 0
      %1846 = vmatpush1.bf16.msra.mxu0 0
      %1847 = vmatprep.subr.bf16.mxu0 0
      %1848 = vmatpush1.bf16.msra.mxu0 0
      %1849 = vmatprep.subr.bf16.mxu0 0
      %1850 = vmatpush1.bf16.msra.mxu0 0
      %1851 = vmatprep.subr.bf16.mxu0 0
      %1852 = vmatpush1.bf16.msra.mxu0 0
      %1853 = vmatprep.subr.bf16.mxu0 0
      %1854 = vmatpush1.bf16.msra.mxu0 0
      %1855 = vmatprep.subr.bf16.mxu0 0
      %1856 = vmatpush1.bf16.msra.mxu0 0
      %1857 = vmatprep.subr.bf16.mxu0 0
      %1858 = vmatpush1.bf16.msra.mxu0 0
      %1859 = vmatprep.subr.bf16.mxu0 0
      %1860 = vmatpush1.bf16.msra.mxu0 0
      %1861 = vmatprep.subr.bf16.mxu0 0
      %1862 = vmatpush1.bf16.msra.mxu0 0
      %1863 = vmatprep.subr.bf16.mxu0 0
      %1864 = vmatpush1.bf16.msra.mxu0 0
      %1865 = vmatprep.subr.bf16.mxu0 0
      %1866 = vmatpush1.bf16.msra.mxu0 0
      %1867 = vmatprep.subr.bf16.mxu0 0
      %1868 = vmatpush1.bf16.msra.mxu0 0
      %1869 = vmatprep.mubr.bf16.mxu0 0
      %1870 = vmatmul.mubr.bf16.gmra.mrb[0].mxu0 %v676
      %v1871 = vpop.f32.mrb[0].mxu0
      %v1872 = vadd.f32 0.0, %v1871
      %v1873 = vpop.f32.mrb[0].mxu0
      %v1874 = vpop.f32.mrb[0].mxu0
      %v1875 = vadd.f32 0.0, %v1874
      %v1876 = vpop.f32.mrb[0].mxu0
      %1877 = vmatprep.mubr.bf16.mxu0 0
      %1878 = vmatmul.mubr.bf16.gmra.mrb[0].mxu0 %v679
      %v1879 = vpop.f32.mrb[0].mxu0
      %v1880 = vadd.f32 0.0, %v1879
      %v1881 = vpop.f32.mrb[0].mxu0
      %v1882 = vpop.f32.mrb[0].mxu0
      %v1883 = vadd.f32 0.0, %v1882
      %v1884 = vpop.f32.mrb[0].mxu0
      %1885 = vmatprep.mubr.bf16.mxu0 0
      %1886 = vmatmul.mubr.bf16.gmra.mrb[0].mxu0 %v682
      %v1887 = vpop.f32.mrb[0].mxu0
      %v1888 = vadd.f32 0.0, %v1887
      %v1889 = vpop.f32.mrb[0].mxu0
      %v1890 = vpop.f32.mrb[0].mxu0
      %v1891 = vadd.f32 0.0, %v1890
      %v1892 = vpop.f32.mrb[0].mxu0
      %1893 = vmatprep.mubr.bf16.mxu0 0
      %1894 = vmatmul.mubr.bf16.gmra.mrb[0].mxu0 %v685
      %v1895 = vpop.f32.mrb[0].mxu0
      %v1896 = vadd.f32 0.0, %v1895
      %v1897 = vpop.f32.mrb[0].mxu0
      %v1898 = vpop.f32.mrb[0].mxu0
      %v1899 = vadd.f32 0.0, %v1898
      %v1900 = vpop.f32.mrb[0].mxu0
      %1901 = vmatprep.mubr.bf16.mxu0 0
      %1902 = vmatmul.mubr.bf16.gmra.mrb[0].mxu0 %v688
      %v1903 = vpop.f32.mrb[0].mxu0
      %v1904 = vadd.f32 0.0, %v1903
      %v1905 = vpop.f32.mrb[0].mxu0
      %v1906 = vpop.f32.mrb[0].mxu0
      %v1907 = vadd.f32 0.0, %v1906
      %v1908 = vpop.f32.mrb[0].mxu0
      %1909 = vmatprep.mubr.bf16.mxu0 0
      %1910 = vmatmul.mubr.bf16.gmra.mrb[0].mxu0 %v691
      %v1911 = vpop.f32.mrb[0].mxu0
      %v1912 = vadd.f32 0.0, %v1911
      %v1913 = vpop.f32.mrb[0].mxu0
      %v1914 = vpop.f32.mrb[0].mxu0
      %v1915 = vadd.f32 0.0, %v1914
      %v1916 = vpop.f32.mrb[0].mxu0
      %1917 = vmatprep.mubr.bf16.mxu0 0
      %1918 = vmatmul.mubr.bf16.gmra.mrb[0].mxu0 %v694
      %v1919 = vpop.f32.mrb[0].mxu0
      %v1920 = vadd.f32 0.0, %v1919
      %v1921 = vpop.f32.mrb[0].mxu0
      %v1922 = vpop.f32.mrb[0].mxu0
      %v1923 = vadd.f32 0.0, %v1922
      %v1924 = vpop.f32.mrb[0].mxu0
      %1925 = vmatprep.mubr.bf16.mxu0 0
      %1926 = vmatmul.mubr.bf16.gmra.mrb[0].mxu0 %v697
      %v1927 = vpop.f32.mrb[0].mxu0
      %v1928 = vadd.f32 0.0, %v1927
      %v1929 = vpop.f32.mrb[0].mxu0
      %v1930 = vpop.f32.mrb[0].mxu0
      %v1931 = vadd.f32 0.0, %v1930
      %v1932 = vpop.f32.mrb[0].mxu0
      %1933 = vmatprep.mubr.bf16.mxu0 0
      %1934 = vmatmul.mubr.bf16.gmra.mrb[0].mxu0 %v700
      %v1935 = vpop.f32.mrb[0].mxu0
      %v1936 = vadd.f32 0.0, %v1935
      %v1937 = vpop.f32.mrb[0].mxu0
      %v1938 = vpop.f32.mrb[0].mxu0
      %v1939 = vadd.f32 0.0, %v1938
      %v1940 = vpop.f32.mrb[0].mxu0
      %1941 = vmatprep.mubr.bf16.mxu0 0
      %1942 = vmatmul.mubr.bf16.gmra.mrb[0].mxu0 %v703
      %v1943 = vpop.f32.mrb[0].mxu0
      %v1944 = vadd.f32 0.0, %v1943
      %v1945 = vpop.f32.mrb[0].mxu0
      %v1946 = vpop.f32.mrb[0].mxu0
      %v1947 = vadd.f32 0.0, %v1946
      %v1948 = vpop.f32.mrb[0].mxu0
      %1949 = vmatprep.mubr.bf16.mxu0 0
      %1950 = vmatmul.mubr.bf16.gmra.mrb[0].mxu0 %v706
      %v1951 = vpop.f32.mrb[0].mxu0
      %v1952 = vadd.f32 0.0, %v1951
      %v1953 = vpop.f32.mrb[0].mxu0
      %v1954 = vpop.f32.mrb[0].mxu0
      %v1955 = vadd.f32 0.0, %v1954
      %v1956 = vpop.f32.mrb[0].mxu0
      %1957 = vmatprep.mubr.bf16.mxu0 0
      %1958 = vmatmul.mubr.bf16.gmra.mrb[0].mxu0 %v709
      %v1959 = vpop.f32.mrb[0].mxu0
      %v1960 = vadd.f32 0.0, %v1959
      %v1961 = vpop.f32.mrb[0].mxu0
      %v1962 = vpop.f32.mrb[0].mxu0
      %v1963 = vadd.f32 0.0, %v1962
      %v1964 = vpop.f32.mrb[0].mxu0
      %1965 = vmatprep.mubr.bf16.mxu0 0
      %1966 = vmatmul.mubr.bf16.gmra.mrb[0].mxu0 %v712
      %v1967 = vpop.f32.mrb[0].mxu0
      %v1968 = vadd.f32 0.0, %v1967
      %v1969 = vpop.f32.mrb[0].mxu0
      %v1970 = vpop.f32.mrb[0].mxu0
      %v1971 = vadd.f32 0.0, %v1970
      %v1972 = vpop.f32.mrb[0].mxu0
      %1973 = vmatprep.mubr.bf16.mxu0 0
      %1974 = vmatmul.mubr.bf16.gmra.mrb[0].mxu0 %v715
      %v1975 = vpop.f32.mrb[0].mxu0
      %v1976 = vadd.f32 0.0, %v1975
      %v1977 = vpop.f32.mrb[0].mxu0
      %v1978 = vpop.f32.mrb[0].mxu0
      %v1979 = vadd.f32 0.0, %v1978
      %v1980 = vpop.f32.mrb[0].mxu0
      %1981 = vmatprep.mubr.bf16.mxu0 0
      %1982 = vmatmul.mubr.bf16.gmra.mrb[0].mxu0 %v718
      %v1983 = vpop.f32.mrb[0].mxu0
      %v1984 = vadd.f32 0.0, %v1983
      %v1985 = vpop.f32.mrb[0].mxu0
      %v1986 = vpop.f32.mrb[0].mxu0
      %v1987 = vadd.f32 0.0, %v1986
      %v1988 = vpop.f32.mrb[0].mxu0
      %1989 = vmatprep.mubr.bf16.mxu0 0
      %1990 = vmatmul.mubr.bf16.gmra.mrb[0].mxu0 %v1832
      %v1991 = vpop.f32.mrb[0].mxu0
      %v1992 = vadd.f32 0.0, %v1991
      %v1993 = vpop.f32.mrb[0].mxu0
      %v1994 = vpop.f32.mrb[0].mxu0
      %v1995 = vadd.f32 0.0, %v1994
      %v1996 = vpop.f32.mrb[0].mxu0
      %1997 = vdwg.mxu0
      %v1998 = vadd.f32 %v1772, %v1872
      %v1999 = vadd.f32 %v1773, %v1875
      %v2000 = vadd.f32 %v1774, %v1880
      %v2001 = vadd.f32 %v1775, %v1883
      %v2002 = vadd.f32 %v1776, %v1888
      %v2003 = vadd.f32 %v1777, %v1891
      %v2004 = vadd.f32 %v1778, %v1896
      %v2005 = vadd.f32 %v1779, %v1899
      %v2006 = vadd.f32 %v1780, %v1904
      %v2007 = vadd.f32 %v1781, %v1907
      %v2008 = vadd.f32 %v1782, %v1912
      %v2009 = vadd.f32 %v1783, %v1915
      %v2010 = vadd.f32 %v1784, %v1920
      %v2011 = vadd.f32 %v1785, %v1923
      %v2012 = vadd.f32 %v1786, %v1928
      %v2013 = vadd.f32 %v1787, %v1931
      %v2014 = vadd.f32 %v1788, %v1936
      %v2015 = vadd.f32 %v1789, %v1939
      %v2016 = vadd.f32 %v1790, %v1944
      %v2017 = vadd.f32 %v1791, %v1947
      %v2018 = vadd.f32 %v1792, %v1952
      %v2019 = vadd.f32 %v1793, %v1955
      %v2020 = vadd.f32 %v1794, %v1960
      %v2021 = vadd.f32 %v1795, %v1963
      %v2022 = vadd.f32 %v1796, %v1968
      %v2023 = vadd.f32 %v1797, %v1971
      %v2024 = vadd.f32 %v1798, %v1976
      %v2025 = vadd.f32 %v1799, %v1979
      %v2026 = vadd.f32 %v1800, %v1984
      %v2027 = vadd.f32 %v1801, %v1987
      %v2028 = vadd.f32 %v1802, %v1992
      %v2029 = vadd.f32 %v1803, %v1995
      %v2031 = vrot.slane %v220, 5
      %v2032 = vrot.slane %v2031, 4
      %v2033 = vrot.slane %v221, 5
      %v2034 = vsel %vm1195, %v2032, %v2033
      %v2035 = vrot.slane %v2033, 4
      %v2036 = vrot.slane %v222, 5
      %v2037 = vsel %vm1195, %v2035, %v2036
      %v2038 = vunpack.c.l.b16 %v2034
      %v2039 = vunpack.c.l.b16 %v2037
      %v2040 = vpack.c.b16 %v2039, %v2038
      %v2042 = vsel %vm671, %v2040, 0
      %v2045 = vsel %vm720, %v231, 0
      %2047 = vmatprep.subr.bf16.mxu0 0
      %2048 = vmatpush1.bf16.msra.mxu0 %v2045
      %2049 = vmatprep.subr.bf16.mxu0 0
      %2050 = vmatpush1.bf16.msra.mxu0 0
      %2051 = vmatprep.subr.bf16.mxu0 0
      %2052 = vmatpush1.bf16.msra.mxu0 0
      %2053 = vmatprep.subr.bf16.mxu0 0
      %2054 = vmatpush1.bf16.msra.mxu0 0
      %2055 = vmatprep.subr.bf16.mxu0 0
      %2056 = vmatpush1.bf16.msra.mxu0 0
      %2057 = vmatprep.subr.bf16.mxu0 0
      %2058 = vmatpush1.bf16.msra.mxu0 0
      %2059 = vmatprep.subr.bf16.mxu0 0
      %2060 = vmatpush1.bf16.msra.mxu0 0
      %2061 = vmatprep.subr.bf16.mxu0 0
      %2062 = vmatpush1.bf16.msra.mxu0 0
      %2063 = vmatprep.subr.bf16.mxu0 0
      %2064 = vmatpush1.bf16.msra.mxu0 0
      %2065 = vmatprep.subr.bf16.mxu0 0
      %2066 = vmatpush1.bf16.msra.mxu0 0
      %2067 = vmatprep.subr.bf16.mxu0 0
      %2068 = vmatpush1.bf16.msra.mxu0 0
      %2069 = vmatprep.subr.bf16.mxu0 0
      %2070 = vmatpush1.bf16.msra.mxu0 0
      %2071 = vmatprep.subr.bf16.mxu0 0
      %2072 = vmatpush1.bf16.msra.mxu0 0
      %2073 = vmatprep.subr.bf16.mxu0 0
      %2074 = vmatpush1.bf16.msra.mxu0 0
      %2075 = vmatprep.subr.bf16.mxu0 0
      %2076 = vmatpush1.bf16.msra.mxu0 0
      %2077 = vmatprep.subr.bf16.mxu0 0
      %2078 = vmatpush1.bf16.msra.mxu0 0
      %2079 = vmatprep.mubr.bf16.mxu0 0
      %2080 = vmatmul.mubr.bf16.gmra.mrb[0].mxu0 %v1360
      %v2081 = vpop.f32.mrb[0].mxu0
      %v2082 = vadd.f32 0.0, %v2081
      %v2083 = vpop.f32.mrb[0].mxu0
      %v2084 = vpop.f32.mrb[0].mxu0
      %v2085 = vadd.f32 0.0, %v2084
      %v2086 = vpop.f32.mrb[0].mxu0
      %2087 = vmatprep.mubr.bf16.mxu0 0
      %2088 = vmatmul.mubr.bf16.gmra.mrb[0].mxu0 %v1363
      %v2089 = vpop.f32.mrb[0].mxu0
      %v2090 = vadd.f32 0.0, %v2089
      %v2091 = vpop.f32.mrb[0].mxu0
      %v2092 = vpop.f32.mrb[0].mxu0
      %v2093 = vadd.f32 0.0, %v2092
      %v2094 = vpop.f32.mrb[0].mxu0
      %2095 = vmatprep.mubr.bf16.mxu0 0
      %2096 = vmatmul.mubr.bf16.gmra.mrb[0].mxu0 %v1366
      %v2097 = vpop.f32.mrb[0].mxu0
      %v2098 = vadd.f32 0.0, %v2097
      %v2099 = vpop.f32.mrb[0].mxu0
      %v2100 = vpop.f32.mrb[0].mxu0
      %v2101 = vadd.f32 0.0, %v2100
      %v2102 = vpop.f32.mrb[0].mxu0
      %2103 = vmatprep.mubr.bf16.mxu0 0
      %2104 = vmatmul.mubr.bf16.gmra.mrb[0].mxu0 %v1369
      %v2105 = vpop.f32.mrb[0].mxu0
      %v2106 = vadd.f32 0.0, %v2105
      %v2107 = vpop.f32.mrb[0].mxu0
      %v2108 = vpop.f32.mrb[0].mxu0
      %v2109 = vadd.f32 0.0, %v2108
      %v2110 = vpop.f32.mrb[0].mxu0
      %2111 = vmatprep.mubr.bf16.mxu0 0
      %2112 = vmatmul.mubr.bf16.gmra.mrb[0].mxu0 %v1372
      %v2113 = vpop.f32.mrb[0].mxu0
      %v2114 = vadd.f32 0.0, %v2113
      %v2115 = vpop.f32.mrb[0].mxu0
      %v2116 = vpop.f32.mrb[0].mxu0
      %v2117 = vadd.f32 0.0, %v2116
      %v2118 = vpop.f32.mrb[0].mxu0
      %2119 = vmatprep.mubr.bf16.mxu0 0
      %2120 = vmatmul.mubr.bf16.gmra.mrb[0].mxu0 %v1375
      %v2121 = vpop.f32.mrb[0].mxu0
      %v2122 = vadd.f32 0.0, %v2121
      %v2123 = vpop.f32.mrb[0].mxu0
      %v2124 = vpop.f32.mrb[0].mxu0
      %v2125 = vadd.f32 0.0, %v2124
      %v2126 = vpop.f32.mrb[0].mxu0
      %2127 = vmatprep.mubr.bf16.mxu0 0
      %2128 = vmatmul.mubr.bf16.gmra.mrb[0].mxu0 %v1378
      %v2129 = vpop.f32.mrb[0].mxu0
      %v2130 = vadd.f32 0.0, %v2129
      %v2131 = vpop.f32.mrb[0].mxu0
      %v2132 = vpop.f32.mrb[0].mxu0
      %v2133 = vadd.f32 0.0, %v2132
      %v2134 = vpop.f32.mrb[0].mxu0
      %2135 = vmatprep.mubr.bf16.mxu0 0
      %2136 = vmatmul.mubr.bf16.gmra.mrb[0].mxu0 %v1381
      %v2137 = vpop.f32.mrb[0].mxu0
      %v2138 = vadd.f32 0.0, %v2137
      %v2139 = vpop.f32.mrb[0].mxu0
      %v2140 = vpop.f32.mrb[0].mxu0
      %v2141 = vadd.f32 0.0, %v2140
      %v2142 = vpop.f32.mrb[0].mxu0
      %2143 = vmatprep.mubr.bf16.mxu0 0
      %2144 = vmatmul.mubr.bf16.gmra.mrb[0].mxu0 %v1384
      %v2145 = vpop.f32.mrb[0].mxu0
      %v2146 = vadd.f32 0.0, %v2145
      %v2147 = vpop.f32.mrb[0].mxu0
      %v2148 = vpop.f32.mrb[0].mxu0
      %v2149 = vadd.f32 0.0, %v2148
      %v2150 = vpop.f32.mrb[0].mxu0
      %2151 = vmatprep.mubr.bf16.mxu0 0
      %2152 = vmatmul.mubr.bf16.gmra.mrb[0].mxu0 %v1387
      %v2153 = vpop.f32.mrb[0].mxu0
      %v2154 = vadd.f32 0.0, %v2153
      %v2155 = vpop.f32.mrb[0].mxu0
      %v2156 = vpop.f32.mrb[0].mxu0
      %v2157 = vadd.f32 0.0, %v2156
      %v2158 = vpop.f32.mrb[0].mxu0
      %2159 = vmatprep.mubr.bf16.mxu0 0
      %2160 = vmatmul.mubr.bf16.gmra.mrb[0].mxu0 %v1390
      %v2161 = vpop.f32.mrb[0].mxu0
      %v2162 = vadd.f32 0.0, %v2161
      %v2163 = vpop.f32.mrb[0].mxu0
      %v2164 = vpop.f32.mrb[0].mxu0
      %v2165 = vadd.f32 0.0, %v2164
      %v2166 = vpop.f32.mrb[0].mxu0
      %2167 = vmatprep.mubr.bf16.mxu0 0
      %2168 = vmatmul.mubr.bf16.gmra.mrb[0].mxu0 %v1393
      %v2169 = vpop.f32.mrb[0].mxu0
      %v2170 = vadd.f32 0.0, %v2169
      %v2171 = vpop.f32.mrb[0].mxu0
      %v2172 = vpop.f32.mrb[0].mxu0
      %v2173 = vadd.f32 0.0, %v2172
      %v2174 = vpop.f32.mrb[0].mxu0
      %2175 = vmatprep.mubr.bf16.mxu0 0
      %2176 = vmatmul.mubr.bf16.gmra.mrb[0].mxu0 %v1396
      %v2177 = vpop.f32.mrb[0].mxu0
      %v2178 = vadd.f32 0.0, %v2177
      %v2179 = vpop.f32.mrb[0].mxu0
      %v2180 = vpop.f32.mrb[0].mxu0
      %v2181 = vadd.f32 0.0, %v2180
      %v2182 = vpop.f32.mrb[0].mxu0
      %2183 = vmatprep.mubr.bf16.mxu0 0
      %2184 = vmatmul.mubr.bf16.gmra.mrb[0].mxu0 %v1399
      %v2185 = vpop.f32.mrb[0].mxu0
      %v2186 = vadd.f32 0.0, %v2185
      %v2187 = vpop.f32.mrb[0].mxu0
      %v2188 = vpop.f32.mrb[0].mxu0
      %v2189 = vadd.f32 0.0, %v2188
      %v2190 = vpop.f32.mrb[0].mxu0
      %2191 = vmatprep.mubr.bf16.mxu0 0
      %2192 = vmatmul.mubr.bf16.gmra.mrb[0].mxu0 %v1402
      %v2193 = vpop.f32.mrb[0].mxu0
      %v2194 = vadd.f32 0.0, %v2193
      %v2195 = vpop.f32.mrb[0].mxu0
      %v2196 = vpop.f32.mrb[0].mxu0
      %v2197 = vadd.f32 0.0, %v2196
      %v2198 = vpop.f32.mrb[0].mxu0
      %2199 = vmatprep.mubr.bf16.mxu0 0
      %2200 = vmatmul.mubr.bf16.gmra.mrb[0].mxu0 %v2042
      %v2201 = vpop.f32.mrb[0].mxu0
      %v2202 = vadd.f32 0.0, %v2201
      %v2203 = vpop.f32.mrb[0].mxu0
      %v2204 = vpop.f32.mrb[0].mxu0
      %v2205 = vadd.f32 0.0, %v2204
      %v2206 = vpop.f32.mrb[0].mxu0
      %2207 = vdwg.mxu0
      %v2208 = vadd.f32 %v1998, %v2082
      %v2209 = vadd.f32 %v1999, %v2085
      %v2210 = vadd.f32 %v2000, %v2090
      %v2211 = vadd.f32 %v2001, %v2093
      %v2212 = vadd.f32 %v2002, %v2098
      %v2213 = vadd.f32 %v2003, %v2101
      %v2214 = vadd.f32 %v2004, %v2106
      %v2215 = vadd.f32 %v2005, %v2109
      %v2216 = vadd.f32 %v2006, %v2114
      %v2217 = vadd.f32 %v2007, %v2117
      %v2218 = vadd.f32 %v2008, %v2122
      %v2219 = vadd.f32 %v2009, %v2125
      %v2220 = vadd.f32 %v2010, %v2130
      %v2221 = vadd.f32 %v2011, %v2133
      %v2222 = vadd.f32 %v2012, %v2138
      %v2223 = vadd.f32 %v2013, %v2141
      %v2224 = vadd.f32 %v2014, %v2146
      %v2225 = vadd.f32 %v2015, %v2149
      %v2226 = vadd.f32 %v2016, %v2154
      %v2227 = vadd.f32 %v2017, %v2157
      %v2228 = vadd.f32 %v2018, %v2162
      %v2229 = vadd.f32 %v2019, %v2165
      %v2230 = vadd.f32 %v2020, %v2170
      %v2231 = vadd.f32 %v2021, %v2173
      %v2232 = vadd.f32 %v2022, %v2178
      %v2233 = vadd.f32 %v2023, %v2181
      %v2234 = vadd.f32 %v2024, %v2186
      %v2235 = vadd.f32 %v2025, %v2189
      %v2236 = vadd.f32 %v2026, %v2194
      %v2237 = vadd.f32 %v2027, %v2197
      %v2238 = vadd.f32 %v2028, %v2202
      %v2239 = vadd.f32 %v2029, %v2205
      %v2242 = vunpack.c.l.b16 %v223
      %v2243 = vunpack.c.l.b16 %v224
      %v2244 = vpack.c.b16 %v2243, %v2242
      %v2246 = vsel %vm671, %v2244, 0
      %v2249 = vsel %vm720, %v232, 0
      %2251 = vmatprep.subr.bf16.mxu0 0
      %2252 = vmatpush1.bf16.msra.mxu0 %v2249
      %2253 = vmatprep.subr.bf16.mxu0 0
      %2254 = vmatpush1.bf16.msra.mxu0 0
      %2255 = vmatprep.subr.bf16.mxu0 0
      %2256 = vmatpush1.bf16.msra.mxu0 0
      %2257 = vmatprep.subr.bf16.mxu0 0
      %2258 = vmatpush1.bf16.msra.mxu0 0
      %2259 = vmatprep.subr.bf16.mxu0 0
      %2260 = vmatpush1.bf16.msra.mxu0 0
      %2261 = vmatprep.subr.bf16.mxu0 0
      %2262 = vmatpush1.bf16.msra.mxu0 0
      %2263 = vmatprep.subr.bf16.mxu0 0
      %2264 = vmatpush1.bf16.msra.mxu0 0
      %2265 = vmatprep.subr.bf16.mxu0 0
      %2266 = vmatpush1.bf16.msra.mxu0 0
      %2267 = vmatprep.subr.bf16.mxu0 0
      %2268 = vmatpush1.bf16.msra.mxu0 0
      %2269 = vmatprep.subr.bf16.mxu0 0
      %2270 = vmatpush1.bf16.msra.mxu0 0
      %2271 = vmatprep.subr.bf16.mxu0 0
      %2272 = vmatpush1.bf16.msra.mxu0 0
      %2273 = vmatprep.subr.bf16.mxu0 0
      %2274 = vmatpush1.bf16.msra.mxu0 0
      %2275 = vmatprep.subr.bf16.mxu0 0
      %2276 = vmatpush1.bf16.msra.mxu0 0
      %2277 = vmatprep.subr.bf16.mxu0 0
      %2278 = vmatpush1.bf16.msra.mxu0 0
      %2279 = vmatprep.subr.bf16.mxu0 0
      %2280 = vmatpush1.bf16.msra.mxu0 0
      %2281 = vmatprep.subr.bf16.mxu0 0
      %2282 = vmatpush1.bf16.msra.mxu0 0
      %2283 = vmatprep.mubr.bf16.mxu0 0
      %2284 = vmatmul.mubr.bf16.gmra.mrb[0].mxu0 %v972
      %v2285 = vpop.f32.mrb[0].mxu0
      %v2286 = vadd.f32 0.0, %v2285
      %v2287 = vpop.f32.mrb[0].mxu0
      %v2288 = vpop.f32.mrb[0].mxu0
      %v2289 = vadd.f32 0.0, %v2288
      %v2290 = vpop.f32.mrb[0].mxu0
      %2291 = vmatprep.mubr.bf16.mxu0 0
      %2292 = vmatmul.mubr.bf16.gmra.mrb[0].mxu0 %v975
      %v2293 = vpop.f32.mrb[0].mxu0
      %v2294 = vadd.f32 0.0, %v2293
      %v2295 = vpop.f32.mrb[0].mxu0
      %v2296 = vpop.f32.mrb[0].mxu0
      %v2297 = vadd.f32 0.0, %v2296
      %v2298 = vpop.f32.mrb[0].mxu0
      %2299 = vmatprep.mubr.bf16.mxu0 0
      %2300 = vmatmul.mubr.bf16.gmra.mrb[0].mxu0 %v978
      %v2301 = vpop.f32.mrb[0].mxu0
      %v2302 = vadd.f32 0.0, %v2301
      %v2303 = vpop.f32.mrb[0].mxu0
      %v2304 = vpop.f32.mrb[0].mxu0
      %v2305 = vadd.f32 0.0, %v2304
      %v2306 = vpop.f32.mrb[0].mxu0
      %2307 = vmatprep.mubr.bf16.mxu0 0
      %2308 = vmatmul.mubr.bf16.gmra.mrb[0].mxu0 %v981
      %v2309 = vpop.f32.mrb[0].mxu0
      %v2310 = vadd.f32 0.0, %v2309
      %v2311 = vpop.f32.mrb[0].mxu0
      %v2312 = vpop.f32.mrb[0].mxu0
      %v2313 = vadd.f32 0.0, %v2312
      %v2314 = vpop.f32.mrb[0].mxu0
      %2315 = vmatprep.mubr.bf16.mxu0 0
      %2316 = vmatmul.mubr.bf16.gmra.mrb[0].mxu0 %v984
      %v2317 = vpop.f32.mrb[0].mxu0
      %v2318 = vadd.f32 0.0, %v2317
      %v2319 = vpop.f32.mrb[0].mxu0
      %v2320 = vpop.f32.mrb[0].mxu0
      %v2321 = vadd.f32 0.0, %v2320
      %v2322 = vpop.f32.mrb[0].mxu0
      %2323 = vmatprep.mubr.bf16.mxu0 0
      %2324 = vmatmul.mubr.bf16.gmra.mrb[0].mxu0 %v987
      %v2325 = vpop.f32.mrb[0].mxu0
      %v2326 = vadd.f32 0.0, %v2325
      %v2327 = vpop.f32.mrb[0].mxu0
      %v2328 = vpop.f32.mrb[0].mxu0
      %v2329 = vadd.f32 0.0, %v2328
      %v2330 = vpop.f32.mrb[0].mxu0
      %2331 = vmatprep.mubr.bf16.mxu0 0
      %2332 = vmatmul.mubr.bf16.gmra.mrb[0].mxu0 %v990
      %v2333 = vpop.f32.mrb[0].mxu0
      %v2334 = vadd.f32 0.0, %v2333
      %v2335 = vpop.f32.mrb[0].mxu0
      %v2336 = vpop.f32.mrb[0].mxu0
      %v2337 = vadd.f32 0.0, %v2336
      %v2338 = vpop.f32.mrb[0].mxu0
      %2339 = vmatprep.mubr.bf16.mxu0 0
      %2340 = vmatmul.mubr.bf16.gmra.mrb[0].mxu0 %v993
      %v2341 = vpop.f32.mrb[0].mxu0
      %v2342 = vadd.f32 0.0, %v2341
      %v2343 = vpop.f32.mrb[0].mxu0
      %v2344 = vpop.f32.mrb[0].mxu0
      %v2345 = vadd.f32 0.0, %v2344
      %v2346 = vpop.f32.mrb[0].mxu0
      %2347 = vmatprep.mubr.bf16.mxu0 0
      %2348 = vmatmul.mubr.bf16.gmra.mrb[0].mxu0 %v996
      %v2349 = vpop.f32.mrb[0].mxu0
      %v2350 = vadd.f32 0.0, %v2349
      %v2351 = vpop.f32.mrb[0].mxu0
      %v2352 = vpop.f32.mrb[0].mxu0
      %v2353 = vadd.f32 0.0, %v2352
      %v2354 = vpop.f32.mrb[0].mxu0
      %2355 = vmatprep.mubr.bf16.mxu0 0
      %2356 = vmatmul.mubr.bf16.gmra.mrb[0].mxu0 %v999
      %v2357 = vpop.f32.mrb[0].mxu0
      %v2358 = vadd.f32 0.0, %v2357
      %v2359 = vpop.f32.mrb[0].mxu0
      %v2360 = vpop.f32.mrb[0].mxu0
      %v2361 = vadd.f32 0.0, %v2360
      %v2362 = vpop.f32.mrb[0].mxu0
      %2363 = vmatprep.mubr.bf16.mxu0 0
      %2364 = vmatmul.mubr.bf16.gmra.mrb[0].mxu0 %v1002
      %v2365 = vpop.f32.mrb[0].mxu0
      %v2366 = vadd.f32 0.0, %v2365
      %v2367 = vpop.f32.mrb[0].mxu0
      %v2368 = vpop.f32.mrb[0].mxu0
      %v2369 = vadd.f32 0.0, %v2368
      %v2370 = vpop.f32.mrb[0].mxu0
      %2371 = vmatprep.mubr.bf16.mxu0 0
      %2372 = vmatmul.mubr.bf16.gmra.mrb[0].mxu0 %v1005
      %v2373 = vpop.f32.mrb[0].mxu0
      %v2374 = vadd.f32 0.0, %v2373
      %v2375 = vpop.f32.mrb[0].mxu0
      %v2376 = vpop.f32.mrb[0].mxu0
      %v2377 = vadd.f32 0.0, %v2376
      %v2378 = vpop.f32.mrb[0].mxu0
      %2379 = vmatprep.mubr.bf16.mxu0 0
      %2380 = vmatmul.mubr.bf16.gmra.mrb[0].mxu0 %v1008
      %v2381 = vpop.f32.mrb[0].mxu0
      %v2382 = vadd.f32 0.0, %v2381
      %v2383 = vpop.f32.mrb[0].mxu0
      %v2384 = vpop.f32.mrb[0].mxu0
      %v2385 = vadd.f32 0.0, %v2384
      %v2386 = vpop.f32.mrb[0].mxu0
      %2387 = vmatprep.mubr.bf16.mxu0 0
      %2388 = vmatmul.mubr.bf16.gmra.mrb[0].mxu0 %v1011
      %v2389 = vpop.f32.mrb[0].mxu0
      %v2390 = vadd.f32 0.0, %v2389
      %v2391 = vpop.f32.mrb[0].mxu0
      %v2392 = vpop.f32.mrb[0].mxu0
      %v2393 = vadd.f32 0.0, %v2392
      %v2394 = vpop.f32.mrb[0].mxu0
      %2395 = vmatprep.mubr.bf16.mxu0 0
      %2396 = vmatmul.mubr.bf16.gmra.mrb[0].mxu0 %v1606
      %v2397 = vpop.f32.mrb[0].mxu0
      %v2398 = vadd.f32 0.0, %v2397
      %v2399 = vpop.f32.mrb[0].mxu0
      %v2400 = vpop.f32.mrb[0].mxu0
      %v2401 = vadd.f32 0.0, %v2400
      %v2402 = vpop.f32.mrb[0].mxu0
      %2403 = vmatprep.mubr.bf16.mxu0 0
      %2404 = vmatmul.mubr.bf16.gmra.mrb[0].mxu0 %v2246
      %v2405 = vpop.f32.mrb[0].mxu0
      %v2406 = vadd.f32 0.0, %v2405
      %v2407 = vpop.f32.mrb[0].mxu0
      %v2408 = vpop.f32.mrb[0].mxu0
      %v2409 = vadd.f32 0.0, %v2408
      %v2410 = vpop.f32.mrb[0].mxu0
      %2411 = vdwg.mxu0
      %v2412 = vadd.f32 %v2208, %v2286
      %v2413 = vadd.f32 %v2209, %v2289
      %v2414 = vadd.f32 %v2210, %v2294
      %v2415 = vadd.f32 %v2211, %v2297
      %v2416 = vadd.f32 %v2212, %v2302
      %v2417 = vadd.f32 %v2213, %v2305
      %v2418 = vadd.f32 %v2214, %v2310
      %v2419 = vadd.f32 %v2215, %v2313
      %v2420 = vadd.f32 %v2216, %v2318
      %v2421 = vadd.f32 %v2217, %v2321
      %v2422 = vadd.f32 %v2218, %v2326
      %v2423 = vadd.f32 %v2219, %v2329
      %v2424 = vadd.f32 %v2220, %v2334
      %v2425 = vadd.f32 %v2221, %v2337
      %v2426 = vadd.f32 %v2222, %v2342
      %v2427 = vadd.f32 %v2223, %v2345
      %v2428 = vadd.f32 %v2224, %v2350
      %v2429 = vadd.f32 %v2225, %v2353
      %v2430 = vadd.f32 %v2226, %v2358
      %v2431 = vadd.f32 %v2227, %v2361
      %v2432 = vadd.f32 %v2228, %v2366
      %v2433 = vadd.f32 %v2229, %v2369
      %v2434 = vadd.f32 %v2230, %v2374
      %v2435 = vadd.f32 %v2231, %v2377
      %v2436 = vadd.f32 %v2232, %v2382
      %v2437 = vadd.f32 %v2233, %v2385
      %v2438 = vadd.f32 %v2234, %v2390
      %v2439 = vadd.f32 %v2235, %v2393
      %v2440 = vadd.f32 %v2236, %v2398
      %v2441 = vadd.f32 %v2237, %v2401
      %v2442 = vadd.f32 %v2238, %v2406
      %v2443 = vadd.f32 %v2239, %v2409
      %v2445 = vshrl.u32 %v223, 16
      %v2447 = vrot.slane %v2445, 4
      %v2448 = vshll.u32 %v223, 16
      %v2450 = vrot.slane %v2448, 5
      %v2451 = vor.u32 %v2447, %v2450
      %v2452 = vrot.slane %v2451, 4
      %v2454 = vshll.u32 %v224, 16
      %v2456 = vrot.slane %v2454, 5
      %v2457 = vsel %vm238, %v2452, %v2456
      %v2458 = vshrl.u32 %v224, 16
      %v2460 = vrot.slane %v2458, 4
      %v2461 = vor.u32 %v2460, %v2456
      %v2462 = vrot.slane %v2461, 4
      %v2464 = vshll.u32 %v225, 16
      %v2466 = vrot.slane %v2464, 5
      %v2467 = vsel %vm238, %v2462, %v2466
      %v2468 = vunpack.c.l.b16 %v2457
      %v2469 = vunpack.c.l.b16 %v2467
      %v2470 = vpack.c.b16 %v2469, %v2468
      %v2472 = vsel %vm671, %v2470, 0
      %v2475 = vsel %vm720, %v233, 0
      %2477 = vmatprep.subr.bf16.mxu0 0
      %2478 = vmatpush1.bf16.msra.mxu0 %v2475
      %2479 = vmatprep.subr.bf16.mxu0 0
      %2480 = vmatpush1.bf16.msra.mxu0 0
      %2481 = vmatprep.subr.bf16.mxu0 0
      %2482 = vmatpush1.bf16.msra.mxu0 0
      %2483 = vmatprep.subr.bf16.mxu0 0
      %2484 = vmatpush1.bf16.msra.mxu0 0
      %2485 = vmatprep.subr.bf16.mxu0 0
      %2486 = vmatpush1.bf16.msra.mxu0 0
      %2487 = vmatprep.subr.bf16.mxu0 0
      %2488 = vmatpush1.bf16.msra.mxu0 0
      %2489 = vmatprep.subr.bf16.mxu0 0
      %2490 = vmatpush1.bf16.msra.mxu0 0
      %2491 = vmatprep.subr.bf16.mxu0 0
      %2492 = vmatpush1.bf16.msra.mxu0 0
      %2493 = vmatprep.subr.bf16.mxu0 0
      %2494 = vmatpush1.bf16.msra.mxu0 0
      %2495 = vmatprep.subr.bf16.mxu0 0
      %2496 = vmatpush1.bf16.msra.mxu0 0
      %2497 = vmatprep.subr.bf16.mxu0 0
      %2498 = vmatpush1.bf16.msra.mxu0 0
      %2499 = vmatprep.subr.bf16.mxu0 0
      %2500 = vmatpush1.bf16.msra.mxu0 0
      %2501 = vmatprep.subr.bf16.mxu0 0
      %2502 = vmatpush1.bf16.msra.mxu0 0
      %2503 = vmatprep.subr.bf16.mxu0 0
      %2504 = vmatpush1.bf16.msra.mxu0 0
      %2505 = vmatprep.subr.bf16.mxu0 0
      %2506 = vmatpush1.bf16.msra.mxu0 0
      %2507 = vmatprep.subr.bf16.mxu0 0
      %2508 = vmatpush1.bf16.msra.mxu0 0
      %2509 = vmatprep.mubr.bf16.mxu0 0
      %2510 = vmatmul.mubr.bf16.gmra.mrb[0].mxu0 %v679
      %v2511 = vpop.f32.mrb[0].mxu0
      %v2512 = vadd.f32 0.0, %v2511
      %v2513 = vpop.f32.mrb[0].mxu0
      %v2514 = vpop.f32.mrb[0].mxu0
      %v2515 = vadd.f32 0.0, %v2514
      %v2516 = vpop.f32.mrb[0].mxu0
      %2517 = vmatprep.mubr.bf16.mxu0 0
      %2518 = vmatmul.mubr.bf16.gmra.mrb[0].mxu0 %v682
      %v2519 = vpop.f32.mrb[0].mxu0
      %v2520 = vadd.f32 0.0, %v2519
      %v2521 = vpop.f32.mrb[0].mxu0
      %v2522 = vpop.f32.mrb[0].mxu0
      %v2523 = vadd.f32 0.0, %v2522
      %v2524 = vpop.f32.mrb[0].mxu0
      %2525 = vmatprep.mubr.bf16.mxu0 0
      %2526 = vmatmul.mubr.bf16.gmra.mrb[0].mxu0 %v685
      %v2527 = vpop.f32.mrb[0].mxu0
      %v2528 = vadd.f32 0.0, %v2527
      %v2529 = vpop.f32.mrb[0].mxu0
      %v2530 = vpop.f32.mrb[0].mxu0
      %v2531 = vadd.f32 0.0, %v2530
      %v2532 = vpop.f32.mrb[0].mxu0
      %2533 = vmatprep.mubr.bf16.mxu0 0
      %2534 = vmatmul.mubr.bf16.gmra.mrb[0].mxu0 %v688
      %v2535 = vpop.f32.mrb[0].mxu0
      %v2536 = vadd.f32 0.0, %v2535
      %v2537 = vpop.f32.mrb[0].mxu0
      %v2538 = vpop.f32.mrb[0].mxu0
      %v2539 = vadd.f32 0.0, %v2538
      %v2540 = vpop.f32.mrb[0].mxu0
      %2541 = vmatprep.mubr.bf16.mxu0 0
      %2542 = vmatmul.mubr.bf16.gmra.mrb[0].mxu0 %v691
      %v2543 = vpop.f32.mrb[0].mxu0
      %v2544 = vadd.f32 0.0, %v2543
      %v2545 = vpop.f32.mrb[0].mxu0
      %v2546 = vpop.f32.mrb[0].mxu0
      %v2547 = vadd.f32 0.0, %v2546
      %v2548 = vpop.f32.mrb[0].mxu0
      %2549 = vmatprep.mubr.bf16.mxu0 0
      %2550 = vmatmul.mubr.bf16.gmra.mrb[0].mxu0 %v694
      %v2551 = vpop.f32.mrb[0].mxu0
      %v2552 = vadd.f32 0.0, %v2551
      %v2553 = vpop.f32.mrb[0].mxu0
      %v2554 = vpop.f32.mrb[0].mxu0
      %v2555 = vadd.f32 0.0, %v2554
      %v2556 = vpop.f32.mrb[0].mxu0
      %2557 = vmatprep.mubr.bf16.mxu0 0
      %2558 = vmatmul.mubr.bf16.gmra.mrb[0].mxu0 %v697
      %v2559 = vpop.f32.mrb[0].mxu0
      %v2560 = vadd.f32 0.0, %v2559
      %v2561 = vpop.f32.mrb[0].mxu0
      %v2562 = vpop.f32.mrb[0].mxu0
      %v2563 = vadd.f32 0.0, %v2562
      %v2564 = vpop.f32.mrb[0].mxu0
      %2565 = vmatprep.mubr.bf16.mxu0 0
      %2566 = vmatmul.mubr.bf16.gmra.mrb[0].mxu0 %v700
      %v2567 = vpop.f32.mrb[0].mxu0
      %v2568 = vadd.f32 0.0, %v2567
      %v2569 = vpop.f32.mrb[0].mxu0
      %v2570 = vpop.f32.mrb[0].mxu0
      %v2571 = vadd.f32 0.0, %v2570
      %v2572 = vpop.f32.mrb[0].mxu0
      %2573 = vmatprep.mubr.bf16.mxu0 0
      %2574 = vmatmul.mubr.bf16.gmra.mrb[0].mxu0 %v703
      %v2575 = vpop.f32.mrb[0].mxu0
      %v2576 = vadd.f32 0.0, %v2575
      %v2577 = vpop.f32.mrb[0].mxu0
      %v2578 = vpop.f32.mrb[0].mxu0
      %v2579 = vadd.f32 0.0, %v2578
      %v2580 = vpop.f32.mrb[0].mxu0
      %2581 = vmatprep.mubr.bf16.mxu0 0
      %2582 = vmatmul.mubr.bf16.gmra.mrb[0].mxu0 %v706
      %v2583 = vpop.f32.mrb[0].mxu0
      %v2584 = vadd.f32 0.0, %v2583
      %v2585 = vpop.f32.mrb[0].mxu0
      %v2586 = vpop.f32.mrb[0].mxu0
      %v2587 = vadd.f32 0.0, %v2586
      %v2588 = vpop.f32.mrb[0].mxu0
      %2589 = vmatprep.mubr.bf16.mxu0 0
      %2590 = vmatmul.mubr.bf16.gmra.mrb[0].mxu0 %v709
      %v2591 = vpop.f32.mrb[0].mxu0
      %v2592 = vadd.f32 0.0, %v2591
      %v2593 = vpop.f32.mrb[0].mxu0
      %v2594 = vpop.f32.mrb[0].mxu0
      %v2595 = vadd.f32 0.0, %v2594
      %v2596 = vpop.f32.mrb[0].mxu0
      %2597 = vmatprep.mubr.bf16.mxu0 0
      %2598 = vmatmul.mubr.bf16.gmra.mrb[0].mxu0 %v712
      %v2599 = vpop.f32.mrb[0].mxu0
      %v2600 = vadd.f32 0.0, %v2599
      %v2601 = vpop.f32.mrb[0].mxu0
      %v2602 = vpop.f32.mrb[0].mxu0
      %v2603 = vadd.f32 0.0, %v2602
      %v2604 = vpop.f32.mrb[0].mxu0
      %2605 = vmatprep.mubr.bf16.mxu0 0
      %2606 = vmatmul.mubr.bf16.gmra.mrb[0].mxu0 %v715
      %v2607 = vpop.f32.mrb[0].mxu0
      %v2608 = vadd.f32 0.0, %v2607
      %v2609 = vpop.f32.mrb[0].mxu0
      %v2610 = vpop.f32.mrb[0].mxu0
      %v2611 = vadd.f32 0.0, %v2610
      %v2612 = vpop.f32.mrb[0].mxu0
      %2613 = vmatprep.mubr.bf16.mxu0 0
      %2614 = vmatmul.mubr.bf16.gmra.mrb[0].mxu0 %v718
      %v2615 = vpop.f32.mrb[0].mxu0
      %v2616 = vadd.f32 0.0, %v2615
      %v2617 = vpop.f32.mrb[0].mxu0
      %v2618 = vpop.f32.mrb[0].mxu0
      %v2619 = vadd.f32 0.0, %v2618
      %v2620 = vpop.f32.mrb[0].mxu0
      %2621 = vmatprep.mubr.bf16.mxu0 0
      %2622 = vmatmul.mubr.bf16.gmra.mrb[0].mxu0 %v1832
      %v2623 = vpop.f32.mrb[0].mxu0
      %v2624 = vadd.f32 0.0, %v2623
      %v2625 = vpop.f32.mrb[0].mxu0
      %v2626 = vpop.f32.mrb[0].mxu0
      %v2627 = vadd.f32 0.0, %v2626
      %v2628 = vpop.f32.mrb[0].mxu0
      %2629 = vmatprep.mubr.bf16.mxu0 0
      %2630 = vmatmul.mubr.bf16.gmra.mrb[0].mxu0 %v2472
      %v2631 = vpop.f32.mrb[0].mxu0
      %v2632 = vadd.f32 0.0, %v2631
      %v2633 = vpop.f32.mrb[0].mxu0
      %v2634 = vpop.f32.mrb[0].mxu0
      %v2635 = vadd.f32 0.0, %v2634
      %v2636 = vpop.f32.mrb[0].mxu0
      %2637 = vdwg.mxu0
      %v2638 = vadd.f32 %v2412, %v2512
      %v2639 = vadd.f32 %v2413, %v2515
      %v2640 = vadd.f32 %v2414, %v2520
      %v2641 = vadd.f32 %v2415, %v2523
      %v2642 = vadd.f32 %v2416, %v2528
      %v2643 = vadd.f32 %v2417, %v2531
      %v2644 = vadd.f32 %v2418, %v2536
      %v2645 = vadd.f32 %v2419, %v2539
      %v2646 = vadd.f32 %v2420, %v2544
      %v2647 = vadd.f32 %v2421, %v2547
      %v2648 = vadd.f32 %v2422, %v2552
      %v2649 = vadd.f32 %v2423, %v2555
      %v2650 = vadd.f32 %v2424, %v2560
      %v2651 = vadd.f32 %v2425, %v2563
      %v2652 = vadd.f32 %v2426, %v2568
      %v2653 = vadd.f32 %v2427, %v2571
      %v2654 = vadd.f32 %v2428, %v2576
      %v2655 = vadd.f32 %v2429, %v2579
      %v2656 = vadd.f32 %v2430, %v2584
      %v2657 = vadd.f32 %v2431, %v2587
      %v2658 = vadd.f32 %v2432, %v2592
      %v2659 = vadd.f32 %v2433, %v2595
      %v2660 = vadd.f32 %v2434, %v2600
      %v2661 = vadd.f32 %v2435, %v2603
      %v2662 = vadd.f32 %v2436, %v2608
      %v2663 = vadd.f32 %v2437, %v2611
      %v2664 = vadd.f32 %v2438, %v2616
      %v2665 = vadd.f32 %v2439, %v2619
      %v2666 = vadd.f32 %v2440, %v2624
      %v2667 = vadd.f32 %v2441, %v2627
      %v2668 = vadd.f32 %v2442, %v2632
      %v2669 = vadd.f32 %v2443, %v2635
      %v2671 = vrot.slane %v223, 5
      %v2672 = vrot.slane %v2671, 4
      %v2673 = vrot.slane %v224, 5
      %v2674 = vsel %vm1195, %v2672, %v2673
      %v2675 = vrot.slane %v2673, 4
      %v2676 = vrot.slane %v225, 5
      %v2677 = vsel %vm1195, %v2675, %v2676
      %v2678 = vunpack.c.l.b16 %v2674
      %v2679 = vunpack.c.l.b16 %v2677
      %v2680 = vpack.c.b16 %v2679, %v2678
      %v2682 = vsel %vm671, %v2680, 0
      %v2685 = vsel %vm720, %v234, 0
      %2687 = vmatprep.subr.bf16.mxu0 0
      %2688 = vmatpush1.bf16.msra.mxu0 %v2685
      %2689 = vmatprep.subr.bf16.mxu0 0
      %2690 = vmatpush1.bf16.msra.mxu0 0
      %2691 = vmatprep.subr.bf16.mxu0 0
      %2692 = vmatpush1.bf16.msra.mxu0 0
      %2693 = vmatprep.subr.bf16.mxu0 0
      %2694 = vmatpush1.bf16.msra.mxu0 0
      %2695 = vmatprep.subr.bf16.mxu0 0
      %2696 = vmatpush1.bf16.msra.mxu0 0
      %2697 = vmatprep.subr.bf16.mxu0 0
      %2698 = vmatpush1.bf16.msra.mxu0 0
      %2699 = vmatprep.subr.bf16.mxu0 0
      %2700 = vmatpush1.bf16.msra.mxu0 0
      %2701 = vmatprep.subr.bf16.mxu0 0
      %2702 = vmatpush1.bf16.msra.mxu0 0
      %2703 = vmatprep.subr.bf16.mxu0 0
      %2704 = vmatpush1.bf16.msra.mxu0 0
      %2705 = vmatprep.subr.bf16.mxu0 0
      %2706 = vmatpush1.bf16.msra.mxu0 0
      %2707 = vmatprep.subr.bf16.mxu0 0
      %2708 = vmatpush1.bf16.msra.mxu0 0
      %2709 = vmatprep.subr.bf16.mxu0 0
      %2710 = vmatpush1.bf16.msra.mxu0 0
      %2711 = vmatprep.subr.bf16.mxu0 0
      %2712 = vmatpush1.bf16.msra.mxu0 0
      %2713 = vmatprep.subr.bf16.mxu0 0
      %2714 = vmatpush1.bf16.msra.mxu0 0
      %2715 = vmatprep.subr.bf16.mxu0 0
      %2716 = vmatpush1.bf16.msra.mxu0 0
      %2717 = vmatprep.subr.bf16.mxu0 0
      %2718 = vmatpush1.bf16.msra.mxu0 0
      %2719 = vmatprep.mubr.bf16.mxu0 0
      %2720 = vmatmul.mubr.bf16.gmra.mrb[0].mxu0 %v1363
      %v2721 = vpop.f32.mrb[0].mxu0
      %v2722 = vadd.f32 0.0, %v2721
      %v2723 = vpop.f32.mrb[0].mxu0
      %v2724 = vpop.f32.mrb[0].mxu0
      %v2725 = vadd.f32 0.0, %v2724
      %v2726 = vpop.f32.mrb[0].mxu0
      %2727 = vmatprep.mubr.bf16.mxu0 0
      %2728 = vmatmul.mubr.bf16.gmra.mrb[0].mxu0 %v1366
      %v2729 = vpop.f32.mrb[0].mxu0
      %v2730 = vadd.f32 0.0, %v2729
      %v2731 = vpop.f32.mrb[0].mxu0
      %v2732 = vpop.f32.mrb[0].mxu0
      %v2733 = vadd.f32 0.0, %v2732
      %v2734 = vpop.f32.mrb[0].mxu0
      %2735 = vmatprep.mubr.bf16.mxu0 0
      %2736 = vmatmul.mubr.bf16.gmra.mrb[0].mxu0 %v1369
      %v2737 = vpop.f32.mrb[0].mxu0
      %v2738 = vadd.f32 0.0, %v2737
      %v2739 = vpop.f32.mrb[0].mxu0
      %v2740 = vpop.f32.mrb[0].mxu0
      %v2741 = vadd.f32 0.0, %v2740
      %v2742 = vpop.f32.mrb[0].mxu0
      %2743 = vmatprep.mubr.bf16.mxu0 0
      %2744 = vmatmul.mubr.bf16.gmra.mrb[0].mxu0 %v1372
      %v2745 = vpop.f32.mrb[0].mxu0
      %v2746 = vadd.f32 0.0, %v2745
      %v2747 = vpop.f32.mrb[0].mxu0
      %v2748 = vpop.f32.mrb[0].mxu0
      %v2749 = vadd.f32 0.0, %v2748
      %v2750 = vpop.f32.mrb[0].mxu0
      %2751 = vmatprep.mubr.bf16.mxu0 0
      %2752 = vmatmul.mubr.bf16.gmra.mrb[0].mxu0 %v1375
      %v2753 = vpop.f32.mrb[0].mxu0
      %v2754 = vadd.f32 0.0, %v2753
      %v2755 = vpop.f32.mrb[0].mxu0
      %v2756 = vpop.f32.mrb[0].mxu0
      %v2757 = vadd.f32 0.0, %v2756
      %v2758 = vpop.f32.mrb[0].mxu0
      %2759 = vmatprep.mubr.bf16.mxu0 0
      %2760 = vmatmul.mubr.bf16.gmra.mrb[0].mxu0 %v1378
      %v2761 = vpop.f32.mrb[0].mxu0
      %v2762 = vadd.f32 0.0, %v2761
      %v2763 = vpop.f32.mrb[0].mxu0
      %v2764 = vpop.f32.mrb[0].mxu0
      %v2765 = vadd.f32 0.0, %v2764
      %v2766 = vpop.f32.mrb[0].mxu0
      %2767 = vmatprep.mubr.bf16.mxu0 0
      %2768 = vmatmul.mubr.bf16.gmra.mrb[0].mxu0 %v1381
      %v2769 = vpop.f32.mrb[0].mxu0
      %v2770 = vadd.f32 0.0, %v2769
      %v2771 = vpop.f32.mrb[0].mxu0
      %v2772 = vpop.f32.mrb[0].mxu0
      %v2773 = vadd.f32 0.0, %v2772
      %v2774 = vpop.f32.mrb[0].mxu0
      %2775 = vmatprep.mubr.bf16.mxu0 0
      %2776 = vmatmul.mubr.bf16.gmra.mrb[0].mxu0 %v1384
      %v2777 = vpop.f32.mrb[0].mxu0
      %v2778 = vadd.f32 0.0, %v2777
      %v2779 = vpop.f32.mrb[0].mxu0
      %v2780 = vpop.f32.mrb[0].mxu0
      %v2781 = vadd.f32 0.0, %v2780
      %v2782 = vpop.f32.mrb[0].mxu0
      %2783 = vmatprep.mubr.bf16.mxu0 0
      %2784 = vmatmul.mubr.bf16.gmra.mrb[0].mxu0 %v1387
      %v2785 = vpop.f32.mrb[0].mxu0
      %v2786 = vadd.f32 0.0, %v2785
      %v2787 = vpop.f32.mrb[0].mxu0
      %v2788 = vpop.f32.mrb[0].mxu0
      %v2789 = vadd.f32 0.0, %v2788
      %v2790 = vpop.f32.mrb[0].mxu0
      %2791 = vmatprep.mubr.bf16.mxu0 0
      %2792 = vmatmul.mubr.bf16.gmra.mrb[0].mxu0 %v1390
      %v2793 = vpop.f32.mrb[0].mxu0
      %v2794 = vadd.f32 0.0, %v2793
      %v2795 = vpop.f32.mrb[0].mxu0
      %v2796 = vpop.f32.mrb[0].mxu0
      %v2797 = vadd.f32 0.0, %v2796
      %v2798 = vpop.f32.mrb[0].mxu0
      %2799 = vmatprep.mubr.bf16.mxu0 0
      %2800 = vmatmul.mubr.bf16.gmra.mrb[0].mxu0 %v1393
      %v2801 = vpop.f32.mrb[0].mxu0
      %v2802 = vadd.f32 0.0, %v2801
      %v2803 = vpop.f32.mrb[0].mxu0
      %v2804 = vpop.f32.mrb[0].mxu0
      %v2805 = vadd.f32 0.0, %v2804
      %v2806 = vpop.f32.mrb[0].mxu0
      %2807 = vmatprep.mubr.bf16.mxu0 0
      %2808 = vmatmul.mubr.bf16.gmra.mrb[0].mxu0 %v1396
      %v2809 = vpop.f32.mrb[0].mxu0
      %v2810 = vadd.f32 0.0, %v2809
      %v2811 = vpop.f32.mrb[0].mxu0
      %v2812 = vpop.f32.mrb[0].mxu0
      %v2813 = vadd.f32 0.0, %v2812
      %v2814 = vpop.f32.mrb[0].mxu0
      %2815 = vmatprep.mubr.bf16.mxu0 0
      %2816 = vmatmul.mubr.bf16.gmra.mrb[0].mxu0 %v1399
      %v2817 = vpop.f32.mrb[0].mxu0
      %v2818 = vadd.f32 0.0, %v2817
      %v2819 = vpop.f32.mrb[0].mxu0
      %v2820 = vpop.f32.mrb[0].mxu0
      %v2821 = vadd.f32 0.0, %v2820
      %v2822 = vpop.f32.mrb[0].mxu0
      %2823 = vmatprep.mubr.bf16.mxu0 0
      %2824 = vmatmul.mubr.bf16.gmra.mrb[0].mxu0 %v1402
      %v2825 = vpop.f32.mrb[0].mxu0
      %v2826 = vadd.f32 0.0, %v2825
      %v2827 = vpop.f32.mrb[0].mxu0
      %v2828 = vpop.f32.mrb[0].mxu0
      %v2829 = vadd.f32 0.0, %v2828
      %v2830 = vpop.f32.mrb[0].mxu0
      %2831 = vmatprep.mubr.bf16.mxu0 0
      %2832 = vmatmul.mubr.bf16.gmra.mrb[0].mxu0 %v2042
      %v2833 = vpop.f32.mrb[0].mxu0
      %v2834 = vadd.f32 0.0, %v2833
      %v2835 = vpop.f32.mrb[0].mxu0
      %v2836 = vpop.f32.mrb[0].mxu0
      %v2837 = vadd.f32 0.0, %v2836
      %v2838 = vpop.f32.mrb[0].mxu0
      %2839 = vmatprep.mubr.bf16.mxu0 0
      %2840 = vmatmul.mubr.bf16.gmra.mrb[0].mxu0 %v2682
      %v2841 = vpop.f32.mrb[0].mxu0
      %v2842 = vadd.f32 0.0, %v2841
      %v2843 = vpop.f32.mrb[0].mxu0
      %v2844 = vpop.f32.mrb[0].mxu0
      %v2845 = vadd.f32 0.0, %v2844
      %v2846 = vpop.f32.mrb[0].mxu0
      %2847 = vdwg.mxu0
      %v2848 = vadd.f32 %v2638, %v2722
      %v2849 = vadd.f32 %v2639, %v2725
      %v2850 = vadd.f32 %v2640, %v2730
      %v2851 = vadd.f32 %v2641, %v2733
      %v2852 = vadd.f32 %v2642, %v2738
      %v2853 = vadd.f32 %v2643, %v2741
      %v2854 = vadd.f32 %v2644, %v2746
      %v2855 = vadd.f32 %v2645, %v2749
      %v2856 = vadd.f32 %v2646, %v2754
      %v2857 = vadd.f32 %v2647, %v2757
      %v2858 = vadd.f32 %v2648, %v2762
      %v2859 = vadd.f32 %v2649, %v2765
      %v2860 = vadd.f32 %v2650, %v2770
      %v2861 = vadd.f32 %v2651, %v2773
      %v2862 = vadd.f32 %v2652, %v2778
      %v2863 = vadd.f32 %v2653, %v2781
      %v2864 = vadd.f32 %v2654, %v2786
      %v2865 = vadd.f32 %v2655, %v2789
      %v2866 = vadd.f32 %v2656, %v2794
      %v2867 = vadd.f32 %v2657, %v2797
      %v2868 = vadd.f32 %v2658, %v2802
      %v2869 = vadd.f32 %v2659, %v2805
      %v2870 = vadd.f32 %v2660, %v2810
      %v2871 = vadd.f32 %v2661, %v2813
      %v2872 = vadd.f32 %v2662, %v2818
      %v2873 = vadd.f32 %v2663, %v2821
      %v2874 = vadd.f32 %v2664, %v2826
      %v2875 = vadd.f32 %v2665, %v2829
      %v2876 = vadd.f32 %v2666, %v2834
      %v2877 = vadd.f32 %v2667, %v2837
      %v2878 = vadd.f32 %v2668, %v2842
      %v2879 = vadd.f32 %v2669, %v2845
      %v2881 = vlaneseq
      %v2882 = vshrl.u32 %v2881, 7
      %v2883 = vsub.s32 0, %v2882
      %v2884 = vrot.slane %v235, %v2883
      %v2886 = vadd.f32 %v2848, %v2884
      %v2887 = vadd.f32 %v2849, %v2884
      %v2888 = vadd.f32 %v2850, %v2884
      %v2889 = vadd.f32 %v2851, %v2884
      %v2890 = vadd.f32 %v2852, %v2884
      %v2891 = vadd.f32 %v2853, %v2884
      %v2892 = vadd.f32 %v2854, %v2884
      %v2893 = vadd.f32 %v2855, %v2884
      %v2894 = vadd.f32 %v2856, %v2884
      %v2895 = vadd.f32 %v2857, %v2884
      %v2896 = vadd.f32 %v2858, %v2884
      %v2897 = vadd.f32 %v2859, %v2884
      %v2898 = vadd.f32 %v2860, %v2884
      %v2899 = vadd.f32 %v2861, %v2884
      %v2900 = vadd.f32 %v2862, %v2884
      %v2901 = vadd.f32 %v2863, %v2884
      %v2902 = vadd.f32 %v2864, %v2884
      %v2903 = vadd.f32 %v2865, %v2884
      %v2904 = vadd.f32 %v2866, %v2884
      %v2905 = vadd.f32 %v2867, %v2884
      %v2906 = vadd.f32 %v2868, %v2884
      %v2907 = vadd.f32 %v2869, %v2884
      %v2908 = vadd.f32 %v2870, %v2884
      %v2909 = vadd.f32 %v2871, %v2884
      %v2910 = vadd.f32 %v2872, %v2884
      %v2911 = vadd.f32 %v2873, %v2884
      %v2912 = vadd.f32 %v2874, %v2884
      %v2913 = vadd.f32 %v2875, %v2884
      %v2914 = vadd.f32 %v2876, %v2884
      %v2915 = vadd.f32 %v2877, %v2884
      %v2916 = vadd.f32 %v2878, %v2884
      %v2917 = vadd.f32 %v2879, %v2884
      %v2918 = vmul.f32 %v2886, 0.5
      %v2919 = vmul.f32 %v2887, 0.5
      %v2920 = vmul.f32 %v2888, 0.5
      %v2921 = vmul.f32 %v2889, 0.5
      %v2922 = vmul.f32 %v2890, 0.5
      %v2923 = vmul.f32 %v2891, 0.5
      %v2924 = vmul.f32 %v2892, 0.5
      %v2925 = vmul.f32 %v2893, 0.5
      %v2926 = vmul.f32 %v2894, 0.5
      %v2927 = vmul.f32 %v2895, 0.5
      %v2928 = vmul.f32 %v2896, 0.5
      %v2929 = vmul.f32 %v2897, 0.5
      %v2930 = vmul.f32 %v2898, 0.5
      %v2931 = vmul.f32 %v2899, 0.5
      %v2932 = vmul.f32 %v2900, 0.5
      %v2933 = vmul.f32 %v2901, 0.5
      %v2934 = vmul.f32 %v2902, 0.5
      %v2935 = vmul.f32 %v2903, 0.5
      %v2936 = vmul.f32 %v2904, 0.5
      %v2937 = vmul.f32 %v2905, 0.5
      %v2938 = vmul.f32 %v2906, 0.5
      %v2939 = vmul.f32 %v2907, 0.5
      %v2940 = vmul.f32 %v2908, 0.5
      %v2941 = vmul.f32 %v2909, 0.5
      %v2942 = vmul.f32 %v2910, 0.5
      %v2943 = vmul.f32 %v2911, 0.5
      %v2944 = vmul.f32 %v2912, 0.5
      %v2945 = vmul.f32 %v2913, 0.5
      %v2946 = vmul.f32 %v2914, 0.5
      %v2947 = vmul.f32 %v2915, 0.5
      %v2948 = vmul.f32 %v2916, 0.5
      %v2949 = vmul.f32 %v2917, 0.5
      %v2950 = vmul.f32 %v2886, 0.044715
      %v2951 = vmul.f32 %v2887, 0.044715
      %v2952 = vmul.f32 %v2888, 0.044715
      %v2953 = vmul.f32 %v2889, 0.044715
      %v2954 = vmul.f32 %v2890, 0.044715
      %v2955 = vmul.f32 %v2891, 0.044715
      %v2956 = vmul.f32 %v2892, 0.044715
      %v2957 = vmul.f32 %v2893, 0.044715
      %v2958 = vmul.f32 %v2894, 0.044715
      %v2959 = vmul.f32 %v2895, 0.044715
      %v2960 = vmul.f32 %v2896, 0.044715
      %v2961 = vmul.f32 %v2897, 0.044715
      %v2962 = vmul.f32 %v2898, 0.044715
      %v2963 = vmul.f32 %v2899, 0.044715
      %v2964 = vmul.f32 %v2900, 0.044715
      %v2965 = vmul.f32 %v2901, 0.044715
      %v2966 = vmul.f32 %v2902, 0.044715
      %v2967 = vmul.f32 %v2903, 0.044715
      %v2968 = vmul.f32 %v2904, 0.044715
      %v2969 = vmul.f32 %v2905, 0.044715
      %v2970 = vmul.f32 %v2906, 0.044715
      %v2971 = vmul.f32 %v2907, 0.044715
      %v2972 = vmul.f32 %v2908, 0.044715
      %v2973 = vmul.f32 %v2909, 0.044715
      %v2974 = vmul.f32 %v2910, 0.044715
      %v2975 = vmul.f32 %v2911, 0.044715
      %v2976 = vmul.f32 %v2912, 0.044715
      %v2977 = vmul.f32 %v2913, 0.044715
      %v2978 = vmul.f32 %v2914, 0.044715
      %v2979 = vmul.f32 %v2915, 0.044715
      %v2980 = vmul.f32 %v2916, 0.044715
      %v2981 = vmul.f32 %v2917, 0.044715
      %v2982 = vmul.f32 %v2950, %v2886
      %v2983 = vmul.f32 %v2951, %v2887
      %v2984 = vmul.f32 %v2952, %v2888
      %v2985 = vmul.f32 %v2953, %v2889
      %v2986 = vmul.f32 %v2954, %v2890
      %v2987 = vmul.f32 %v2955, %v2891
      %v2988 = vmul.f32 %v2956, %v2892
      %v2989 = vmul.f32 %v2957, %v2893
      %v2990 = vmul.f32 %v2958, %v2894
      %v2991 = vmul.f32 %v2959, %v2895
      %v2992 = vmul.f32 %v2960, %v2896
      %v2993 = vmul.f32 %v2961, %v2897
      %v2994 = vmul.f32 %v2962, %v2898
      %v2995 = vmul.f32 %v2963, %v2899
      %v2996 = vmul.f32 %v2964, %v2900
      %v2997 = vmul.f32 %v2965, %v2901
      %v2998 = vmul.f32 %v2966, %v2902
      %v2999 = vmul.f32 %v2967, %v2903
      %v3000 = vmul.f32 %v2968, %v2904
      %v3001 = vmul.f32 %v2969, %v2905
      %v3002 = vmul.f32 %v2970, %v2906
      %v3003 = vmul.f32 %v2971, %v2907
      %v3004 = vmul.f32 %v2972, %v2908
      %v3005 = vmul.f32 %v2973, %v2909
      %v3006 = vmul.f32 %v2974, %v2910
      %v3007 = vmul.f32 %v2975, %v2911
      %v3008 = vmul.f32 %v2976, %v2912
      %v3009 = vmul.f32 %v2977, %v2913
      %v3010 = vmul.f32 %v2978, %v2914
      %v3011 = vmul.f32 %v2979, %v2915
      %v3012 = vmul.f32 %v2980, %v2916
      %v3013 = vmul.f32 %v2981, %v2917
      %v3014 = vmul.f32 %v2982, %v2886
      %v3015 = vmul.f32 %v2983, %v2887
      %v3016 = vmul.f32 %v2984, %v2888
      %v3017 = vmul.f32 %v2985, %v2889
      %v3018 = vmul.f32 %v2986, %v2890
      %v3019 = vmul.f32 %v2987, %v2891
      %v3020 = vmul.f32 %v2988, %v2892
      %v3021 = vmul.f32 %v2989, %v2893
      %v3022 = vmul.f32 %v2990, %v2894
      %v3023 = vmul.f32 %v2991, %v2895
      %v3024 = vmul.f32 %v2992, %v2896
      %v3025 = vmul.f32 %v2993, %v2897
      %v3026 = vmul.f32 %v2994, %v2898
      %v3027 = vmul.f32 %v2995, %v2899
      %v3028 = vmul.f32 %v2996, %v2900
      %v3029 = vmul.f32 %v2997, %v2901
      %v3030 = vmul.f32 %v2998, %v2902
      %v3031 = vmul.f32 %v2999, %v2903
      %v3032 = vmul.f32 %v3000, %v2904
      %v3033 = vmul.f32 %v3001, %v2905
      %v3034 = vmul.f32 %v3002, %v2906
      %v3035 = vmul.f32 %v3003, %v2907
      %v3036 = vmul.f32 %v3004, %v2908
      %v3037 = vmul.f32 %v3005, %v2909
      %v3038 = vmul.f32 %v3006, %v2910
      %v3039 = vmul.f32 %v3007, %v2911
      %v3040 = vmul.f32 %v3008, %v2912
      %v3041 = vmul.f32 %v3009, %v2913
      %v3042 = vmul.f32 %v3010, %v2914
      %v3043 = vmul.f32 %v3011, %v2915
      %v3044 = vmul.f32 %v3012, %v2916
      %v3045 = vmul.f32 %v3013, %v2917
      %v3046 = vadd.f32 %v2886, %v3014
      %v3047 = vadd.f32 %v2887, %v3015
      %v3048 = vadd.f32 %v2888, %v3016
      %v3049 = vadd.f32 %v2889, %v3017
      %v3050 = vadd.f32 %v2890, %v3018
      %v3051 = vadd.f32 %v2891, %v3019
      %v3052 = vadd.f32 %v2892, %v3020
      %v3053 = vadd.f32 %v2893, %v3021
      %v3054 = vadd.f32 %v2894, %v3022
      %v3055 = vadd.f32 %v2895, %v3023
      %v3056 = vadd.f32 %v2896, %v3024
      %v3057 = vadd.f32 %v2897, %v3025
      %v3058 = vadd.f32 %v2898, %v3026
      %v3059 = vadd.f32 %v2899, %v3027
      %v3060 = vadd.f32 %v2900, %v3028
      %v3061 = vadd.f32 %v2901, %v3029
      %v3062 = vadd.f32 %v2902, %v3030
      %v3063 = vadd.f32 %v2903, %v3031
      %v3064 = vadd.f32 %v2904, %v3032
      %v3065 = vadd.f32 %v2905, %v3033
      %v3066 = vadd.f32 %v2906, %v3034
      %v3067 = vadd.f32 %v2907, %v3035
      %v3068 = vadd.f32 %v2908, %v3036
      %v3069 = vadd.f32 %v2909, %v3037
      %v3070 = vadd.f32 %v2910, %v3038
      %v3071 = vadd.f32 %v2911, %v3039
      %v3072 = vadd.f32 %v2912, %v3040
      %v3073 = vadd.f32 %v2913, %v3041
      %v3074 = vadd.f32 %v2914, %v3042
      %v3075 = vadd.f32 %v2915, %v3043
      %v3076 = vadd.f32 %v2916, %v3044
      %v3077 = vadd.f32 %v2917, %v3045
      %v3078 = vmul.f32 %v3046, 0.7978846
      %v3079 = vmul.f32 %v3047, 0.7978846
      %v3080 = vmul.f32 %v3048, 0.7978846
      %v3081 = vmul.f32 %v3049, 0.7978846
      %v3082 = vmul.f32 %v3050, 0.7978846
      %v3083 = vmul.f32 %v3051, 0.7978846
      %v3084 = vmul.f32 %v3052, 0.7978846
      %v3085 = vmul.f32 %v3053, 0.7978846
      %v3086 = vmul.f32 %v3054, 0.7978846
      %v3087 = vmul.f32 %v3055, 0.7978846
      %v3088 = vmul.f32 %v3056, 0.7978846
      %v3089 = vmul.f32 %v3057, 0.7978846
      %v3090 = vmul.f32 %v3058, 0.7978846
      %v3091 = vmul.f32 %v3059, 0.7978846
      %v3092 = vmul.f32 %v3060, 0.7978846
      %v3093 = vmul.f32 %v3061, 0.7978846
      %v3094 = vmul.f32 %v3062, 0.7978846
      %v3095 = vmul.f32 %v3063, 0.7978846
      %v3096 = vmul.f32 %v3064, 0.7978846
      %v3097 = vmul.f32 %v3065, 0.7978846
      %v3098 = vmul.f32 %v3066, 0.7978846
      %v3099 = vmul.f32 %v3067, 0.7978846
      %v3100 = vmul.f32 %v3068, 0.7978846
      %v3101 = vmul.f32 %v3069, 0.7978846
      %v3102 = vmul.f32 %v3070, 0.7978846
      %v3103 = vmul.f32 %v3071, 0.7978846
      %v3104 = vmul.f32 %v3072, 0.7978846
      %v3105 = vmul.f32 %v3073, 0.7978846
      %v3106 = vmul.f32 %v3074, 0.7978846
      %v3107 = vmul.f32 %v3075, 0.7978846
      %v3108 = vmul.f32 %v3076, 0.7978846
      %v3109 = vmul.f32 %v3077, 0.7978846
      %v3110 = vtanh.pop %v3078
      %v3111 = vtanh.pop %v3079
      %v3112 = vtanh.pop %v3080
      %v3113 = vtanh.pop %v3081
      %v3114 = vtanh.pop %v3082
      %v3115 = vtanh.pop %v3083
      %v3116 = vtanh.pop %v3084
      %v3117 = vtanh.pop %v3085
      %v3118 = vtanh.pop %v3086
      %v3119 = vtanh.pop %v3087
      %v3120 = vtanh.pop %v3088
      %v3121 = vtanh.pop %v3089
      %v3122 = vtanh.pop %v3090
      %v3123 = vtanh.pop %v3091
      %v3124 = vtanh.pop %v3092
      %v3125 = vtanh.pop %v3093
      %v3126 = vtanh.pop %v3094
      %v3127 = vtanh.pop %v3095
      %v3128 = vtanh.pop %v3096
      %v3129 = vtanh.pop %v3097
      %v3130 = vtanh.pop %v3098
      %v3131 = vtanh.pop %v3099
      %v3132 = vtanh.pop %v3100
      %v3133 = vtanh.pop %v3101
      %v3134 = vtanh.pop %v3102
      %v3135 = vtanh.pop %v3103
      %v3136 = vtanh.pop %v3104
      %v3137 = vtanh.pop %v3105
      %v3138 = vtanh.pop %v3106
      %v3139 = vtanh.pop %v3107
      %v3140 = vtanh.pop %v3108
      %v3141 = vtanh.pop %v3109
      %v3142 = vadd.f32 %v3110, 1.0
      %v3143 = vadd.f32 %v3111, 1.0
      %v3144 = vadd.f32 %v3112, 1.0
      %v3145 = vadd.f32 %v3113, 1.0
      %v3146 = vadd.f32 %v3114, 1.0
      %v3147 = vadd.f32 %v3115, 1.0
      %v3148 = vadd.f32 %v3116, 1.0
      %v3149 = vadd.f32 %v3117, 1.0
      %v3150 = vadd.f32 %v3118, 1.0
      %v3151 = vadd.f32 %v3119, 1.0
      %v3152 = vadd.f32 %v3120, 1.0
      %v3153 = vadd.f32 %v3121, 1.0
      %v3154 = vadd.f32 %v3122, 1.0
      %v3155 = vadd.f32 %v3123, 1.0
      %v3156 = vadd.f32 %v3124, 1.0
      %v3157 = vadd.f32 %v3125, 1.0
      %v3158 = vadd.f32 %v3126, 1.0
      %v3159 = vadd.f32 %v3127, 1.0
      %v3160 = vadd.f32 %v3128, 1.0
      %v3161 = vadd.f32 %v3129, 1.0
      %v3162 = vadd.f32 %v3130, 1.0
      %v3163 = vadd.f32 %v3131, 1.0
      %v3164 = vadd.f32 %v3132, 1.0
      %v3165 = vadd.f32 %v3133, 1.0
      %v3166 = vadd.f32 %v3134, 1.0
      %v3167 = vadd.f32 %v3135, 1.0
      %v3168 = vadd.f32 %v3136, 1.0
      %v3169 = vadd.f32 %v3137, 1.0
      %v3170 = vadd.f32 %v3138, 1.0
      %v3171 = vadd.f32 %v3139, 1.0
      %v3172 = vadd.f32 %v3140, 1.0
      %v3173 = vadd.f32 %v3141, 1.0
      %v3174 = vmul.f32 %v2918, %v3142
      %v3175 = vmul.f32 %v2919, %v3143
      %v3176 = vmul.f32 %v2920, %v3144
      %v3177 = vmul.f32 %v2921, %v3145
      %v3178 = vmul.f32 %v2922, %v3146
      %v3179 = vmul.f32 %v2923, %v3147
      %v3180 = vmul.f32 %v2924, %v3148
      %v3181 = vmul.f32 %v2925, %v3149
      %v3182 = vmul.f32 %v2926, %v3150
      %v3183 = vmul.f32 %v2927, %v3151
      %v3184 = vmul.f32 %v2928, %v3152
      %v3185 = vmul.f32 %v2929, %v3153
      %v3186 = vmul.f32 %v2930, %v3154
      %v3187 = vmul.f32 %v2931, %v3155
      %v3188 = vmul.f32 %v2932, %v3156
      %v3189 = vmul.f32 %v2933, %v3157
      %v3190 = vmul.f32 %v2934, %v3158
      %v3191 = vmul.f32 %v2935, %v3159
      %v3192 = vmul.f32 %v2936, %v3160
      %v3193 = vmul.f32 %v2937, %v3161
      %v3194 = vmul.f32 %v2938, %v3162
      %v3195 = vmul.f32 %v2939, %v3163
      %v3196 = vmul.f32 %v2940, %v3164
      %v3197 = vmul.f32 %v2941, %v3165
      %v3198 = vmul.f32 %v2942, %v3166
      %v3199 = vmul.f32 %v2943, %v3167
      %v3200 = vmul.f32 %v2944, %v3168
      %v3201 = vmul.f32 %v2945, %v3169
      %v3202 = vmul.f32 %v2946, %v3170
      %v3203 = vmul.f32 %v2947, %v3171
      %v3204 = vmul.f32 %v2948, %v3172
      %v3205 = vmul.f32 %v2949, %v3173
      %v3206 = vpack.c.bf16 %v3175, %v3174
      %v3207 = vpack.c.bf16 %v3177, %v3176
      %v3208 = vpack.c.bf16 %v3179, %v3178
      %v3209 = vpack.c.bf16 %v3181, %v3180
      %v3210 = vpack.c.bf16 %v3183, %v3182
      %v3211 = vpack.c.bf16 %v3185, %v3184
      %v3212 = vpack.c.bf16 %v3187, %v3186
      %v3213 = vpack.c.bf16 %v3189, %v3188
      %v3214 = vpack.c.bf16 %v3191, %v3190
      %v3215 = vpack.c.bf16 %v3193, %v3192
      %v3216 = vpack.c.bf16 %v3195, %v3194
      %v3217 = vpack.c.bf16 %v3197, %v3196
      %v3218 = vpack.c.bf16 %v3199, %v3198
      %v3219 = vpack.c.bf16 %v3201, %v3200
      %v3220 = vpack.c.bf16 %v3203, %v3202
      %v3221 = vpack.c.bf16 %v3205, %v3204
      %v3238 = vunpack.c.l.b16 %v3206
      %v3239 = vunpack.c.h.b16 %v3206
      %v3240 = vunpack.c.l.b16 %v3207
      %v3241 = vunpack.c.h.b16 %v3207
      %v3242 = vunpack.c.l.b16 %v3208
      %v3243 = vunpack.c.h.b16 %v3208
      %v3244 = vunpack.c.l.b16 %v3209
      %v3245 = vunpack.c.h.b16 %v3209
      %v3246 = vunpack.c.l.b16 %v3210
      %v3247 = vunpack.c.h.b16 %v3210
      %v3248 = vunpack.c.l.b16 %v3211
      %v3249 = vunpack.c.h.b16 %v3211
      %v3250 = vunpack.c.l.b16 %v3212
      %v3251 = vunpack.c.h.b16 %v3212
      %v3252 = vunpack.c.l.b16 %v3213
      %v3253 = vunpack.c.h.b16 %v3213
      %v3254 = vunpack.c.l.b16 %v3214
      %v3255 = vunpack.c.h.b16 %v3214
      %v3256 = vunpack.c.l.b16 %v3215
      %v3257 = vunpack.c.h.b16 %v3215
      %v3258 = vunpack.c.l.b16 %v3216
      %v3259 = vunpack.c.h.b16 %v3216
      %v3260 = vunpack.c.l.b16 %v3217
      %v3261 = vunpack.c.h.b16 %v3217
      %v3262 = vunpack.c.l.b16 %v3218
      %v3263 = vunpack.c.h.b16 %v3218
      %v3264 = vunpack.c.l.b16 %v3219
      %v3265 = vunpack.c.h.b16 %v3219
      %v3266 = vunpack.c.l.b16 %v3220
      %v3267 = vunpack.c.h.b16 %v3220
      %v3268 = vunpack.c.l.b16 %v3221
      %v3269 = vunpack.c.h.b16 %v3221
      %v3270 = vpack.c.b16 %v3238, %v3238
      %v3271 = vpack.c.b16 %v3239, %v3239
      %v3272 = vpack.c.b16 %v3240, %v3240
      %v3273 = vpack.c.b16 %v3241, %v3241
      %v3274 = vpack.c.b16 %v3242, %v3242
      %v3275 = vpack.c.b16 %v3243, %v3243
      %v3276 = vpack.c.b16 %v3244, %v3244
      %v3277 = vpack.c.b16 %v3245, %v3245
      %v3278 = vpack.c.b16 %v3246, %v3246
      %v3279 = vpack.c.b16 %v3247, %v3247
      %v3280 = vpack.c.b16 %v3248, %v3248
      %v3281 = vpack.c.b16 %v3249, %v3249
      %v3282 = vpack.c.b16 %v3250, %v3250
      %v3283 = vpack.c.b16 %v3251, %v3251
      %v3284 = vpack.c.b16 %v3252, %v3252
      %v3285 = vpack.c.b16 %v3253, %v3253
      %v3286 = vpack.c.b16 %v3254, %v3254
      %v3287 = vpack.c.b16 %v3255, %v3255
      %v3288 = vpack.c.b16 %v3256, %v3256
      %v3289 = vpack.c.b16 %v3257, %v3257
      %v3290 = vpack.c.b16 %v3258, %v3258
      %v3291 = vpack.c.b16 %v3259, %v3259
      %v3292 = vpack.c.b16 %v3260, %v3260
      %v3293 = vpack.c.b16 %v3261, %v3261
      %v3294 = vpack.c.b16 %v3262, %v3262
      %v3295 = vpack.c.b16 %v3263, %v3263
      %v3296 = vpack.c.b16 %v3264, %v3264
      %v3297 = vpack.c.b16 %v3265, %v3265
      %v3298 = vpack.c.b16 %v3266, %v3266
      %v3299 = vpack.c.b16 %v3267, %v3267
      %v3300 = vpack.c.b16 %v3268, %v3268
      %v3301 = vpack.c.b16 %v3269, %v3269
      %vm3334 = vcmask 60416
      %3335 = vst.msk [vmem:[%s170] sm:$0xf] %vm3334, %v3270
      %3336 = vst.msk [vmem:[%s170 + $0x4] sm:$0xf] %vm3334, %v3271
      %3337 = vst.msk [vmem:[%s170 + $0x8] sm:$0xf] %vm3334, %v3272
      %3338 = vst.msk [vmem:[%s170 + $0xc] sm:$0xf] %vm3334, %v3273
      %3339 = vst.msk [vmem:[%s170 + $0x10] sm:$0xf] %vm3334, %v3274
      %3340 = vst.msk [vmem:[%s170 + $0x14] sm:$0xf] %vm3334, %v3275
      %3341 = vst.msk [vmem:[%s170 + $0x18] sm:$0xf] %vm3334, %v3276
      %3342 = vst.msk [vmem:[%s170 + $0x1c] sm:$0xf] %vm3334, %v3277
      %3343 = vst.msk [vmem:[%s170 + $0x20] sm:$0xf] %vm3334, %v3278
      %3344 = vst.msk [vmem:[%s170 + $0x24] sm:$0xf] %vm3334, %v3279
      %3345 = vst.msk [vmem:[%s170 + $0x28] sm:$0xf] %vm3334, %v3280
      %3346 = vst.msk [vmem:[%s170 + $0x2c] sm:$0xf] %vm3334, %v3281
      %3347 = vst.msk [vmem:[%s170 + $0x30] sm:$0xf] %vm3334, %v3282
      %3348 = vst.msk [vmem:[%s170 + $0x34] sm:$0xf] %vm3334, %v3283
      %3349 = vst.msk [vmem:[%s170 + $0x38] sm:$0xf] %vm3334, %v3284
      %3350 = vst.msk [vmem:[%s170 + $0x3c] sm:$0xf] %vm3334, %v3285
      %3351 = vst.msk [vmem:[%s170 + $0x40] sm:$0xf] %vm3334, %v3286
      %3352 = vst.msk [vmem:[%s170 + $0x44] sm:$0xf] %vm3334, %v3287
      %3353 = vst.msk [vmem:[%s170 + $0x48] sm:$0xf] %vm3334, %v3288
      %3354 = vst.msk [vmem:[%s170 + $0x4c] sm:$0xf] %vm3334, %v3289
      %3355 = vst.msk [vmem:[%s170 + $0x50] sm:$0xf] %vm3334, %v3290
      %3356 = vst.msk [vmem:[%s170 + $0x54] sm:$0xf] %vm3334, %v3291
      %3357 = vst.msk [vmem:[%s170 + $0x58] sm:$0xf] %vm3334, %v3292
      %3358 = vst.msk [vmem:[%s170 + $0x5c] sm:$0xf] %vm3334, %v3293
      %3359 = vst.msk [vmem:[%s170 + $0x60] sm:$0xf] %vm3334, %v3294
      %3360 = vst.msk [vmem:[%s170 + $0x64] sm:$0xf] %vm3334, %v3295
      %3361 = vst.msk [vmem:[%s170 + $0x68] sm:$0xf] %vm3334, %v3296
      %3362 = vst.msk [vmem:[%s170 + $0x6c] sm:$0xf] %vm3334, %v3297
      %3363 = vst.msk [vmem:[%s170 + $0x70] sm:$0xf] %vm3334, %v3298
      %3364 = vst.msk [vmem:[%s170 + $0x74] sm:$0xf] %vm3334, %v3299
      %3365 = vst.msk [vmem:[%s170 + $0x78] sm:$0xf] %vm3334, %v3300
      %3366 = vst.msk [vmem:[%s170 + $0x7c] sm:$0xf] %vm3334, %v3301
      %p3367 = scmp.lt.s32.totalorder %s14, 1
      %s3368 = scalar_select %p3367, %s14, 1
      %s3369 = smul.addr %s3368, 32
      %s3370 = smul.addr %s3369, 4
      %s3371 = scalar_lea.vmem %s3, %s3370
      // Predicated region
      $region33: #{tpu_custom_call.1} parent=31 // pred_check
        %p3372 = pneg %p100
      $region34: #{tpu_custom_call.1} parent=31 // pred_check_branch
        %3374 = sbr.rel (%p3372) target = $region36
      $region35: #{tpu_custom_call.1} parent=31 // pred_region
        _
      $region36: #{tpu_custom_call.1} parent=31 // pred_fallthru
        _
    $region32: #{tpu_custom_call.1} parent=5 // pred_fallthru
      _
    %p3375 = scmp.le.s32.totalorder 2, %s9
    // Predicated region
    $region37: #{tpu_custom_call.1} parent=5 // pred_check
      %p3376 = pneg %p3375
    $region38: #{tpu_custom_call.1} parent=5 // pred_check_branch
      %3378 = sbr.rel (%p3376) target = $region40
    $region39: #{tpu_custom_call.1} parent=5 // pred_region
      %s3379 = ssub.s32 %s9, 2
      // Predicated region
      $region41: #{tpu_custom_call.1} parent=39 // pred_check
        %p3380 = pneg %p106
      $region42: #{tpu_custom_call.1} parent=39 // pred_check_branch
        %3382 = sbr.rel (%p3380) target = $region44
      $region43: #{tpu_custom_call.1} parent=39 // pred_region
        %p3383 = scmp.lt.s32.totalorder %s15, 1
        %s3384 = scalar_select %p3383, %s15, 1
        %s3385 = smul.addr %s3384, 32
        %s3386 = smul.addr %s3385, 4
        %s3387 = scalar_lea.vmem %s3, %s3386
      $region44: #{tpu_custom_call.1} parent=39 // pred_fallthru
        _
    $region40: #{tpu_custom_call.1} parent=5 // pred_fallthru
      _
  $region6: #{tpu_custom_call.1} parent=0 // loop_footer
    %s13 = sadd.s32 1, %s9
  $region7: #{tpu_custom_call.1} parent=0 // loop_footer_branch
    %8 = sbr.rel target = $region3
  $region8: #{tpu_custom_call.1} parent=0 // loop_exit
    _

</llo_original>
